<compile_context>
chip_gen: v6e
topology: v6e:2x2x1
jax: 0.10.0
libtpu: 0.0.40
codegen_flags: <defaults>
</compile_context>

<pallas_src>
import jax
import jax.numpy as jnp
from jax import lax
from jax.experimental import pallas as pl
from jax.experimental.pallas import tpu as pltpu

# ---- small, forward-consistent configuration -------------------------------
BERT_DIM = 32      # stands in for 768 ('base')
UTTER_DIM = 32
NUM_LAYERS = 2
NHEAD = 4
FF_DIM = 64
N_UTT = 8          # utterances per conversation
SEQ = 16           # tokens per utterance
BATCH = 2          # number of conversations
EPS = 1e-5
HEAD_DIM = UTTER_DIM // NHEAD


def _layer_norm(x, w, b):
    mu = jnp.mean(x, axis=-1, keepdims=True)
    var = jnp.mean((x - mu) ** 2, axis=-1, keepdims=True)
    return (x - mu) * lax.rsqrt(var + EPS) * w + b


def utter_encoder_kernel(hidden_ref, wmap_ref, misc_ref,
                         wqkv_ref, wo_ref, w1_ref, w2_ref, b1_ref, lvec_ref,
                         out_ref):
    """One grid step = one conversation.

    hidden_ref : (1, N_UTT, SEQ, BERT_DIM)   synthetic encoder output
    wmap_ref   : (BERT_DIM, D)               utter_mapping weight, pre-transposed
    misc_ref   : (3, D)                      rows: utter_mapping bias | attn weight | attn bias (bcast)
    wqkv_ref   : (L, D, 3D)                  [Wq|Wk|Wv], pre-transposed
    wo_ref     : (L, D, D)                   output projection, pre-transposed
    w1_ref     : (L, D, FF)  w2_ref: (L, FF, D)   FFN weights, pre-transposed
    b1_ref     : (L, 1, FF)
    lvec_ref   : (L, 5, D)                   rows: b2 | ln1w | ln1b | ln2w | ln2b
    out_ref    : (1, N_UTT + 1, D)           rows 0..N-1 = processed, row N = doc
    """
    hidden = hidden_ref[0]                              # (N_UTT, SEQ, BERT_DIM)
    pooled = jnp.max(hidden, axis=1)                    # torch.max(dim=1)[0]
    x = jnp.dot(pooled, wmap_ref[...],
                preferred_element_type=jnp.float32) + misc_ref[0:1, :]   # (N, D)

    N = N_UTT
    D = UTTER_DIM
    hd = HEAD_DIM
    scaling = float(hd) ** -0.5

    # src_mask = ones(N,N).tril(0).eq(0)  -> True strictly above the diagonal
    row = lax.broadcasted_iota(jnp.int32, (N, N), 0)
    col = lax.broadcasted_iota(jnp.int32, (N, N), 1)
    causal_mask = col > row

    for l in range(NUM_LAYERS):
        wqkv = wqkv_ref[l]                              # (D, 3D)
        wo = wo_ref[l]                                  # (D, D)
        w1 = w1_ref[l]                                  # (D, FF)
        w2 = w2_ref[l]                                  # (FF, D)
        b1 = b1_ref[l]                                  # (1, FF)
        lvec = lvec_ref[l]                              # (5, D)

        # fused Q|K|V projection
        qkv = jnp.dot(x, wqkv, preferred_element_type=jnp.float32)   # (N, 3D)

        # multi-head attention: each head's context is pushed directly through
        # its slice of the output projection (no concat, no transposes).
        attn_out = jnp.zeros((N, D), jnp.float32)
        for h in range(NHEAD):
            qh = qkv[:, h * hd:(h + 1) * hd]
            kh = qkv[:, D + h * hd:D + (h + 1) * hd]
            vh = qkv[:, 2 * D + h * hd:2 * D + (h + 1) * hd]
            # q @ k^T via dimension numbers (contract last dims) -> no transpose
            s = lax.dot_general(qh, kh, (((1,), (1,)), ((), ())),
                                preferred_element_type=jnp.float32) * scaling
            s = jnp.where(causal_mask, jnp.float32(-1e30), s)
            s = s - jnp.max(s, axis=-1, keepdims=True)
            p = jnp.exp(s)
            p = p * pl.reciprocal(jnp.sum(p, axis=-1, keepdims=True), approx=True)
            oh = jnp.dot(p, vh, preferred_element_type=jnp.float32)  # (N, hd)
            attn_out = attn_out + jnp.dot(oh, wo[h * hd:(h + 1) * hd, :],
                                          preferred_element_type=jnp.float32)

        # residual + norm1 (dropout = identity in eval)
        ss = _layer_norm(x + attn_out, lvec[1:2, :], lvec[2:3, :])
        # FFN
        ff = jnp.maximum(
            jnp.dot(ss, w1, preferred_element_type=jnp.float32) + b1, 0.0)
        ff = jnp.dot(ff, w2, preferred_element_type=jnp.float32) + lvec[0:1, :]
        # residual + norm2
        x = _layer_norm(ss + ff, lvec[3:4, :], lvec[4:5, :])

    # attention pooling over utterances (softmax over dim=0)
    attn_w = misc_ref[1:2, :]                           # (1, D)
    attn_b = misc_ref[2:3, 0:1]                         # (1, 1)
    logits = jnp.sum(x * attn_w, axis=-1, keepdims=True) + attn_b     # (N, 1)
    logits = logits - jnp.max(logits, axis=0, keepdims=True)
    w = jnp.exp(logits)
    w = w * pl.reciprocal(jnp.sum(w, axis=0, keepdims=True), approx=True)
    doc = jnp.sum(w * x, axis=0, keepdims=True)         # (1, D) == w^T @ x

    out_ref[0, 0:N, :] = x
    out_ref[0, N:N + 1, :] = doc


def utter_encoder(hidden_all, packed):
    """hidden_all: (BATCH, N_UTT, SEQ, BERT_DIM) -> (processed (B,N,D), doc (B,1,D))."""
    wmap_t, misc, wqkv_t, wo_t, w1_t, w2_t, b1_p, layer_vecs = packed
    B = hidden_all.shape[0]

    def const_spec(a):
        # full-array block, constant index_map -> stays VMEM-resident over grid
        return pl.BlockSpec(a.shape, lambda b, _nd=a.ndim: (0,) * _nd)

    out = pl.pallas_call(
        utter_encoder_kernel,
        grid=(B,),
        in_specs=[
            pl.BlockSpec((1, N_UTT, SEQ, BERT_DIM), lambda b: (b, 0, 0, 0)),
            const_spec(wmap_t),
            const_spec(misc),
            const_spec(wqkv_t),
            const_spec(wo_t),
            const_spec(w1_t),
            const_spec(w2_t),
            const_spec(b1_p),
            const_spec(layer_vecs),
        ],
        out_specs=pl.BlockSpec((1, N_UTT + 1, UTTER_DIM), lambda b: (b, 0, 0)),
        out_shape=jax.ShapeDtypeStruct((B, N_UTT + 1, UTTER_DIM), jnp.float32),
        compiler_params=pltpu.CompilerParams(
            dimension_semantics=("parallel",)),
    )(hidden_all, wmap_t, misc, wqkv_t, wo_t, w1_t, w2_t, b1_p, layer_vecs)

    return out[:, :N_UTT, :], out[:, N_UTT:, :]


# ------------------------- parameter packing (host) --------------------------
def pack_params(params):
    """Pre-transpose + pack torch-convention params into 8 kernel inputs."""
    (wmap, bmap, qw, kw, vw, ow, w1, b1, w2, b2,
     ln1w, ln1b, ln2w, ln2b, attnw, attnb) = params
    wmap_t = wmap.T                                                   # (BERT_DIM, D)
    misc = jnp.concatenate(
        [bmap, attnw, jnp.broadcast_to(attnb, (1, UTTER_DIM))], axis=0)   # (3, D)
    wqkv_t = jnp.concatenate([jnp.transpose(qw, (0, 2, 1)),
                              jnp.transpose(kw, (0, 2, 1)),
                              jnp.transpose(vw, (0, 2, 1))], axis=2)  # (L, D, 3D)
    wo_t = jnp.transpose(ow, (0, 2, 1))                               # (L, D, D)
    w1_t = jnp.transpose(w1, (0, 2, 1))                               # (L, D, FF)
    w2_t = jnp.transpose(w2, (0, 2, 1))                               # (L, FF, D)
    b1_p = b1[:, None, :]                                             # (L, 1, FF)
    layer_vecs = jnp.stack([b2, ln1w, ln1b, ln2w, ln2b], axis=1)      # (L, 5, D)
    return (wmap_t, misc, wqkv_t, wo_t, w1_t, w2_t, b1_p, layer_vecs)


# ------------------------- pure-JAX reference --------------------------------
def reference(hidden, params):
    (wmap, bmap, qw, kw, vw, ow, w1, b1, w2, b2,
     ln1w, ln1b, ln2w, ln2b, attnw, attnb) = params
    pooled = jnp.max(hidden, axis=1)
    x = pooled @ wmap.T + bmap
    N = x.shape[0]
    hd = UTTER_DIM // NHEAD
    mask = jnp.triu(jnp.ones((N, N), bool), k=1)
    for l in range(NUM_LAYERS):
        q = (x @ qw[l].T).reshape(N, NHEAD, hd).transpose(1, 0, 2)
        k = (x @ kw[l].T).reshape(N, NHEAD, hd).transpose(1, 0, 2)
        v = (x @ vw[l].T).reshape(N, NHEAD, hd).transpose(1, 0, 2)
        s = jnp.einsum('hqd,hkd->hqk', q, k) * (hd ** -0.5)
        s = jnp.where(mask[None], -1e30, s)
        p = jax.nn.softmax(s, axis=-1)
        a = jnp.einsum('hqk,hkd->hqd', p, v).transpose(1, 0, 2).reshape(N, UTTER_DIM)
        a = a @ ow[l].T
        ss = x + a
        ss = (ss - ss.mean(-1, keepdims=True)) / jnp.sqrt(ss.var(-1, keepdims=True) + EPS) * ln1w[l] + ln1b[l]
        ff = jax.nn.relu(ss @ w1[l].T + b1[l]) @ w2[l].T + b2[l]
        x = ss + ff
        x = (x - x.mean(-1, keepdims=True)) / jnp.sqrt(x.var(-1, keepdims=True) + EPS) * ln2w[l] + ln2b[l]
    aw = jax.nn.softmax(x @ attnw.T + attnb, axis=0)
    return x, aw.T @ x


# ------------------------- parameter construction ----------------------------
def xavier(key, shape):
    fan_out, fan_in = shape[-2], shape[-1]
    bound = (6.0 / (fan_in + fan_out)) ** 0.5
    return jax.random.uniform(key, shape, jnp.float32, -bound, bound)


def make_params(key):
    keys = jax.random.split(key, 16)
    wmap = xavier(keys[0], (UTTER_DIM, BERT_DIM))
    bmap = jax.random.normal(keys[1], (1, UTTER_DIM), jnp.float32) * 0.02
    qw = xavier(keys[2], (NUM_LAYERS, UTTER_DIM, UTTER_DIM))
    kw = xavier(keys[3], (NUM_LAYERS, UTTER_DIM, UTTER_DIM))
    vw = xavier(keys[4], (NUM_LAYERS, UTTER_DIM, UTTER_DIM))
    ow = xavier(keys[5], (NUM_LAYERS, UTTER_DIM, UTTER_DIM))
    w1 = xavier(keys[6], (NUM_LAYERS, FF_DIM, UTTER_DIM))
    b1 = jax.random.normal(keys[7], (NUM_LAYERS, FF_DIM), jnp.float32) * 0.02
    w2 = xavier(keys[8], (NUM_LAYERS, UTTER_DIM, FF_DIM))
    b2 = jax.random.normal(keys[9], (NUM_LAYERS, UTTER_DIM), jnp.float32) * 0.02
    ln1w = jnp.ones((NUM_LAYERS, UTTER_DIM), jnp.float32)
    ln1b = jnp.zeros((NUM_LAYERS, UTTER_DIM), jnp.float32)
    ln2w = jnp.ones((NUM_LAYERS, UTTER_DIM), jnp.float32)
    ln2b = jnp.zeros((NUM_LAYERS, UTTER_DIM), jnp.float32)
    attnw = xavier(keys[10], (1, UTTER_DIM))
    attnb = jax.random.normal(keys[11], (1, 1), jnp.float32) * 0.02
    return (wmap, bmap, qw, kw, vw, ow, w1, b1, w2, b2,
            ln1w, ln1b, ln2w, ln2b, attnw, attnb)


if __name__ == "__main__":
    key = jax.random.PRNGKey(0)
    pkey, hkey = jax.random.split(key)
    params = make_params(pkey)
    packed = pack_params(params)

    # Synthetic "RoBERTa last_hidden_state": (BATCH, N_UTT, SEQ, BERT_DIM)
    hidden_all = jax.random.normal(hkey, (BATCH, N_UTT, SEQ, BERT_DIM), jnp.float32)

    processed, doc = jax.jit(utter_encoder)(hidden_all, packed)
    jax.block_until_ready((processed, doc))

    # lightweight correctness check against a pure-JAX reference
    # (tolerance covers the EUP approximate-reciprocal softmax)
    for b in range(BATCH):
        rp, rd = reference(hidden_all[b], params)
        assert jnp.allclose(processed[b], rp, rtol=5e-3, atol=5e-3), "processed mismatch"
        assert jnp.allclose(doc[b], rd, rtol=5e-3, atol=5e-3), "doc mismatch"

    print("KERNEL_OK")
</pallas_src>

<mosaic_0001>
module attributes {stable_mosaic.version = 11 : i64} {
  func.func @utter_encoder_kernel(%arg0: i32, %arg1: memref<1x8x16x32xf32, #tpu.memory_space<vmem>>, %arg2: memref<32x32xf32, #tpu.memory_space<vmem>>, %arg3: memref<3x32xf32, #tpu.memory_space<vmem>>, %arg4: memref<2x32x96xf32, #tpu.memory_space<vmem>>, %arg5: memref<2x32x32xf32, #tpu.memory_space<vmem>>, %arg6: memref<2x32x64xf32, #tpu.memory_space<vmem>>, %arg7: memref<2x64x32xf32, #tpu.memory_space<vmem>>, %arg8: memref<2x1x64xf32, #tpu.memory_space<vmem>>, %arg9: memref<2x5x32xf32, #tpu.memory_space<vmem>>, %arg10: memref<1x9x32xf32, #tpu.memory_space<vmem>>) attributes {dimension_semantics = [#tpu.dimension_semantics<parallel>], iteration_bounds = array<i64: 2>, scalar_prefetch = 0 : i64, scratch_operands = 0 : i64, tpu.core_type = #tpu.core_type<tc>, window_params = [{transform_indices = @transform_0, window_bounds = array<i64: 1, 8, 16, 32>}, {pipeline_mode = #tpu.pipeline_mode<synchronous>, transform_indices = @transform_1, window_bounds = array<i64: 32, 32>}, {pipeline_mode = #tpu.pipeline_mode<synchronous>, transform_indices = @transform_2, window_bounds = array<i64: 3, 32>}, {pipeline_mode = #tpu.pipeline_mode<synchronous>, transform_indices = @transform_3, window_bounds = array<i64: 2, 32, 96>}, {pipeline_mode = #tpu.pipeline_mode<synchronous>, transform_indices = @transform_4, window_bounds = array<i64: 2, 32, 32>}, {pipeline_mode = #tpu.pipeline_mode<synchronous>, transform_indices = @transform_5, window_bounds = array<i64: 2, 32, 64>}, {pipeline_mode = #tpu.pipeline_mode<synchronous>, transform_indices = @transform_6, window_bounds = array<i64: 2, 64, 32>}, {pipeline_mode = #tpu.pipeline_mode<synchronous>, transform_indices = @transform_7, window_bounds = array<i64: 2, 1, 64>}, {pipeline_mode = #tpu.pipeline_mode<synchronous>, transform_indices = @transform_8, window_bounds = array<i64: 2, 5, 32>}, {transform_indices = @transform_9, window_bounds = array<i64: 1, 9, 32>}]} {
    %c0 = arith.constant 0 : index
    %c0_0 = arith.constant 0 : index
    %c0_1 = arith.constant 0 : index
    %c0_2 = arith.constant 0 : index
    %0 = vector.load %arg1[%c0, %c0_0, %c0_1, %c0_2] : memref<1x8x16x32xf32, #tpu.memory_space<vmem>>, vector<1x8x16x32xf32>
    %1 = vector.shape_cast %0 : vector<1x8x16x32xf32> to vector<8x16x32xf32>
    %cst = arith.constant dense<0xFF800000> : vector<8x32xf32>
    %2 = vector.multi_reduction <maximumf>, %1, %cst [1] : vector<8x16x32xf32> to vector<8x32xf32>
    %c0_3 = arith.constant 0 : index
    %c0_4 = arith.constant 0 : index
    %3 = vector.load %arg2[%c0_3, %c0_4] : memref<32x32xf32, #tpu.memory_space<vmem>>, vector<32x32xf32>
    %cst_5 = arith.constant dense<0.000000e+00> : vector<8x32xf32>
    %4 = tpu.matmul %2, %3, %cst_5 {dimension_numbers = #tpu.dot_dimension_numbers<[1], [0], [0], [1], [0, 0, 1, 1], [], []>} : vector<8x32xf32>, vector<32x32xf32>, vector<8x32xf32> -> vector<8x32xf32>
    %c0_6 = arith.constant 0 : index
    %c0_7 = arith.constant 0 : index
    %5 = vector.load %arg3[%c0_6, %c0_7] : memref<3x32xf32, #tpu.memory_space<vmem>>, vector<1x32xf32>
    %6 = vector.broadcast %5 : vector<1x32xf32> to vector<8x32xf32>
    %7 = arith.addf %4, %6 : vector<8x32xf32>
    %8 = tpu.iota {dimensions = array<i32: 0>} : vector<8x8xi32>
    %9 = tpu.iota {dimensions = array<i32: 1>} : vector<8x8xi32>
    %10 = arith.cmpi sgt, %9, %8 : vector<8x8xi32>
    %c0_8 = arith.constant 0 : index
    %c0_9 = arith.constant 0 : index
    %c0_10 = arith.constant 0 : index
    %11 = vector.load %arg4[%c0_8, %c0_9, %c0_10] : memref<2x32x96xf32, #tpu.memory_space<vmem>>, vector<1x32x96xf32>
    %12 = vector.shape_cast %11 : vector<1x32x96xf32> to vector<32x96xf32>
    %c0_11 = arith.constant 0 : index
    %c0_12 = arith.constant 0 : index
    %c0_13 = arith.constant 0 : index
    %13 = vector.load %arg5[%c0_11, %c0_12, %c0_13] : memref<2x32x32xf32, #tpu.memory_space<vmem>>, vector<1x32x32xf32>
    %14 = vector.shape_cast %13 : vector<1x32x32xf32> to vector<32x32xf32>
    %c0_14 = arith.constant 0 : index
    %c0_15 = arith.constant 0 : index
    %c0_16 = arith.constant 0 : index
    %15 = vector.load %arg6[%c0_14, %c0_15, %c0_16] : memref<2x32x64xf32, #tpu.memory_space<vmem>>, vector<1x32x64xf32>
    %16 = vector.shape_cast %15 : vector<1x32x64xf32> to vector<32x64xf32>
    %c0_17 = arith.constant 0 : index
    %c0_18 = arith.constant 0 : index
    %c0_19 = arith.constant 0 : index
    %17 = vector.load %arg7[%c0_17, %c0_18, %c0_19] : memref<2x64x32xf32, #tpu.memory_space<vmem>>, vector<1x64x32xf32>
    %18 = vector.shape_cast %17 : vector<1x64x32xf32> to vector<64x32xf32>
    %c0_20 = arith.constant 0 : index
    %c0_21 = arith.constant 0 : index
    %c0_22 = arith.constant 0 : index
    %19 = vector.load %arg8[%c0_20, %c0_21, %c0_22] : memref<2x1x64xf32, #tpu.memory_space<vmem>>, vector<1x1x64xf32>
    %20 = vector.shape_cast %19 : vector<1x1x64xf32> to vector<1x64xf32>
    %c0_23 = arith.constant 0 : index
    %c0_24 = arith.constant 0 : index
    %c0_25 = arith.constant 0 : index
    %21 = vector.load %arg9[%c0_23, %c0_24, %c0_25] : memref<2x5x32xf32, #tpu.memory_space<vmem>>, vector<1x5x32xf32>
    %22 = vector.shape_cast %21 : vector<1x5x32xf32> to vector<5x32xf32>
    %cst_26 = arith.constant dense<0.000000e+00> : vector<8x96xf32>
    %23 = tpu.matmul %7, %12, %cst_26 {dimension_numbers = #tpu.dot_dimension_numbers<[1], [0], [0], [1], [0, 0, 1, 1], [], []>} : vector<8x32xf32>, vector<32x96xf32>, vector<8x96xf32> -> vector<8x96xf32>
    %cst_27 = arith.constant 0.000000e+00 : f32
    %24 = vector.broadcast %cst_27 : f32 to vector<8x32xf32>
    %25 = vector.extract_strided_slice %23 {offsets = [0, 0], sizes = [8, 8], strides = [1, 1]} : vector<8x96xf32> to vector<8x8xf32>
    %26 = vector.extract_strided_slice %23 {offsets = [0, 32], sizes = [8, 8], strides = [1, 1]} : vector<8x96xf32> to vector<8x8xf32>
    %27 = vector.extract_strided_slice %23 {offsets = [0, 64], sizes = [8, 8], strides = [1, 1]} : vector<8x96xf32> to vector<8x8xf32>
    %cst_28 = arith.constant dense<0.000000e+00> : vector<8x8xf32>
    %28 = tpu.matmul %25, %26, %cst_28 {dimension_numbers = #tpu.dot_dimension_numbers<[1], [1], [0], [0], [0, 0, 1, 0], [], []>} : vector<8x8xf32>, vector<8x8xf32>, vector<8x8xf32> -> vector<8x8xf32>
    %cst_29 = arith.constant 0.353553385 : f32
    %29 = vector.broadcast %cst_29 : f32 to vector<8x8xf32>
    %30 = arith.mulf %28, %29 : vector<8x8xf32>
    %cst_30 = arith.constant -1.000000e+30 : f32
    %31 = vector.broadcast %cst_30 : f32 to vector<8x8xf32>
    %32 = arith.select %10, %31, %30 : vector<8x8xi1>, vector<8x8xf32>
    %cst_31 = arith.constant dense<0xFF800000> : vector<8xf32>
    %33 = vector.multi_reduction <maximumf>, %32, %cst_31 [1] : vector<8x8xf32> to vector<8xf32>
    %34 = vector.shape_cast %33 : vector<8xf32> to vector<8x1xf32>
    %35 = vector.broadcast %34 : vector<8x1xf32> to vector<8x8xf32>
    %36 = arith.subf %32, %35 : vector<8x8xf32>
    %37 = math.exp %36 : vector<8x8xf32>
    %cst_32 = arith.constant dense<0.000000e+00> : vector<8xf32>
    %38 = vector.multi_reduction <add>, %37, %cst_32 [1] : vector<8x8xf32> to vector<8xf32>
    %39 = vector.shape_cast %38 : vector<8xf32> to vector<8x1xf32>
    %40 = tpu.reciprocal %39 {approx = true} : vector<8x1xf32> -> vector<8x1xf32>
    %41 = vector.broadcast %40 : vector<8x1xf32> to vector<8x8xf32>
    %42 = arith.mulf %37, %41 : vector<8x8xf32>
    %cst_33 = arith.constant dense<0.000000e+00> : vector<8x8xf32>
    %43 = tpu.matmul %42, %27, %cst_33 {dimension_numbers = #tpu.dot_dimension_numbers<[1], [0], [0], [1], [0, 0, 1, 1], [], []>} : vector<8x8xf32>, vector<8x8xf32>, vector<8x8xf32> -> vector<8x8xf32>
    %44 = vector.extract_strided_slice %14 {offsets = [0, 0], sizes = [8, 32], strides = [1, 1]} : vector<32x32xf32> to vector<8x32xf32>
    %cst_34 = arith.constant dense<0.000000e+00> : vector<8x32xf32>
    %45 = tpu.matmul %43, %44, %cst_34 {dimension_numbers = #tpu.dot_dimension_numbers<[1], [0], [0], [1], [0, 0, 1, 1], [], []>} : vector<8x8xf32>, vector<8x32xf32>, vector<8x32xf32> -> vector<8x32xf32>
    %46 = arith.addf %24, %45 : vector<8x32xf32>
    %47 = vector.extract_strided_slice %23 {offsets = [0, 8], sizes = [8, 8], strides = [1, 1]} : vector<8x96xf32> to vector<8x8xf32>
    %48 = vector.extract_strided_slice %23 {offsets = [0, 40], sizes = [8, 8], strides = [1, 1]} : vector<8x96xf32> to vector<8x8xf32>
    %49 = vector.extract_strided_slice %23 {offsets = [0, 72], sizes = [8, 8], strides = [1, 1]} : vector<8x96xf32> to vector<8x8xf32>
    %cst_35 = arith.constant dense<0.000000e+00> : vector<8x8xf32>
    %50 = tpu.matmul %47, %48, %cst_35 {dimension_numbers = #tpu.dot_dimension_numbers<[1], [1], [0], [0], [0, 0, 1, 0], [], []>} : vector<8x8xf32>, vector<8x8xf32>, vector<8x8xf32> -> vector<8x8xf32>
    %cst_36 = arith.constant 0.353553385 : f32
    %51 = vector.broadcast %cst_36 : f32 to vector<8x8xf32>
    %52 = arith.mulf %50, %51 : vector<8x8xf32>
    %cst_37 = arith.constant -1.000000e+30 : f32
    %53 = vector.broadcast %cst_37 : f32 to vector<8x8xf32>
    %54 = arith.select %10, %53, %52 : vector<8x8xi1>, vector<8x8xf32>
    %cst_38 = arith.constant dense<0xFF800000> : vector<8xf32>
    %55 = vector.multi_reduction <maximumf>, %54, %cst_38 [1] : vector<8x8xf32> to vector<8xf32>
    %56 = vector.shape_cast %55 : vector<8xf32> to vector<8x1xf32>
    %57 = vector.broadcast %56 : vector<8x1xf32> to vector<8x8xf32>
    %58 = arith.subf %54, %57 : vector<8x8xf32>
    %59 = math.exp %58 : vector<8x8xf32>
    %cst_39 = arith.constant dense<0.000000e+00> : vector<8xf32>
    %60 = vector.multi_reduction <add>, %59, %cst_39 [1] : vector<8x8xf32> to vector<8xf32>
    %61 = vector.shape_cast %60 : vector<8xf32> to vector<8x1xf32>
    %62 = tpu.reciprocal %61 {approx = true} : vector<8x1xf32> -> vector<8x1xf32>
    %63 = vector.broadcast %62 : vector<8x1xf32> to vector<8x8xf32>
    %64 = arith.mulf %59, %63 : vector<8x8xf32>
    %cst_40 = arith.constant dense<0.000000e+00> : vector<8x8xf32>
    %65 = tpu.matmul %64, %49, %cst_40 {dimension_numbers = #tpu.dot_dimension_numbers<[1], [0], [0], [1], [0, 0, 1, 1], [], []>} : vector<8x8xf32>, vector<8x8xf32>, vector<8x8xf32> -> vector<8x8xf32>
    %66 = vector.extract_strided_slice %14 {offsets = [8, 0], sizes = [8, 32], strides = [1, 1]} : vector<32x32xf32> to vector<8x32xf32>
    %cst_41 = arith.constant dense<0.000000e+00> : vector<8x32xf32>
    %67 = tpu.matmul %65, %66, %cst_41 {dimension_numbers = #tpu.dot_dimension_numbers<[1], [0], [0], [1], [0, 0, 1, 1], [], []>} : vector<8x8xf32>, vector<8x32xf32>, vector<8x32xf32> -> vector<8x32xf32>
    %68 = arith.addf %46, %67 : vector<8x32xf32>
    %69 = vector.extract_strided_slice %23 {offsets = [0, 16], sizes = [8, 8], strides = [1, 1]} : vector<8x96xf32> to vector<8x8xf32>
    %70 = vector.extract_strided_slice %23 {offsets = [0, 48], sizes = [8, 8], strides = [1, 1]} : vector<8x96xf32> to vector<8x8xf32>
    %71 = vector.extract_strided_slice %23 {offsets = [0, 80], sizes = [8, 8], strides = [1, 1]} : vector<8x96xf32> to vector<8x8xf32>
    %cst_42 = arith.constant dense<0.000000e+00> : vector<8x8xf32>
    %72 = tpu.matmul %69, %70, %cst_42 {dimension_numbers = #tpu.dot_dimension_numbers<[1], [1], [0], [0], [0, 0, 1, 0], [], []>} : vector<8x8xf32>, vector<8x8xf32>, vector<8x8xf32> -> vector<8x8xf32>
    %cst_43 = arith.constant 0.353553385 : f32
    %73 = vector.broadcast %cst_43 : f32 to vector<8x8xf32>
    %74 = arith.mulf %72, %73 : vector<8x8xf32>
    %cst_44 = arith.constant -1.000000e+30 : f32
    %75 = vector.broadcast %cst_44 : f32 to vector<8x8xf32>
    %76 = arith.select %10, %75, %74 : vector<8x8xi1>, vector<8x8xf32>
    %cst_45 = arith.constant dense<0xFF800000> : vector<8xf32>
    %77 = vector.multi_reduction <maximumf>, %76, %cst_45 [1] : vector<8x8xf32> to vector<8xf32>
    %78 = vector.shape_cast %77 : vector<8xf32> to vector<8x1xf32>
    %79 = vector.broadcast %78 : vector<8x1xf32> to vector<8x8xf32>
    %80 = arith.subf %76, %79 : vector<8x8xf32>
    %81 = math.exp %80 : vector<8x8xf32>
    %cst_46 = arith.constant dense<0.000000e+00> : vector<8xf32>
    %82 = vector.multi_reduction <add>, %81, %cst_46 [1] : vector<8x8xf32> to vector<8xf32>
    %83 = vector.shape_cast %82 : vector<8xf32> to vector<8x1xf32>
    %84 = tpu.reciprocal %83 {approx = true} : vector<8x1xf32> -> vector<8x1xf32>
    %85 = vector.broadcast %84 : vector<8x1xf32> to vector<8x8xf32>
    %86 = arith.mulf %81, %85 : vector<8x8xf32>
    %cst_47 = arith.constant dense<0.000000e+00> : vector<8x8xf32>
    %87 = tpu.matmul %86, %71, %cst_47 {dimension_numbers = #tpu.dot_dimension_numbers<[1], [0], [0], [1], [0, 0, 1, 1], [], []>} : vector<8x8xf32>, vector<8x8xf32>, vector<8x8xf32> -> vector<8x8xf32>
    %88 = vector.extract_strided_slice %14 {offsets = [16, 0], sizes = [8, 32], strides = [1, 1]} : vector<32x32xf32> to vector<8x32xf32>
    %cst_48 = arith.constant dense<0.000000e+00> : vector<8x32xf32>
    %89 = tpu.matmul %87, %88, %cst_48 {dimension_numbers = #tpu.dot_dimension_numbers<[1], [0], [0], [1], [0, 0, 1, 1], [], []>} : vector<8x8xf32>, vector<8x32xf32>, vector<8x32xf32> -> vector<8x32xf32>
    %90 = arith.addf %68, %89 : vector<8x32xf32>
    %91 = vector.extract_strided_slice %23 {offsets = [0, 24], sizes = [8, 8], strides = [1, 1]} : vector<8x96xf32> to vector<8x8xf32>
    %92 = vector.extract_strided_slice %23 {offsets = [0, 56], sizes = [8, 8], strides = [1, 1]} : vector<8x96xf32> to vector<8x8xf32>
    %93 = vector.extract_strided_slice %23 {offsets = [0, 88], sizes = [8, 8], strides = [1, 1]} : vector<8x96xf32> to vector<8x8xf32>
    %cst_49 = arith.constant dense<0.000000e+00> : vector<8x8xf32>
    %94 = tpu.matmul %91, %92, %cst_49 {dimension_numbers = #tpu.dot_dimension_numbers<[1], [1], [0], [0], [0, 0, 1, 0], [], []>} : vector<8x8xf32>, vector<8x8xf32>, vector<8x8xf32> -> vector<8x8xf32>
    %cst_50 = arith.constant 0.353553385 : f32
    %95 = vector.broadcast %cst_50 : f32 to vector<8x8xf32>
    %96 = arith.mulf %94, %95 : vector<8x8xf32>
    %cst_51 = arith.constant -1.000000e+30 : f32
    %97 = vector.broadcast %cst_51 : f32 to vector<8x8xf32>
    %98 = arith.select %10, %97, %96 : vector<8x8xi1>, vector<8x8xf32>
    %cst_52 = arith.constant dense<0xFF800000> : vector<8xf32>
    %99 = vector.multi_reduction <maximumf>, %98, %cst_52 [1] : vector<8x8xf32> to vector<8xf32>
    %100 = vector.shape_cast %99 : vector<8xf32> to vector<8x1xf32>
    %101 = vector.broadcast %100 : vector<8x1xf32> to vector<8x8xf32>
    %102 = arith.subf %98, %101 : vector<8x8xf32>
    %103 = math.exp %102 : vector<8x8xf32>
    %cst_53 = arith.constant dense<0.000000e+00> : vector<8xf32>
    %104 = vector.multi_reduction <add>, %103, %cst_53 [1] : vector<8x8xf32> to vector<8xf32>
    %105 = vector.shape_cast %104 : vector<8xf32> to vector<8x1xf32>
    %106 = tpu.reciprocal %105 {approx = true} : vector<8x1xf32> -> vector<8x1xf32>
    %107 = vector.broadcast %106 : vector<8x1xf32> to vector<8x8xf32>
    %108 = arith.mulf %103, %107 : vector<8x8xf32>
    %cst_54 = arith.constant dense<0.000000e+00> : vector<8x8xf32>
    %109 = tpu.matmul %108, %93, %cst_54 {dimension_numbers = #tpu.dot_dimension_numbers<[1], [0], [0], [1], [0, 0, 1, 1], [], []>} : vector<8x8xf32>, vector<8x8xf32>, vector<8x8xf32> -> vector<8x8xf32>
    %110 = vector.extract_strided_slice %14 {offsets = [24, 0], sizes = [8, 32], strides = [1, 1]} : vector<32x32xf32> to vector<8x32xf32>
    %cst_55 = arith.constant dense<0.000000e+00> : vector<8x32xf32>
    %111 = tpu.matmul %109, %110, %cst_55 {dimension_numbers = #tpu.dot_dimension_numbers<[1], [0], [0], [1], [0, 0, 1, 1], [], []>} : vector<8x8xf32>, vector<8x32xf32>, vector<8x32xf32> -> vector<8x32xf32>
    %112 = arith.addf %90, %111 : vector<8x32xf32>
    %113 = arith.addf %7, %112 : vector<8x32xf32>
    %114 = vector.extract_strided_slice %22 {offsets = [1, 0], sizes = [1, 32], strides = [1, 1]} : vector<5x32xf32> to vector<1x32xf32>
    %115 = vector.extract_strided_slice %22 {offsets = [2, 0], sizes = [1, 32], strides = [1, 1]} : vector<5x32xf32> to vector<1x32xf32>
    %cst_56 = arith.constant dense<0.000000e+00> : vector<8xf32>
    %116 = vector.multi_reduction <add>, %113, %cst_56 [1] : vector<8x32xf32> to vector<8xf32>
    %117 = vector.shape_cast %116 : vector<8xf32> to vector<8x1xf32>
    %cst_57 = arith.constant 3.200000e+01 : f32
    %118 = vector.broadcast %cst_57 : f32 to vector<8x1xf32>
    %119 = arith.divf %117, %118 : vector<8x1xf32>
    %120 = vector.broadcast %119 : vector<8x1xf32> to vector<8x32xf32>
    %121 = arith.subf %113, %120 : vector<8x32xf32>
    %122 = arith.mulf %121, %121 : vector<8x32xf32>
    %cst_58 = arith.constant dense<0.000000e+00> : vector<8xf32>
    %123 = vector.multi_reduction <add>, %122, %cst_58 [1] : vector<8x32xf32> to vector<8xf32>
    %124 = vector.shape_cast %123 : vector<8xf32> to vector<8x1xf32>
    %cst_59 = arith.constant 3.200000e+01 : f32
    %125 = vector.broadcast %cst_59 : f32 to vector<8x1xf32>
    %126 = arith.divf %124, %125 : vector<8x1xf32>
    %127 = vector.broadcast %119 : vector<8x1xf32> to vector<8x32xf32>
    %128 = arith.subf %113, %127 : vector<8x32xf32>
    %cst_60 = arith.constant 9.99999974E-6 : f32
    %129 = vector.broadcast %cst_60 : f32 to vector<8x1xf32>
    %130 = arith.addf %126, %129 : vector<8x1xf32>
    %131 = math.rsqrt %130 : vector<8x1xf32>
    %132 = vector.broadcast %131 : vector<8x1xf32> to vector<8x32xf32>
    %133 = arith.mulf %128, %132 : vector<8x32xf32>
    %134 = vector.broadcast %114 : vector<1x32xf32> to vector<8x32xf32>
    %135 = arith.mulf %133, %134 : vector<8x32xf32>
    %136 = vector.broadcast %115 : vector<1x32xf32> to vector<8x32xf32>
    %137 = arith.addf %135, %136 : vector<8x32xf32>
    %cst_61 = arith.constant dense<0.000000e+00> : vector<8x64xf32>
    %138 = tpu.matmul %137, %16, %cst_61 {dimension_numbers = #tpu.dot_dimension_numbers<[1], [0], [0], [1], [0, 0, 1, 1], [], []>} : vector<8x32xf32>, vector<32x64xf32>, vector<8x64xf32> -> vector<8x64xf32>
    %139 = vector.broadcast %20 : vector<1x64xf32> to vector<8x64xf32>
    %140 = arith.addf %138, %139 : vector<8x64xf32>
    %cst_62 = arith.constant 0.000000e+00 : f32
    %141 = vector.broadcast %cst_62 : f32 to vector<8x64xf32>
    %142 = arith.maximumf %140, %141 : vector<8x64xf32>
    %cst_63 = arith.constant dense<0.000000e+00> : vector<8x32xf32>
    %143 = tpu.matmul %142, %18, %cst_63 {dimension_numbers = #tpu.dot_dimension_numbers<[1], [0], [0], [1], [0, 0, 1, 1], [], []>} : vector<8x64xf32>, vector<64x32xf32>, vector<8x32xf32> -> vector<8x32xf32>
    %144 = vector.extract_strided_slice %22 {offsets = [0, 0], sizes = [1, 32], strides = [1, 1]} : vector<5x32xf32> to vector<1x32xf32>
    %145 = vector.broadcast %144 : vector<1x32xf32> to vector<8x32xf32>
    %146 = arith.addf %143, %145 : vector<8x32xf32>
    %147 = arith.addf %137, %146 : vector<8x32xf32>
    %148 = vector.extract_strided_slice %22 {offsets = [3, 0], sizes = [1, 32], strides = [1, 1]} : vector<5x32xf32> to vector<1x32xf32>
    %149 = vector.extract_strided_slice %22 {offsets = [4, 0], sizes = [1, 32], strides = [1, 1]} : vector<5x32xf32> to vector<1x32xf32>
    %cst_64 = arith.constant dense<0.000000e+00> : vector<8xf32>
    %150 = vector.multi_reduction <add>, %147, %cst_64 [1] : vector<8x32xf32> to vector<8xf32>
    %151 = vector.shape_cast %150 : vector<8xf32> to vector<8x1xf32>
    %cst_65 = arith.constant 3.200000e+01 : f32
    %152 = vector.broadcast %cst_65 : f32 to vector<8x1xf32>
    %153 = arith.divf %151, %152 : vector<8x1xf32>
    %154 = vector.broadcast %153 : vector<8x1xf32> to vector<8x32xf32>
    %155 = arith.subf %147, %154 : vector<8x32xf32>
    %156 = arith.mulf %155, %155 : vector<8x32xf32>
    %cst_66 = arith.constant dense<0.000000e+00> : vector<8xf32>
    %157 = vector.multi_reduction <add>, %156, %cst_66 [1] : vector<8x32xf32> to vector<8xf32>
    %158 = vector.shape_cast %157 : vector<8xf32> to vector<8x1xf32>
    %cst_67 = arith.constant 3.200000e+01 : f32
    %159 = vector.broadcast %cst_67 : f32 to vector<8x1xf32>
    %160 = arith.divf %158, %159 : vector<8x1xf32>
    %161 = vector.broadcast %153 : vector<8x1xf32> to vector<8x32xf32>
    %162 = arith.subf %147, %161 : vector<8x32xf32>
    %cst_68 = arith.constant 9.99999974E-6 : f32
    %163 = vector.broadcast %cst_68 : f32 to vector<8x1xf32>
    %164 = arith.addf %160, %163 : vector<8x1xf32>
    %165 = math.rsqrt %164 : vector<8x1xf32>
    %166 = vector.broadcast %165 : vector<8x1xf32> to vector<8x32xf32>
    %167 = arith.mulf %162, %166 : vector<8x32xf32>
    %168 = vector.broadcast %148 : vector<1x32xf32> to vector<8x32xf32>
    %169 = arith.mulf %167, %168 : vector<8x32xf32>
    %170 = vector.broadcast %149 : vector<1x32xf32> to vector<8x32xf32>
    %171 = arith.addf %169, %170 : vector<8x32xf32>
    %c1 = arith.constant 1 : index
    %c0_69 = arith.constant 0 : index
    %c0_70 = arith.constant 0 : index
    %172 = vector.load %arg4[%c1, %c0_69, %c0_70] : memref<2x32x96xf32, #tpu.memory_space<vmem>>, vector<1x32x96xf32>
    %173 = vector.shape_cast %172 : vector<1x32x96xf32> to vector<32x96xf32>
    %c1_71 = arith.constant 1 : index
    %c0_72 = arith.constant 0 : index
    %c0_73 = arith.constant 0 : index
    %174 = vector.load %arg5[%c1_71, %c0_72, %c0_73] : memref<2x32x32xf32, #tpu.memory_space<vmem>>, vector<1x32x32xf32>
    %175 = vector.shape_cast %174 : vector<1x32x32xf32> to vector<32x32xf32>
    %c1_74 = arith.constant 1 : index
    %c0_75 = arith.constant 0 : index
    %c0_76 = arith.constant 0 : index
    %176 = vector.load %arg6[%c1_74, %c0_75, %c0_76] : memref<2x32x64xf32, #tpu.memory_space<vmem>>, vector<1x32x64xf32>
    %177 = vector.shape_cast %176 : vector<1x32x64xf32> to vector<32x64xf32>
    %c1_77 = arith.constant 1 : index
    %c0_78 = arith.constant 0 : index
    %c0_79 = arith.constant 0 : index
    %178 = vector.load %arg7[%c1_77, %c0_78, %c0_79] : memref<2x64x32xf32, #tpu.memory_space<vmem>>, vector<1x64x32xf32>
    %179 = vector.shape_cast %178 : vector<1x64x32xf32> to vector<64x32xf32>
    %c1_80 = arith.constant 1 : index
    %c0_81 = arith.constant 0 : index
    %c0_82 = arith.constant 0 : index
    %180 = vector.load %arg8[%c1_80, %c0_81, %c0_82] : memref<2x1x64xf32, #tpu.memory_space<vmem>>, vector<1x1x64xf32>
    %181 = vector.shape_cast %180 : vector<1x1x64xf32> to vector<1x64xf32>
    %c1_83 = arith.constant 1 : index
    %c0_84 = arith.constant 0 : index
    %c0_85 = arith.constant 0 : index
    %182 = vector.load %arg9[%c1_83, %c0_84, %c0_85] : memref<2x5x32xf32, #tpu.memory_space<vmem>>, vector<1x5x32xf32>
    %183 = vector.shape_cast %182 : vector<1x5x32xf32> to vector<5x32xf32>
    %cst_86 = arith.constant dense<0.000000e+00> : vector<8x96xf32>
    %184 = tpu.matmul %171, %173, %cst_86 {dimension_numbers = #tpu.dot_dimension_numbers<[1], [0], [0], [1], [0, 0, 1, 1], [], []>} : vector<8x32xf32>, vector<32x96xf32>, vector<8x96xf32> -> vector<8x96xf32>
    %cst_87 = arith.constant 0.000000e+00 : f32
    %185 = vector.broadcast %cst_87 : f32 to vector<8x32xf32>
    %186 = vector.extract_strided_slice %184 {offsets = [0, 0], sizes = [8, 8], strides = [1, 1]} : vector<8x96xf32> to vector<8x8xf32>
    %187 = vector.extract_strided_slice %184 {offsets = [0, 32], sizes = [8, 8], strides = [1, 1]} : vector<8x96xf32> to vector<8x8xf32>
    %188 = vector.extract_strided_slice %184 {offsets = [0, 64], sizes = [8, 8], strides = [1, 1]} : vector<8x96xf32> to vector<8x8xf32>
    %cst_88 = arith.constant dense<0.000000e+00> : vector<8x8xf32>
    %189 = tpu.matmul %186, %187, %cst_88 {dimension_numbers = #tpu.dot_dimension_numbers<[1], [1], [0], [0], [0, 0, 1, 0], [], []>} : vector<8x8xf32>, vector<8x8xf32>, vector<8x8xf32> -> vector<8x8xf32>
    %cst_89 = arith.constant 0.353553385 : f32
    %190 = vector.broadcast %cst_89 : f32 to vector<8x8xf32>
    %191 = arith.mulf %189, %190 : vector<8x8xf32>
    %cst_90 = arith.constant -1.000000e+30 : f32
    %192 = vector.broadcast %cst_90 : f32 to vector<8x8xf32>
    %193 = arith.select %10, %192, %191 : vector<8x8xi1>, vector<8x8xf32>
    %cst_91 = arith.constant dense<0xFF800000> : vector<8xf32>
    %194 = vector.multi_reduction <maximumf>, %193, %cst_91 [1] : vector<8x8xf32> to vector<8xf32>
    %195 = vector.shape_cast %194 : vector<8xf32> to vector<8x1xf32>
    %196 = vector.broadcast %195 : vector<8x1xf32> to vector<8x8xf32>
    %197 = arith.subf %193, %196 : vector<8x8xf32>
    %198 = math.exp %197 : vector<8x8xf32>
    %cst_92 = arith.constant dense<0.000000e+00> : vector<8xf32>
    %199 = vector.multi_reduction <add>, %198, %cst_92 [1] : vector<8x8xf32> to vector<8xf32>
    %200 = vector.shape_cast %199 : vector<8xf32> to vector<8x1xf32>
    %201 = tpu.reciprocal %200 {approx = true} : vector<8x1xf32> -> vector<8x1xf32>
    %202 = vector.broadcast %201 : vector<8x1xf32> to vector<8x8xf32>
    %203 = arith.mulf %198, %202 : vector<8x8xf32>
    %cst_93 = arith.constant dense<0.000000e+00> : vector<8x8xf32>
    %204 = tpu.matmul %203, %188, %cst_93 {dimension_numbers = #tpu.dot_dimension_numbers<[1], [0], [0], [1], [0, 0, 1, 1], [], []>} : vector<8x8xf32>, vector<8x8xf32>, vector<8x8xf32> -> vector<8x8xf32>
    %205 = vector.extract_strided_slice %175 {offsets = [0, 0], sizes = [8, 32], strides = [1, 1]} : vector<32x32xf32> to vector<8x32xf32>
    %cst_94 = arith.constant dense<0.000000e+00> : vector<8x32xf32>
    %206 = tpu.matmul %204, %205, %cst_94 {dimension_numbers = #tpu.dot_dimension_numbers<[1], [0], [0], [1], [0, 0, 1, 1], [], []>} : vector<8x8xf32>, vector<8x32xf32>, vector<8x32xf32> -> vector<8x32xf32>
    %207 = arith.addf %185, %206 : vector<8x32xf32>
    %208 = vector.extract_strided_slice %184 {offsets = [0, 8], sizes = [8, 8], strides = [1, 1]} : vector<8x96xf32> to vector<8x8xf32>
    %209 = vector.extract_strided_slice %184 {offsets = [0, 40], sizes = [8, 8], strides = [1, 1]} : vector<8x96xf32> to vector<8x8xf32>
    %210 = vector.extract_strided_slice %184 {offsets = [0, 72], sizes = [8, 8], strides = [1, 1]} : vector<8x96xf32> to vector<8x8xf32>
    %cst_95 = arith.constant dense<0.000000e+00> : vector<8x8xf32>
    %211 = tpu.matmul %208, %209, %cst_95 {dimension_numbers = #tpu.dot_dimension_numbers<[1], [1], [0], [0], [0, 0, 1, 0], [], []>} : vector<8x8xf32>, vector<8x8xf32>, vector<8x8xf32> -> vector<8x8xf32>
    %cst_96 = arith.constant 0.353553385 : f32
    %212 = vector.broadcast %cst_96 : f32 to vector<8x8xf32>
    %213 = arith.mulf %211, %212 : vector<8x8xf32>
    %cst_97 = arith.constant -1.000000e+30 : f32
    %214 = vector.broadcast %cst_97 : f32 to vector<8x8xf32>
    %215 = arith.select %10, %214, %213 : vector<8x8xi1>, vector<8x8xf32>
    %cst_98 = arith.constant dense<0xFF800000> : vector<8xf32>
    %216 = vector.multi_reduction <maximumf>, %215, %cst_98 [1] : vector<8x8xf32> to vector<8xf32>
    %217 = vector.shape_cast %216 : vector<8xf32> to vector<8x1xf32>
    %218 = vector.broadcast %217 : vector<8x1xf32> to vector<8x8xf32>
    %219 = arith.subf %215, %218 : vector<8x8xf32>
    %220 = math.exp %219 : vector<8x8xf32>
    %cst_99 = arith.constant dense<0.000000e+00> : vector<8xf32>
    %221 = vector.multi_reduction <add>, %220, %cst_99 [1] : vector<8x8xf32> to vector<8xf32>
    %222 = vector.shape_cast %221 : vector<8xf32> to vector<8x1xf32>
    %223 = tpu.reciprocal %222 {approx = true} : vector<8x1xf32> -> vector<8x1xf32>
    %224 = vector.broadcast %223 : vector<8x1xf32> to vector<8x8xf32>
    %225 = arith.mulf %220, %224 : vector<8x8xf32>
    %cst_100 = arith.constant dense<0.000000e+00> : vector<8x8xf32>
    %226 = tpu.matmul %225, %210, %cst_100 {dimension_numbers = #tpu.dot_dimension_numbers<[1], [0], [0], [1], [0, 0, 1, 1], [], []>} : vector<8x8xf32>, vector<8x8xf32>, vector<8x8xf32> -> vector<8x8xf32>
    %227 = vector.extract_strided_slice %175 {offsets = [8, 0], sizes = [8, 32], strides = [1, 1]} : vector<32x32xf32> to vector<8x32xf32>
    %cst_101 = arith.constant dense<0.000000e+00> : vector<8x32xf32>
    %228 = tpu.matmul %226, %227, %cst_101 {dimension_numbers = #tpu.dot_dimension_numbers<[1], [0], [0], [1], [0, 0, 1, 1], [], []>} : vector<8x8xf32>, vector<8x32xf32>, vector<8x32xf32> -> vector<8x32xf32>
    %229 = arith.addf %207, %228 : vector<8x32xf32>
    %230 = vector.extract_strided_slice %184 {offsets = [0, 16], sizes = [8, 8], strides = [1, 1]} : vector<8x96xf32> to vector<8x8xf32>
    %231 = vector.extract_strided_slice %184 {offsets = [0, 48], sizes = [8, 8], strides = [1, 1]} : vector<8x96xf32> to vector<8x8xf32>
    %232 = vector.extract_strided_slice %184 {offsets = [0, 80], sizes = [8, 8], strides = [1, 1]} : vector<8x96xf32> to vector<8x8xf32>
    %cst_102 = arith.constant dense<0.000000e+00> : vector<8x8xf32>
    %233 = tpu.matmul %230, %231, %cst_102 {dimension_numbers = #tpu.dot_dimension_numbers<[1], [1], [0], [0], [0, 0, 1, 0], [], []>} : vector<8x8xf32>, vector<8x8xf32>, vector<8x8xf32> -> vector<8x8xf32>
    %cst_103 = arith.constant 0.353553385 : f32
    %234 = vector.broadcast %cst_103 : f32 to vector<8x8xf32>
    %235 = arith.mulf %233, %234 : vector<8x8xf32>
    %cst_104 = arith.constant -1.000000e+30 : f32
    %236 = vector.broadcast %cst_104 : f32 to vector<8x8xf32>
    %237 = arith.select %10, %236, %235 : vector<8x8xi1>, vector<8x8xf32>
    %cst_105 = arith.constant dense<0xFF800000> : vector<8xf32>
    %238 = vector.multi_reduction <maximumf>, %237, %cst_105 [1] : vector<8x8xf32> to vector<8xf32>
    %239 = vector.shape_cast %238 : vector<8xf32> to vector<8x1xf32>
    %240 = vector.broadcast %239 : vector<8x1xf32> to vector<8x8xf32>
    %241 = arith.subf %237, %240 : vector<8x8xf32>
    %242 = math.exp %241 : vector<8x8xf32>
    %cst_106 = arith.constant dense<0.000000e+00> : vector<8xf32>
    %243 = vector.multi_reduction <add>, %242, %cst_106 [1] : vector<8x8xf32> to vector<8xf32>
    %244 = vector.shape_cast %243 : vector<8xf32> to vector<8x1xf32>
    %245 = tpu.reciprocal %244 {approx = true} : vector<8x1xf32> -> vector<8x1xf32>
    %246 = vector.broadcast %245 : vector<8x1xf32> to vector<8x8xf32>
    %247 = arith.mulf %242, %246 : vector<8x8xf32>
    %cst_107 = arith.constant dense<0.000000e+00> : vector<8x8xf32>
    %248 = tpu.matmul %247, %232, %cst_107 {dimension_numbers = #tpu.dot_dimension_numbers<[1], [0], [0], [1], [0, 0, 1, 1], [], []>} : vector<8x8xf32>, vector<8x8xf32>, vector<8x8xf32> -> vector<8x8xf32>
    %249 = vector.extract_strided_slice %175 {offsets = [16, 0], sizes = [8, 32], strides = [1, 1]} : vector<32x32xf32> to vector<8x32xf32>
    %cst_108 = arith.constant dense<0.000000e+00> : vector<8x32xf32>
    %250 = tpu.matmul %248, %249, %cst_108 {dimension_numbers = #tpu.dot_dimension_numbers<[1], [0], [0], [1], [0, 0, 1, 1], [], []>} : vector<8x8xf32>, vector<8x32xf32>, vector<8x32xf32> -> vector<8x32xf32>
    %251 = arith.addf %229, %250 : vector<8x32xf32>
    %252 = vector.extract_strided_slice %184 {offsets = [0, 24], sizes = [8, 8], strides = [1, 1]} : vector<8x96xf32> to vector<8x8xf32>
    %253 = vector.extract_strided_slice %184 {offsets = [0, 56], sizes = [8, 8], strides = [1, 1]} : vector<8x96xf32> to vector<8x8xf32>
    %254 = vector.extract_strided_slice %184 {offsets = [0, 88], sizes = [8, 8], strides = [1, 1]} : vector<8x96xf32> to vector<8x8xf32>
    %cst_109 = arith.constant dense<0.000000e+00> : vector<8x8xf32>
    %255 = tpu.matmul %252, %253, %cst_109 {dimension_numbers = #tpu.dot_dimension_numbers<[1], [1], [0], [0], [0, 0, 1, 0], [], []>} : vector<8x8xf32>, vector<8x8xf32>, vector<8x8xf32> -> vector<8x8xf32>
    %cst_110 = arith.constant 0.353553385 : f32
    %256 = vector.broadcast %cst_110 : f32 to vector<8x8xf32>
    %257 = arith.mulf %255, %256 : vector<8x8xf32>
    %cst_111 = arith.constant -1.000000e+30 : f32
    %258 = vector.broadcast %cst_111 : f32 to vector<8x8xf32>
    %259 = arith.select %10, %258, %257 : vector<8x8xi1>, vector<8x8xf32>
    %cst_112 = arith.constant dense<0xFF800000> : vector<8xf32>
    %260 = vector.multi_reduction <maximumf>, %259, %cst_112 [1] : vector<8x8xf32> to vector<8xf32>
    %261 = vector.shape_cast %260 : vector<8xf32> to vector<8x1xf32>
    %262 = vector.broadcast %261 : vector<8x1xf32> to vector<8x8xf32>
    %263 = arith.subf %259, %262 : vector<8x8xf32>
    %264 = math.exp %263 : vector<8x8xf32>
    %cst_113 = arith.constant dense<0.000000e+00> : vector<8xf32>
    %265 = vector.multi_reduction <add>, %264, %cst_113 [1] : vector<8x8xf32> to vector<8xf32>
    %266 = vector.shape_cast %265 : vector<8xf32> to vector<8x1xf32>
    %267 = tpu.reciprocal %266 {approx = true} : vector<8x1xf32> -> vector<8x1xf32>
    %268 = vector.broadcast %267 : vector<8x1xf32> to vector<8x8xf32>
    %269 = arith.mulf %264, %268 : vector<8x8xf32>
    %cst_114 = arith.constant dense<0.000000e+00> : vector<8x8xf32>
    %270 = tpu.matmul %269, %254, %cst_114 {dimension_numbers = #tpu.dot_dimension_numbers<[1], [0], [0], [1], [0, 0, 1, 1], [], []>} : vector<8x8xf32>, vector<8x8xf32>, vector<8x8xf32> -> vector<8x8xf32>
    %271 = vector.extract_strided_slice %175 {offsets = [24, 0], sizes = [8, 32], strides = [1, 1]} : vector<32x32xf32> to vector<8x32xf32>
    %cst_115 = arith.constant dense<0.000000e+00> : vector<8x32xf32>
    %272 = tpu.matmul %270, %271, %cst_115 {dimension_numbers = #tpu.dot_dimension_numbers<[1], [0], [0], [1], [0, 0, 1, 1], [], []>} : vector<8x8xf32>, vector<8x32xf32>, vector<8x32xf32> -> vector<8x32xf32>
    %273 = arith.addf %251, %272 : vector<8x32xf32>
    %274 = arith.addf %171, %273 : vector<8x32xf32>
    %275 = vector.extract_strided_slice %183 {offsets = [1, 0], sizes = [1, 32], strides = [1, 1]} : vector<5x32xf32> to vector<1x32xf32>
    %276 = vector.extract_strided_slice %183 {offsets = [2, 0], sizes = [1, 32], strides = [1, 1]} : vector<5x32xf32> to vector<1x32xf32>
    %cst_116 = arith.constant dense<0.000000e+00> : vector<8xf32>
    %277 = vector.multi_reduction <add>, %274, %cst_116 [1] : vector<8x32xf32> to vector<8xf32>
    %278 = vector.shape_cast %277 : vector<8xf32> to vector<8x1xf32>
    %cst_117 = arith.constant 3.200000e+01 : f32
    %279 = vector.broadcast %cst_117 : f32 to vector<8x1xf32>
    %280 = arith.divf %278, %279 : vector<8x1xf32>
    %281 = vector.broadcast %280 : vector<8x1xf32> to vector<8x32xf32>
    %282 = arith.subf %274, %281 : vector<8x32xf32>
    %283 = arith.mulf %282, %282 : vector<8x32xf32>
    %cst_118 = arith.constant dense<0.000000e+00> : vector<8xf32>
    %284 = vector.multi_reduction <add>, %283, %cst_118 [1] : vector<8x32xf32> to vector<8xf32>
    %285 = vector.shape_cast %284 : vector<8xf32> to vector<8x1xf32>
    %cst_119 = arith.constant 3.200000e+01 : f32
    %286 = vector.broadcast %cst_119 : f32 to vector<8x1xf32>
    %287 = arith.divf %285, %286 : vector<8x1xf32>
    %288 = vector.broadcast %280 : vector<8x1xf32> to vector<8x32xf32>
    %289 = arith.subf %274, %288 : vector<8x32xf32>
    %cst_120 = arith.constant 9.99999974E-6 : f32
    %290 = vector.broadcast %cst_120 : f32 to vector<8x1xf32>
    %291 = arith.addf %287, %290 : vector<8x1xf32>
    %292 = math.rsqrt %291 : vector<8x1xf32>
    %293 = vector.broadcast %292 : vector<8x1xf32> to vector<8x32xf32>
    %294 = arith.mulf %289, %293 : vector<8x32xf32>
    %295 = vector.broadcast %275 : vector<1x32xf32> to vector<8x32xf32>
    %296 = arith.mulf %294, %295 : vector<8x32xf32>
    %297 = vector.broadcast %276 : vector<1x32xf32> to vector<8x32xf32>
    %298 = arith.addf %296, %297 : vector<8x32xf32>
    %cst_121 = arith.constant dense<0.000000e+00> : vector<8x64xf32>
    %299 = tpu.matmul %298, %177, %cst_121 {dimension_numbers = #tpu.dot_dimension_numbers<[1], [0], [0], [1], [0, 0, 1, 1], [], []>} : vector<8x32xf32>, vector<32x64xf32>, vector<8x64xf32> -> vector<8x64xf32>
    %300 = vector.broadcast %181 : vector<1x64xf32> to vector<8x64xf32>
    %301 = arith.addf %299, %300 : vector<8x64xf32>
    %cst_122 = arith.constant 0.000000e+00 : f32
    %302 = vector.broadcast %cst_122 : f32 to vector<8x64xf32>
    %303 = arith.maximumf %301, %302 : vector<8x64xf32>
    %cst_123 = arith.constant dense<0.000000e+00> : vector<8x32xf32>
    %304 = tpu.matmul %303, %179, %cst_123 {dimension_numbers = #tpu.dot_dimension_numbers<[1], [0], [0], [1], [0, 0, 1, 1], [], []>} : vector<8x64xf32>, vector<64x32xf32>, vector<8x32xf32> -> vector<8x32xf32>
    %305 = vector.extract_strided_slice %183 {offsets = [0, 0], sizes = [1, 32], strides = [1, 1]} : vector<5x32xf32> to vector<1x32xf32>
    %306 = vector.broadcast %305 : vector<1x32xf32> to vector<8x32xf32>
    %307 = arith.addf %304, %306 : vector<8x32xf32>
    %308 = arith.addf %298, %307 : vector<8x32xf32>
    %309 = vector.extract_strided_slice %183 {offsets = [3, 0], sizes = [1, 32], strides = [1, 1]} : vector<5x32xf32> to vector<1x32xf32>
    %310 = vector.extract_strided_slice %183 {offsets = [4, 0], sizes = [1, 32], strides = [1, 1]} : vector<5x32xf32> to vector<1x32xf32>
    %cst_124 = arith.constant dense<0.000000e+00> : vector<8xf32>
    %311 = vector.multi_reduction <add>, %308, %cst_124 [1] : vector<8x32xf32> to vector<8xf32>
    %312 = vector.shape_cast %311 : vector<8xf32> to vector<8x1xf32>
    %cst_125 = arith.constant 3.200000e+01 : f32
    %313 = vector.broadcast %cst_125 : f32 to vector<8x1xf32>
    %314 = arith.divf %312, %313 : vector<8x1xf32>
    %315 = vector.broadcast %314 : vector<8x1xf32> to vector<8x32xf32>
    %316 = arith.subf %308, %315 : vector<8x32xf32>
    %317 = arith.mulf %316, %316 : vector<8x32xf32>
    %cst_126 = arith.constant dense<0.000000e+00> : vector<8xf32>
    %318 = vector.multi_reduction <add>, %317, %cst_126 [1] : vector<8x32xf32> to vector<8xf32>
    %319 = vector.shape_cast %318 : vector<8xf32> to vector<8x1xf32>
    %cst_127 = arith.constant 3.200000e+01 : f32
    %320 = vector.broadcast %cst_127 : f32 to vector<8x1xf32>
    %321 = arith.divf %319, %320 : vector<8x1xf32>
    %322 = vector.broadcast %314 : vector<8x1xf32> to vector<8x32xf32>
    %323 = arith.subf %308, %322 : vector<8x32xf32>
    %cst_128 = arith.constant 9.99999974E-6 : f32
    %324 = vector.broadcast %cst_128 : f32 to vector<8x1xf32>
    %325 = arith.addf %321, %324 : vector<8x1xf32>
    %326 = math.rsqrt %325 : vector<8x1xf32>
    %327 = vector.broadcast %326 : vector<8x1xf32> to vector<8x32xf32>
    %328 = arith.mulf %323, %327 : vector<8x32xf32>
    %329 = vector.broadcast %309 : vector<1x32xf32> to vector<8x32xf32>
    %330 = arith.mulf %328, %329 : vector<8x32xf32>
    %331 = vector.broadcast %310 : vector<1x32xf32> to vector<8x32xf32>
    %332 = arith.addf %330, %331 : vector<8x32xf32>
    %c1_129 = arith.constant 1 : index
    %c0_130 = arith.constant 0 : index
    %333 = vector.load %arg3[%c1_129, %c0_130] : memref<3x32xf32, #tpu.memory_space<vmem>>, vector<1x32xf32>
    %c2 = arith.constant 2 : index
    %c0_131 = arith.constant 0 : index
    %334 = vector.load %arg3[%c2, %c0_131] : memref<3x32xf32, #tpu.memory_space<vmem>>, vector<1x1xf32>
    %335 = vector.broadcast %333 : vector<1x32xf32> to vector<8x32xf32>
    %336 = arith.mulf %332, %335 : vector<8x32xf32>
    %cst_132 = arith.constant dense<0.000000e+00> : vector<8xf32>
    %337 = vector.multi_reduction <add>, %336, %cst_132 [1] : vector<8x32xf32> to vector<8xf32>
    %338 = vector.shape_cast %337 : vector<8xf32> to vector<8x1xf32>
    %339 = vector.broadcast %334 : vector<1x1xf32> to vector<8x1xf32>
    %340 = arith.addf %338, %339 : vector<8x1xf32>
    %cst_133 = arith.constant dense<0xFF800000> : vector<1xf32>
    %341 = vector.multi_reduction <maximumf>, %340, %cst_133 [0] : vector<8x1xf32> to vector<1xf32>
    %342 = vector.shape_cast %341 : vector<1xf32> to vector<1x1xf32>
    %343 = vector.broadcast %342 : vector<1x1xf32> to vector<8x1xf32>
    %344 = arith.subf %340, %343 : vector<8x1xf32>
    %345 = math.exp %344 : vector<8x1xf32>
    %cst_134 = arith.constant dense<0.000000e+00> : vector<1xf32>
    %346 = vector.multi_reduction <add>, %345, %cst_134 [0] : vector<8x1xf32> to vector<1xf32>
    %347 = vector.shape_cast %346 : vector<1xf32> to vector<1x1xf32>
    %348 = tpu.reciprocal %347 {approx = true} : vector<1x1xf32> -> vector<1x1xf32>
    %349 = vector.broadcast %348 : vector<1x1xf32> to vector<8x1xf32>
    %350 = arith.mulf %345, %349 : vector<8x1xf32>
    %351 = vector.broadcast %350 : vector<8x1xf32> to vector<8x32xf32>
    %352 = arith.mulf %351, %332 : vector<8x32xf32>
    %cst_135 = arith.constant dense<0.000000e+00> : vector<32xf32>
    %353 = vector.multi_reduction <add>, %352, %cst_135 [0] : vector<8x32xf32> to vector<32xf32>
    %354 = vector.shape_cast %353 : vector<32xf32> to vector<1x32xf32>
    %c0_136 = arith.constant 0 : index
    %c0_137 = arith.constant 0 : index
    %c0_138 = arith.constant 0 : index
    %355 = vector.load %arg10[%c0_136, %c0_137, %c0_138] : memref<1x9x32xf32, #tpu.memory_space<vmem>>, vector<1x8x32xf32>
    %356 = vector.shape_cast %355 : vector<1x8x32xf32> to vector<8x32xf32>
    %357 = vector.shape_cast %332 : vector<8x32xf32> to vector<1x8x32xf32>
    tpu.vector_store %arg10[%c0_136, %c0_137, %c0_138], %357 {strides = array<i32>} : memref<1x9x32xf32, #tpu.memory_space<vmem>>, vector<1x8x32xf32>,
    %c0_139 = arith.constant 0 : index
    %c8 = arith.constant 8 : index
    %c0_140 = arith.constant 0 : index
    %358 = vector.load %arg10[%c0_139, %c8, %c0_140] : memref<1x9x32xf32, #tpu.memory_space<vmem>>, vector<1x1x32xf32>
    %359 = vector.shape_cast %358 : vector<1x1x32xf32> to vector<1x32xf32>
    %360 = vector.shape_cast %354 : vector<1x32xf32> to vector<1x1x32xf32>
    tpu.vector_store %arg10[%c0_139, %c8, %c0_140], %360 {strides = array<i32>} : memref<1x9x32xf32, #tpu.memory_space<vmem>>, vector<1x1x32xf32>,
    return
  }
  func.func @transform_0(%arg0: i32) -> (i32, i32, i32, i32) {
    %c0_i32 = arith.constant 0 : i32
    %c0_i32_0 = arith.constant 0 : i32
    %c0_i32_1 = arith.constant 0 : i32
    %c0_i32_2 = arith.constant 0 : i32
    return %arg0, %c0_i32, %c0_i32_0, %c0_i32_1 : i32, i32, i32, i32
  }
  func.func @transform_1(%arg0: i32) -> (i32, i32) {
    %c0_i32 = arith.constant 0 : i32
    %c0_i32_0 = arith.constant 0 : i32
    %c0_i32_1 = arith.constant 0 : i32
    return %c0_i32, %c0_i32_0 : i32, i32
  }
  func.func @transform_2(%arg0: i32) -> (i32, i32) {
    %c0_i32 = arith.constant 0 : i32
    %c0_i32_0 = arith.constant 0 : i32
    %c0_i32_1 = arith.constant 0 : i32
    return %c0_i32, %c0_i32_0 : i32, i32
  }
  func.func @transform_3(%arg0: i32) -> (i32, i32, i32) {
    %c0_i32 = arith.constant 0 : i32
    %c0_i32_0 = arith.constant 0 : i32
    %c0_i32_1 = arith.constant 0 : i32
    %c0_i32_2 = arith.constant 0 : i32
    return %c0_i32, %c0_i32_0, %c0_i32_1 : i32, i32, i32
  }
  func.func @transform_4(%arg0: i32) -> (i32, i32, i32) {
    %c0_i32 = arith.constant 0 : i32
    %c0_i32_0 = arith.constant 0 : i32
    %c0_i32_1 = arith.constant 0 : i32
    %c0_i32_2 = arith.constant 0 : i32
    return %c0_i32, %c0_i32_0, %c0_i32_1 : i32, i32, i32
  }
  func.func @transform_5(%arg0: i32) -> (i32, i32, i32) {
    %c0_i32 = arith.constant 0 : i32
    %c0_i32_0 = arith.constant 0 : i32
    %c0_i32_1 = arith.constant 0 : i32
    %c0_i32_2 = arith.constant 0 : i32
    return %c0_i32, %c0_i32_0, %c0_i32_1 : i32, i32, i32
  }
  func.func @transform_6(%arg0: i32) -> (i32, i32, i32) {
    %c0_i32 = arith.constant 0 : i32
    %c0_i32_0 = arith.constant 0 : i32
    %c0_i32_1 = arith.constant 0 : i32
    %c0_i32_2 = arith.constant 0 : i32
    return %c0_i32, %c0_i32_0, %c0_i32_1 : i32, i32, i32
  }
  func.func @transform_7(%arg0: i32) -> (i32, i32, i32) {
    %c0_i32 = arith.constant 0 : i32
    %c0_i32_0 = arith.constant 0 : i32
    %c0_i32_1 = arith.constant 0 : i32
    %c0_i32_2 = arith.constant 0 : i32
    return %c0_i32, %c0_i32_0, %c0_i32_1 : i32, i32, i32
  }
  func.func @transform_8(%arg0: i32) -> (i32, i32, i32) {
    %c0_i32 = arith.constant 0 : i32
    %c0_i32_0 = arith.constant 0 : i32
    %c0_i32_1 = arith.constant 0 : i32
    %c0_i32_2 = arith.constant 0 : i32
    return %c0_i32, %c0_i32_0, %c0_i32_1 : i32, i32, i32
  }
  func.func @transform_9(%arg0: i32) -> (i32, i32, i32) {
    %c0_i32 = arith.constant 0 : i32
    %c0_i32_0 = arith.constant 0 : i32
    %c0_i32_1 = arith.constant 0 : i32
    return %arg0, %c0_i32, %c0_i32_0 : i32, i32, i32
  }
}

</mosaic_0001>

<llo_original>
// kernel: utter_encoder.1
$region0: #{utter_encoder.1}
  #allocation0 [shape = 'u32[]', space=smem, size = 0x4, offset = 0x4, fixed_abs, tag = 'smem constant byte address 0x4 - core index']
  #allocation1 [shape = 'u32[144,128]{1,0:T(1,128)}', space=vmem, size = 0x12000, scoped, tag = 'internal scratch']
  %s0 = inlined_call_operand.hbm [shape: f32[2,8,16,32], index: 0, kind: input, shape index: {}]
  %s1 = inlined_call_operand.hbm [shape: f32[32,32], index: 1, kind: input, shape index: {}]
  %s2 = inlined_call_operand.vmem [shape: f32[3,32], index: 2, kind: input, shape index: {}]
  %s3 = inlined_call_operand.vmem [shape: f32[2,32,96], index: 3, kind: input, shape index: {}]
  %s4 = inlined_call_operand.vmem [shape: f32[2,32,32], index: 4, kind: input, shape index: {}]
  %s5 = inlined_call_operand.vmem [shape: f32[2,32,64], index: 5, kind: input, shape index: {}]
  %s6 = inlined_call_operand.vmem [shape: f32[2,64,32], index: 6, kind: input, shape index: {}]
  %s7 = inlined_call_operand.vmem [shape: f32[2,1,64], index: 7, kind: input, shape index: {}]
  %s8 = inlined_call_operand.vmem [shape: f32[2,5,32], index: 8, kind: input, shape index: {}]
  %s9 = inlined_call_operand.vmem [shape: f32[2,9,32], index: 9, kind: output, shape index: {}]
  %s10 = sld [smem:[#allocation0]]
  $region77: #{utter_encoder.1} parent=0
    _
  %s12 = ssub.s32 1, %s10
  %s13 = scalar_select 0, %s12, %s10
  $region1: #{utter_encoder.1} parent=0
    #allocation2 [shape = 'u8[131072]{0}', space=vmem, size = 0x20000, scoped, tag = 'input window, operand 0']
    #allocation3 [shape = 's32[2]{0}', space=sflag, size = 0x8, scoped, tag = 'scoped memory for utter_encoder.1']
    #allocation4 [shape = 'u8[16384]{0}', space=vmem, size = 0x4000, scoped, tag = 'input window, operand 1, single buffered']
    #allocation5 [shape = 's32[1]{0}', space=sflag, size = 0x4, scoped, tag = 'scoped memory for utter_encoder.1']
    %14 = vsyncpa [#allocation3], 0
    %s15 = scalar_lea.sflag [#allocation3], 1
    %16 = vsyncpa %s15, 0
    %17 = vsyncpa [#allocation5], 0
    loop: start=0, step=1, limit=4
    $region2: #{utter_encoder.1} parent=1 // loop_pre_header
      _
    $region3: #{utter_encoder.1} parent=1 // loop_header
      %s19 = sphi 0, %s23
      %p20 = scmp.ge.s32.totalorder %s19, 4
      %s29 = sphi 0, %s31
      %s32 = sphi 0, %s29
      %s33 = sphi 0, %s32
      %s49 = sphi 0, %s33
      %s53 = sphi 0, %s53
      %s55 = sphi 0, %s53
      %s56 = sphi 0, %s55
      %s70 = sphi 0, %s56
      %s74 = sphi 0, %s74
      %s76 = sphi 0, %s74
      %s77 = sphi 0, %s76
      %s91 = sphi 0, %s77
      %s95 = sphi 0, %s95
      %s97 = sphi 0, %s95
      %s98 = sphi 0, %s97
      %s112 = sphi 0, %s98
      %s116 = sphi 0, %s116
      %s118 = sphi 0, %s116
      %s119 = sphi 0, %s118
      %s133 = sphi 0, %s119
      %s137 = sphi 0, %s137
      %s139 = sphi 0, %s137
      %s140 = sphi 0, %s139
      %s154 = sphi 0, %s140
      %s158 = sphi 0, %s158
      %s160 = sphi 0, %s158
      %s161 = sphi 0, %s160
      %s175 = sphi 0, %s161
      %s179 = sphi 0, %s179
      %s181 = sphi 0, %s179
      %s182 = sphi 0, %s181
      %s196 = sphi 0, %s182
      %s200 = sphi 0, %s200
      %s202 = sphi 0, %s200
      %s203 = sphi 0, %s202
      %s217 = sphi 0, %s203
      %s223 = sphi 0, %s225
      %s226 = sphi 0, %s223
      %s227 = sphi 0, %s226
      %s243 = sphi 0, %s227
    $region4: #{utter_encoder.1} parent=1 // loop_header_branch
      %22 = sbr.rel (%p20) target = $region8
    $region5: #{utter_encoder.1} parent=1 // loop_body
      %s24 = ssub.s32 %s19, 1
      %s25 = ssub.s32 %s19, 2
      %s26 = sadd.s32 %s19, 1
      %s27 = ssub.s32 %s19, %s26
      %p28 = scmp.eq.s32.totalorder %s27, 0
      %s30 = sadd.s32 %s29, 1
      %s31 = scalar_select %p28, %s29, %s30
      %p34 = pneg %p28
      %p35 = scmp.eq.s32.totalorder %s19, 1
      %p36 = por %p34, %p35
      %p37 = scmp.ne.s32.totalorder %s29, %s32
      %p38 = scmp.eq.s32.totalorder %s19, 0
      %p39 = por %p37, %p38
      %p40 = scmp.ne.s32.totalorder %s29, %s32
      %p41 = scmp.eq.s32.totalorder %s24, 1
      %p42 = por %p40, %p41
      %p43 = scmp.ne.s32.totalorder %s32, %s33
      %p44 = scmp.eq.s32.totalorder %s24, 0
      %p45 = por %p43, %p44
      %p46 = scmp.ne.s32.totalorder %s32, %s33
      %p47 = scmp.eq.s32.totalorder %s25, 1
      %p48 = por %p46, %p47
      %p50 = scmp.ne.s32.totalorder %s33, %s49
      %p51 = scmp.eq.s32.totalorder %s25, 0
      %p52 = por %p50, %p51
      %s54 = sadd.s32 %s53, 1
      %p57 = scmp.eq.s32.totalorder %s19, 1
      %p58 = scmp.ne.s32.totalorder %s53, %s55
      %p59 = scmp.eq.s32.totalorder %s19, 0
      %p60 = por %p58, %p59
      %p61 = scmp.ne.s32.totalorder %s53, %s55
      %p62 = scmp.eq.s32.totalorder %s24, 1
      %p63 = por %p61, %p62
      %p64 = scmp.ne.s32.totalorder %s55, %s56
      %p65 = scmp.eq.s32.totalorder %s24, 0
      %p66 = por %p64, %p65
      %p67 = scmp.ne.s32.totalorder %s55, %s56
      %p68 = scmp.eq.s32.totalorder %s25, 1
      %p69 = por %p67, %p68
      %p71 = scmp.ne.s32.totalorder %s56, %s70
      %p72 = scmp.eq.s32.totalorder %s25, 0
      %p73 = por %p71, %p72
      %s75 = sadd.s32 %s74, 1
      %p78 = scmp.eq.s32.totalorder %s19, 1
      %p79 = scmp.ne.s32.totalorder %s74, %s76
      %p80 = scmp.eq.s32.totalorder %s19, 0
      %p81 = por %p79, %p80
      %p82 = scmp.ne.s32.totalorder %s74, %s76
      %p83 = scmp.eq.s32.totalorder %s24, 1
      %p84 = por %p82, %p83
      %p85 = scmp.ne.s32.totalorder %s76, %s77
      %p86 = scmp.eq.s32.totalorder %s24, 0
      %p87 = por %p85, %p86
      %p88 = scmp.ne.s32.totalorder %s76, %s77
      %p89 = scmp.eq.s32.totalorder %s25, 1
      %p90 = por %p88, %p89
      %p92 = scmp.ne.s32.totalorder %s77, %s91
      %p93 = scmp.eq.s32.totalorder %s25, 0
      %p94 = por %p92, %p93
      %s96 = sadd.s32 %s95, 1
      %p99 = scmp.eq.s32.totalorder %s19, 1
      %p100 = scmp.ne.s32.totalorder %s95, %s97
      %p101 = scmp.eq.s32.totalorder %s19, 0
      %p102 = por %p100, %p101
      %p103 = scmp.ne.s32.totalorder %s95, %s97
      %p104 = scmp.eq.s32.totalorder %s24, 1
      %p105 = por %p103, %p104
      %p106 = scmp.ne.s32.totalorder %s97, %s98
      %p107 = scmp.eq.s32.totalorder %s24, 0
      %p108 = por %p106, %p107
      %p109 = scmp.ne.s32.totalorder %s97, %s98
      %p110 = scmp.eq.s32.totalorder %s25, 1
      %p111 = por %p109, %p110
      %p113 = scmp.ne.s32.totalorder %s98, %s112
      %p114 = scmp.eq.s32.totalorder %s25, 0
      %p115 = por %p113, %p114
      %s117 = sadd.s32 %s116, 1
      %p120 = scmp.eq.s32.totalorder %s19, 1
      %p121 = scmp.ne.s32.totalorder %s116, %s118
      %p122 = scmp.eq.s32.totalorder %s19, 0
      %p123 = por %p121, %p122
      %p124 = scmp.ne.s32.totalorder %s116, %s118
      %p125 = scmp.eq.s32.totalorder %s24, 1
      %p126 = por %p124, %p125
      %p127 = scmp.ne.s32.totalorder %s118, %s119
      %p128 = scmp.eq.s32.totalorder %s24, 0
      %p129 = por %p127, %p128
      %p130 = scmp.ne.s32.totalorder %s118, %s119
      %p131 = scmp.eq.s32.totalorder %s25, 1
      %p132 = por %p130, %p131
      %p134 = scmp.ne.s32.totalorder %s119, %s133
      %p135 = scmp.eq.s32.totalorder %s25, 0
      %p136 = por %p134, %p135
      %s138 = sadd.s32 %s137, 1
      %p141 = scmp.eq.s32.totalorder %s19, 1
      %p142 = scmp.ne.s32.totalorder %s137, %s139
      %p143 = scmp.eq.s32.totalorder %s19, 0
      %p144 = por %p142, %p143
      %p145 = scmp.ne.s32.totalorder %s137, %s139
      %p146 = scmp.eq.s32.totalorder %s24, 1
      %p147 = por %p145, %p146
      %p148 = scmp.ne.s32.totalorder %s139, %s140
      %p149 = scmp.eq.s32.totalorder %s24, 0
      %p150 = por %p148, %p149
      %p151 = scmp.ne.s32.totalorder %s139, %s140
      %p152 = scmp.eq.s32.totalorder %s25, 1
      %p153 = por %p151, %p152
      %p155 = scmp.ne.s32.totalorder %s140, %s154
      %p156 = scmp.eq.s32.totalorder %s25, 0
      %p157 = por %p155, %p156
      %s159 = sadd.s32 %s158, 1
      %p162 = scmp.eq.s32.totalorder %s19, 1
      %p163 = scmp.ne.s32.totalorder %s158, %s160
      %p164 = scmp.eq.s32.totalorder %s19, 0
      %p165 = por %p163, %p164
      %p166 = scmp.ne.s32.totalorder %s158, %s160
      %p167 = scmp.eq.s32.totalorder %s24, 1
      %p168 = por %p166, %p167
      %p169 = scmp.ne.s32.totalorder %s160, %s161
      %p170 = scmp.eq.s32.totalorder %s24, 0
      %p171 = por %p169, %p170
      %p172 = scmp.ne.s32.totalorder %s160, %s161
      %p173 = scmp.eq.s32.totalorder %s25, 1
      %p174 = por %p172, %p173
      %p176 = scmp.ne.s32.totalorder %s161, %s175
      %p177 = scmp.eq.s32.totalorder %s25, 0
      %p178 = por %p176, %p177
      %s180 = sadd.s32 %s179, 1
      %p183 = scmp.eq.s32.totalorder %s19, 1
      %p184 = scmp.ne.s32.totalorder %s179, %s181
      %p185 = scmp.eq.s32.totalorder %s19, 0
      %p186 = por %p184, %p185
      %p187 = scmp.ne.s32.totalorder %s179, %s181
      %p188 = scmp.eq.s32.totalorder %s24, 1
      %p189 = por %p187, %p188
      %p190 = scmp.ne.s32.totalorder %s181, %s182
      %p191 = scmp.eq.s32.totalorder %s24, 0
      %p192 = por %p190, %p191
      %p193 = scmp.ne.s32.totalorder %s181, %s182
      %p194 = scmp.eq.s32.totalorder %s25, 1
      %p195 = por %p193, %p194
      %p197 = scmp.ne.s32.totalorder %s182, %s196
      %p198 = scmp.eq.s32.totalorder %s25, 0
      %p199 = por %p197, %p198
      %s201 = sadd.s32 %s200, 1
      %p204 = scmp.eq.s32.totalorder %s19, 1
      %p205 = scmp.ne.s32.totalorder %s200, %s202
      %p206 = scmp.eq.s32.totalorder %s19, 0
      %p207 = por %p205, %p206
      %p208 = scmp.ne.s32.totalorder %s200, %s202
      %p209 = scmp.eq.s32.totalorder %s24, 1
      %p210 = por %p208, %p209
      %p211 = scmp.ne.s32.totalorder %s202, %s203
      %p212 = scmp.eq.s32.totalorder %s24, 0
      %p213 = por %p211, %p212
      %p214 = scmp.ne.s32.totalorder %s202, %s203
      %p215 = scmp.eq.s32.totalorder %s25, 1
      %p216 = por %p214, %p215
      %p218 = scmp.ne.s32.totalorder %s203, %s217
      %p219 = scmp.eq.s32.totalorder %s25, 0
      %p220 = por %p218, %p219
      %s221 = ssub.s32 %s19, %s26
      %p222 = scmp.eq.s32.totalorder %s221, 0
      %s224 = sadd.s32 %s223, 1
      %s225 = scalar_select %p222, %s223, %s224
      %p228 = pneg %p222
      %p229 = scmp.eq.s32.totalorder %s19, 1
      %p230 = por %p228, %p229
      %p231 = scmp.ne.s32.totalorder %s223, %s226
      %p232 = scmp.eq.s32.totalorder %s19, 0
      %p233 = por %p231, %p232
      %p234 = scmp.ne.s32.totalorder %s223, %s226
      %p235 = scmp.eq.s32.totalorder %s24, 1
      %p236 = por %p234, %p235
      %p237 = scmp.ne.s32.totalorder %s226, %s227
      %p238 = scmp.eq.s32.totalorder %s24, 0
      %p239 = por %p237, %p238
      %p240 = scmp.ne.s32.totalorder %s226, %s227
      %p241 = scmp.eq.s32.totalorder %s25, 1
      %p242 = por %p240, %p241
      %p244 = scmp.ne.s32.totalorder %s227, %s243
      %p245 = scmp.eq.s32.totalorder %s25, 0
      %p246 = por %p244, %p245
      %p247 = scmp.le.s32.totalorder 1, %s19
      %p248 = scmp.lt.s32.totalorder %s19, 3
      %p249 = pnand %p247, %p248
      %p250 = pneg %p249
      // Predicated region
      $region9: #{utter_encoder.1} parent=5 // pred_check
        _
      $region10: #{utter_encoder.1} parent=5 // pred_check_branch
        %252 = sbr.rel (%p249) target = $region12
      $region11: #{utter_encoder.1} parent=5 // pred_region
        %s253 = ssub.s32 %s19, 1
        // Predicated region
        $region13: #{utter_encoder.1} parent=11 // pred_check
          %p254 = pneg %p66
        $region14: #{utter_encoder.1} parent=11 // pred_check_branch
          %256 = sbr.rel (%p254) target = $region16
        $region15: #{utter_encoder.1} parent=11 // pred_region
          %s258 = ssub.s32 512, 512
          %259 = vsyncadd [#allocation5], %s258
          %s260 = sshll.u32 [#allocation4], 4
          %s261 = int_to_ptr.vmem [resolvable:$true] %s260
          %266 = dma.hbm_to_vmem [thread:$0]  %s1, 512, %s261, [#allocation5], 128, 128, 8
        $region16: #{utter_encoder.1} parent=11 // pred_fallthru
          _
        // Predicated region
        $region17: #{utter_encoder.1} parent=11 // pred_check
          %p267 = pneg %p87
        $region18: #{utter_encoder.1} parent=11 // pred_check_branch
          %269 = sbr.rel (%p267) target = $region20
        $region19: #{utter_encoder.1} parent=11 // pred_region
          _
        $region20: #{utter_encoder.1} parent=11 // pred_fallthru
          _
        // Predicated region
        $region21: #{utter_encoder.1} parent=11 // pred_check
          %p270 = pneg %p108
        $region22: #{utter_encoder.1} parent=11 // pred_check_branch
          %272 = sbr.rel (%p270) target = $region24
        $region23: #{utter_encoder.1} parent=11 // pred_region
          _
        $region24: #{utter_encoder.1} parent=11 // pred_fallthru
          _
        // Predicated region
        $region25: #{utter_encoder.1} parent=11 // pred_check
          %p273 = pneg %p129
        $region26: #{utter_encoder.1} parent=11 // pred_check_branch
          %275 = sbr.rel (%p273) target = $region28
        $region27: #{utter_encoder.1} parent=11 // pred_region
          _
        $region28: #{utter_encoder.1} parent=11 // pred_fallthru
          _
        // Predicated region
        $region29: #{utter_encoder.1} parent=11 // pred_check
          %p276 = pneg %p150
        $region30: #{utter_encoder.1} parent=11 // pred_check_branch
          %278 = sbr.rel (%p276) target = $region32
        $region31: #{utter_encoder.1} parent=11 // pred_region
          _
        $region32: #{utter_encoder.1} parent=11 // pred_fallthru
          _
        // Predicated region
        $region33: #{utter_encoder.1} parent=11 // pred_check
          %p279 = pneg %p171
        $region34: #{utter_encoder.1} parent=11 // pred_check_branch
          %281 = sbr.rel (%p279) target = $region36
        $region35: #{utter_encoder.1} parent=11 // pred_region
          _
        $region36: #{utter_encoder.1} parent=11 // pred_fallthru
          _
        // Predicated region
        $region37: #{utter_encoder.1} parent=11 // pred_check
          %p282 = pneg %p192
        $region38: #{utter_encoder.1} parent=11 // pred_check_branch
          %284 = sbr.rel (%p282) target = $region40
        $region39: #{utter_encoder.1} parent=11 // pred_region
          _
        $region40: #{utter_encoder.1} parent=11 // pred_fallthru
          _
        // Predicated region
        $region41: #{utter_encoder.1} parent=11 // pred_check
          %p285 = pneg %p213
        $region42: #{utter_encoder.1} parent=11 // pred_check_branch
          %287 = sbr.rel (%p285) target = $region44
        $region43: #{utter_encoder.1} parent=11 // pred_region
          _
        $region44: #{utter_encoder.1} parent=11 // pred_fallthru
          _
      $region12: #{utter_encoder.1} parent=5 // pred_fallthru
        _
      %p288 = scmp.lt.s32.totalorder %s19, 2
      // Predicated region
      $region45: #{utter_encoder.1} parent=5 // pred_check
        %p289 = pneg %p288
      $region46: #{utter_encoder.1} parent=5 // pred_check_branch
        %291 = sbr.rel (%p289) target = $region48
      $region47: #{utter_encoder.1} parent=5 // pred_region
        // Predicated region
        $region49: #{utter_encoder.1} parent=47 // pred_check
          %p292 = pneg %p39
        $region50: #{utter_encoder.1} parent=47 // pred_check_branch
          %294 = sbr.rel (%p292) target = $region52
        $region51: #{utter_encoder.1} parent=47 // pred_region
          %s295 = sand.u32 %s29, 1
          %s296 = scalar_lea.sflag [#allocation3], %s295
          %s297 = sand.u32 %s29, 1
          %s298 = smul.addr %s297, 128
          %s299 = scalar_lea.vmem [#allocation2], %s298
          %s301 = ssub.s32 2048, 2048
          %302 = vsyncadd %s296, %s301
          %s303 = smul.addr %s19, 16
          %s304 = smul.addr %s303, 128
          %s305 = scalar_lea.hbm %s0, %s304
          %s306 = sshll.u32 %s299, 4
          %s307 = int_to_ptr.vmem [resolvable:$true] %s306
          %312 = dma.hbm_to_vmem [thread:$0]  %s305, 2048, %s307, %s296, 128, 128, 8
        $region52: #{utter_encoder.1} parent=47 // pred_fallthru
          _
      $region48: #{utter_encoder.1} parent=5 // pred_fallthru
        _
      %p313 = scmp.le.s32.totalorder 1, %s19
      %p314 = scmp.lt.s32.totalorder %s19, 3
      %p315 = pnand %p313, %p314
      %p316 = pneg %p315
      // Predicated region
      $region53: #{utter_encoder.1} parent=5 // pred_check
        _
      $region54: #{utter_encoder.1} parent=5 // pred_check_branch
        %318 = sbr.rel (%p315) target = $region56
      $region55: #{utter_encoder.1} parent=5 // pred_region
        %s319 = ssub.s32 %s19, 1
        %s320 = sand.u32 %s32, 1
        %s321 = scalar_lea.sflag [#allocation3], %s320
        %s322 = sand.u32 %s32, 1
        %s323 = smul.addr %s322, 128
        %s324 = scalar_lea.vmem [#allocation2], %s323
        // Predicated region
        $region57: #{utter_encoder.1} parent=55 // pred_check
          %p325 = pneg %p45
        $region58: #{utter_encoder.1} parent=55 // pred_check_branch
          %327 = sbr.rel (%p325) target = $region60
        $region59: #{utter_encoder.1} parent=55 // pred_region
          %328 = dma.done %s321, 2048
        $region60: #{utter_encoder.1} parent=55 // pred_fallthru
          _
        // Predicated region
        $region61: #{utter_encoder.1} parent=55 // pred_check
          %p329 = pneg %p66
        $region62: #{utter_encoder.1} parent=55 // pred_check_branch
          %331 = sbr.rel (%p329) target = $region64
        $region63: #{utter_encoder.1} parent=55 // pred_region
          %332 = dma.done [#allocation5], 512
        $region64: #{utter_encoder.1} parent=55 // pred_fallthru
          _
        %s333 = sand.u32 %s32, 1
        %s334 = scalar_lea.sflag [#allocation3], %s333
        %s335 = sand.u32 %s32, 1
        %s336 = smul.addr %s335, 128
        %s337 = scalar_lea.vmem [#allocation2], %s336
        %p338 = pneg %p45
        %p339 = pneg %p42
        %p340 = pneg %p66
        %p341 = pneg %p63
        %p342 = pneg %p87
        %p343 = pneg %p84
        %p344 = pneg %p108
        %p345 = pneg %p105
        %p346 = pneg %p129
        %p347 = pneg %p126
        %p348 = pneg %p150
        %p349 = pneg %p147
        %p350 = pneg %p171
        %p351 = pneg %p168
        %p352 = pneg %p192
        %p353 = pneg %p189
        %p354 = pneg %p213
        %p355 = pneg %p210
        %p356 = pneg %p239
        %p357 = pneg %p236
        %p358 = scmp.lt.s32.totalorder %s24, 1
        %s359 = scalar_select %p358, %s24, 1
        %s360 = smul.addr %s359, 2
        %s361 = smul.addr %s360, 8
        %s362 = scalar_lea.vmem %s9, %s361
        %p363 = scmp.lt.s32.totalorder %s24, 1
        %s364 = scalar_select %p363, %s24, 1
        %s365 = smul.addr %s364, 2
        %s366 = smul.addr %s365, 8
        %s367 = scalar_lea.vmem %s9, %s366
        %v368 = vld [vmem:[%s324] sm:$0xff]
        %v369 = vld [vmem:[%s324 + $0x8] sm:$0xff]
        %v370 = vld [vmem:[%s324 + $0x10] sm:$0xff]
        %v371 = vld [vmem:[%s324 + $0x18] sm:$0xff]
        %v372 = vld [vmem:[%s324 + $0x20] sm:$0xff]
        %v373 = vld [vmem:[%s324 + $0x28] sm:$0xff]
        %v374 = vld [vmem:[%s324 + $0x30] sm:$0xff]
        %v375 = vld [vmem:[%s324 + $0x38] sm:$0xff]
        %v376 = vld [vmem:[%s324 + $0x40] sm:$0xff]
        %v377 = vld [vmem:[%s324 + $0x48] sm:$0xff]
        %v378 = vld [vmem:[%s324 + $0x50] sm:$0xff]
        %v379 = vld [vmem:[%s324 + $0x58] sm:$0xff]
        %v380 = vld [vmem:[%s324 + $0x60] sm:$0xff]
        %v381 = vld [vmem:[%s324 + $0x68] sm:$0xff]
        %v382 = vld [vmem:[%s324 + $0x70] sm:$0xff]
        %v383 = vld [vmem:[%s324 + $0x78] sm:$0xff]
        %vm384 = vcmask 261120
        %v385 = vsel %vm384, %v368, -inf
        %v386 = vsel %vm384, %v369, -inf
        %v387 = vmax.f32 %v385, %v386
        %v388 = vrot.slane %v387, 4
        %v389 = vmax.f32 %v387, %v388
        %v390 = vrot.slane %v389, 2
        %v391 = vmax.f32 %v389, %v390
        %v392 = vrot.slane %v391, 1
        %v393 = vmax.f32 %v391, %v392
        %v394 = vsel %vm384, %v370, -inf
        %v395 = vsel %vm384, %v371, -inf
        %v396 = vmax.f32 %v394, %v395
        %v397 = vrot.slane %v396, 4
        %v398 = vmax.f32 %v396, %v397
        %v399 = vrot.slane %v398, 2
        %v400 = vmax.f32 %v398, %v399
        %v401 = vrot.slane %v400, 1
        %v402 = vmax.f32 %v400, %v401
        %v403 = vsel %vm384, %v372, -inf
        %v404 = vsel %vm384, %v373, -inf
        %v405 = vmax.f32 %v403, %v404
        %v406 = vrot.slane %v405, 4
        %v407 = vmax.f32 %v405, %v406
        %v408 = vrot.slane %v407, 2
        %v409 = vmax.f32 %v407, %v408
        %v410 = vrot.slane %v409, 1
        %v411 = vmax.f32 %v409, %v410
        %v412 = vsel %vm384, %v374, -inf
        %v413 = vsel %vm384, %v375, -inf
        %v414 = vmax.f32 %v412, %v413
        %v415 = vrot.slane %v414, 4
        %v416 = vmax.f32 %v414, %v415
        %v417 = vrot.slane %v416, 2
        %v418 = vmax.f32 %v416, %v417
        %v419 = vrot.slane %v418, 1
        %v420 = vmax.f32 %v418, %v419
        %v421 = vsel %vm384, %v376, -inf
        %v422 = vsel %vm384, %v377, -inf
        %v423 = vmax.f32 %v421, %v422
        %v424 = vrot.slane %v423, 4
        %v425 = vmax.f32 %v423, %v424
        %v426 = vrot.slane %v425, 2
        %v427 = vmax.f32 %v425, %v426
        %v428 = vrot.slane %v427, 1
        %v429 = vmax.f32 %v427, %v428
        %v430 = vsel %vm384, %v378, -inf
        %v431 = vsel %vm384, %v379, -inf
        %v432 = vmax.f32 %v430, %v431
        %v433 = vrot.slane %v432, 4
        %v434 = vmax.f32 %v432, %v433
        %v435 = vrot.slane %v434, 2
        %v436 = vmax.f32 %v434, %v435
        %v437 = vrot.slane %v436, 1
        %v438 = vmax.f32 %v436, %v437
        %v439 = vsel %vm384, %v380, -inf
        %v440 = vsel %vm384, %v381, -inf
        %v441 = vmax.f32 %v439, %v440
        %v442 = vrot.slane %v441, 4
        %v443 = vmax.f32 %v441, %v442
        %v444 = vrot.slane %v443, 2
        %v445 = vmax.f32 %v443, %v444
        %v446 = vrot.slane %v445, 1
        %v447 = vmax.f32 %v445, %v446
        %v448 = vsel %vm384, %v382, -inf
        %v449 = vsel %vm384, %v383, -inf
        %v450 = vmax.f32 %v448, %v449
        %v451 = vrot.slane %v450, 4
        %v452 = vmax.f32 %v450, %v451
        %v453 = vrot.slane %v452, 2
        %v454 = vmax.f32 %v452, %v453
        %v455 = vrot.slane %v454, 1
        %v456 = vmax.f32 %v454, %v455
        %v457 = vld [vmem:[#allocation4] sm:$0xff]
        %v458 = vld [vmem:[#allocation4 + $0x8] sm:$0xff]
        %v459 = vld [vmem:[#allocation4 + $0x10] sm:$0xff]
        %v460 = vld [vmem:[#allocation4 + $0x18] sm:$0xff]
        %v461 = vld [vmem:[%s2] sm:$0x1]
        %v462 = vlaneseq
        %v463 = vshrl.u32 %v462, 7
        %v464 = vsub.s32 0, %v463
        %v465 = vrot.slane %v461, %v464
        %vm474 = vcmask 1041409
        %v475 = vsel %vm474, %v402, %v393
        %vm476 = vcmask 1042434
        %v477 = vsel %vm476, %v411, %v475
        %vm478 = vcmask 1043459
        %v479 = vsel %vm478, %v420, %v477
        %vm480 = vcmask 1044484
        %v481 = vsel %vm480, %v429, %v479
        %vm482 = vcmask 1045509
        %v483 = vsel %vm482, %v438, %v481
        %vm484 = vcmask 1046534
        %v485 = vsel %vm484, %v447, %v483
        %vm486 = vcmask 1047559
        %v487 = vsel %vm486, %v456, %v485
        %v488 = vsel %vm384, %v487, 0
        %490 = vmatprep.subr.mxu0 0.0
        %491 = vmatpush1.msra.mxu0 0.0
        %492 = vmatprep.subr.mxu0 0.0
        %493 = vmatpush1.msra.mxu0 0.0
        %494 = vmatprep.subr.mxu0 0.0
        %495 = vmatpush1.msra.mxu0 0.0
        %496 = vmatprep.subr.mxu0 0.0
        %497 = vmatpush1.msra.mxu0 0.0
        %498 = vmatprep.subr.mxu0 0.0
        %499 = vmatpush1.msra.mxu0 0.0
        %500 = vmatprep.subr.mxu0 0.0
        %501 = vmatpush1.msra.mxu0 0.0
        %502 = vmatprep.subr.mxu0 0.0
        %503 = vmatpush1.msra.mxu0 0.0
        %504 = vmatprep.subr.mxu0 0.0
        %505 = vmatpush1.msra.mxu0 0.0
        %506 = vmatprep.subr.mxu0 0.0
        %507 = vmatpush1.msra.mxu0 0.0
        %508 = vmatprep.subr.mxu0 0.0
        %509 = vmatpush1.msra.mxu0 0.0
        %510 = vmatprep.subr.mxu0 0.0
        %511 = vmatpush1.msra.mxu0 0.0
        %512 = vmatprep.subr.mxu0 0.0
        %513 = vmatpush1.msra.mxu0 0.0
        %514 = vmatprep.subr.mxu0 0.0
        %515 = vmatpush1.msra.mxu0 %v460
        %516 = vmatprep.subr.mxu0 0.0
        %517 = vmatpush1.msra.mxu0 %v459
        %518 = vmatprep.subr.mxu0 0.0
        %519 = vmatpush1.msra.mxu0 %v458
        %520 = vmatprep.subr.mxu0 0.0
        %521 = vmatpush1.msra.mxu0 %v457
        %522 = vmatprep.subr.mxu0 0.0
        %523 = vmatpush2.msra.mxu0 0.0
        %524 = vmatprep.subr.mxu0 0.0
        %525 = vmatpush2.msra.mxu0 0.0
        %526 = vmatprep.subr.mxu0 0.0
        %527 = vmatpush2.msra.mxu0 0.0
        %528 = vmatprep.subr.mxu0 0.0
        %529 = vmatpush2.msra.mxu0 0.0
        %530 = vmatprep.subr.mxu0 0.0
        %531 = vmatpush2.msra.mxu0 0.0
        %532 = vmatprep.subr.mxu0 0.0
        %533 = vmatpush2.msra.mxu0 0.0
        %534 = vmatprep.subr.mxu0 0.0
        %535 = vmatpush2.msra.mxu0 0.0
        %536 = vmatprep.subr.mxu0 0.0
        %537 = vmatpush2.msra.mxu0 0.0
        %538 = vmatprep.subr.mxu0 0.0
        %539 = vmatpush2.msra.mxu0 0.0
        %540 = vmatprep.subr.mxu0 0.0
        %541 = vmatpush2.msra.mxu0 0.0
        %542 = vmatprep.subr.mxu0 0.0
        %543 = vmatpush2.msra.mxu0 0.0
        %544 = vmatprep.subr.mxu0 0.0
        %545 = vmatpush2.msra.mxu0 0.0
        %546 = vmatprep.subr.mxu0 0.0
        %547 = vmatpush2.msra.mxu0 0.0
        %548 = vmatprep.subr.mxu0 0.0
        %549 = vmatpush2.msra.mxu0 0.0
        %550 = vmatprep.subr.mxu0 0.0
        %551 = vmatpush2.msra.mxu0 0.0
        %552 = vmatprep.subr.mxu0 0.0
        %553 = vmatpush2.msra.mxu0 0.0
        %554 = vmatprep.mubr.f32.mxu0 0.0
        %555 = vmatmul.mubr.f32.gmra.mxu0 %v488
        %v556 = vpop.f32.mrf.mxu0
        %v557 = vadd.f32 %v465, %v556
        %v558 = vpop.f32.mrf.mxu0
        %559 = vdwg.mxu0
        %v560 = vlaneseq
        %v561 = vshrl.u32 %v560, 7
        %v562 = vlaneseq
        %v563 = vand.u32 %v562, 127
        %vm564 = vcmp.gt.s32.totalorder %v563, %v561
        %v565 = vld [vmem:[%s3] sm:$0xff]
        %v566 = vld [vmem:[%s3 + $0x8] sm:$0xff]
        %v567 = vld [vmem:[%s3 + $0x10] sm:$0xff]
        %v568 = vld [vmem:[%s3 + $0x18] sm:$0xff]
        %v569 = vld [vmem:[%s4] sm:$0xff]
        %v570 = vld [vmem:[%s4 + $0x8] sm:$0xff]
        %v571 = vld [vmem:[%s4 + $0x10] sm:$0xff]
        %v572 = vld [vmem:[%s4 + $0x18] sm:$0xff]
        %v573 = vld [vmem:[%s5] sm:$0xff]
        %v574 = vld [vmem:[%s5 + $0x8] sm:$0xff]
        %v575 = vld [vmem:[%s5 + $0x10] sm:$0xff]
        %v576 = vld [vmem:[%s5 + $0x18] sm:$0xff]
        %v577 = vld [vmem:[%s6] sm:$0xff]
        %v578 = vld [vmem:[%s6 + $0x8] sm:$0xff]
        %v579 = vld [vmem:[%s6 + $0x10] sm:$0xff]
        %v580 = vld [vmem:[%s6 + $0x18] sm:$0xff]
        %v581 = vld [vmem:[%s6 + $0x20] sm:$0xff]
        %v582 = vld [vmem:[%s6 + $0x28] sm:$0xff]
        %v583 = vld [vmem:[%s6 + $0x30] sm:$0xff]
        %v584 = vld [vmem:[%s6 + $0x38] sm:$0xff]
        %v585 = vld [vmem:[%s7] sm:$0x1]
        %v586 = vld [vmem:[%s8] sm:$0x1f]
        %v588 = vsel %vm384, %v557, 0
        %590 = vmatprep.subr.mxu0 0.0
        %591 = vmatpush1.msra.mxu0 0.0
        %592 = vmatprep.subr.mxu0 0.0
        %593 = vmatpush1.msra.mxu0 0.0
        %594 = vmatprep.subr.mxu0 0.0
        %595 = vmatpush1.msra.mxu0 0.0
        %596 = vmatprep.subr.mxu0 0.0
        %597 = vmatpush1.msra.mxu0 0.0
        %598 = vmatprep.subr.mxu0 0.0
        %599 = vmatpush1.msra.mxu0 0.0
        %600 = vmatprep.subr.mxu0 0.0
        %601 = vmatpush1.msra.mxu0 0.0
        %602 = vmatprep.subr.mxu0 0.0
        %603 = vmatpush1.msra.mxu0 0.0
        %604 = vmatprep.subr.mxu0 0.0
        %605 = vmatpush1.msra.mxu0 0.0
        %606 = vmatprep.subr.mxu0 0.0
        %607 = vmatpush1.msra.mxu0 0.0
        %608 = vmatprep.subr.mxu0 0.0
        %609 = vmatpush1.msra.mxu0 0.0
        %610 = vmatprep.subr.mxu0 0.0
        %611 = vmatpush1.msra.mxu0 0.0
        %612 = vmatprep.subr.mxu0 0.0
        %613 = vmatpush1.msra.mxu0 0.0
        %614 = vmatprep.subr.mxu0 0.0
        %615 = vmatpush1.msra.mxu0 %v568
        %616 = vmatprep.subr.mxu0 0.0
        %617 = vmatpush1.msra.mxu0 %v567
        %618 = vmatprep.subr.mxu0 0.0
        %619 = vmatpush1.msra.mxu0 %v566
        %620 = vmatprep.subr.mxu0 0.0
        %621 = vmatpush1.msra.mxu0 %v565
        %622 = vmatprep.subr.mxu0 0.0
        %623 = vmatpush2.msra.mxu0 0.0
        %624 = vmatprep.subr.mxu0 0.0
        %625 = vmatpush2.msra.mxu0 0.0
        %626 = vmatprep.subr.mxu0 0.0
        %627 = vmatpush2.msra.mxu0 0.0
        %628 = vmatprep.subr.mxu0 0.0
        %629 = vmatpush2.msra.mxu0 0.0
        %630 = vmatprep.subr.mxu0 0.0
        %631 = vmatpush2.msra.mxu0 0.0
        %632 = vmatprep.subr.mxu0 0.0
        %633 = vmatpush2.msra.mxu0 0.0
        %634 = vmatprep.subr.mxu0 0.0
        %635 = vmatpush2.msra.mxu0 0.0
        %636 = vmatprep.subr.mxu0 0.0
        %637 = vmatpush2.msra.mxu0 0.0
        %638 = vmatprep.subr.mxu0 0.0
        %639 = vmatpush2.msra.mxu0 0.0
        %640 = vmatprep.subr.mxu0 0.0
        %641 = vmatpush2.msra.mxu0 0.0
        %642 = vmatprep.subr.mxu0 0.0
        %643 = vmatpush2.msra.mxu0 0.0
        %644 = vmatprep.subr.mxu0 0.0
        %645 = vmatpush2.msra.mxu0 0.0
        %646 = vmatprep.subr.mxu0 0.0
        %647 = vmatpush2.msra.mxu0 0.0
        %648 = vmatprep.subr.mxu0 0.0
        %649 = vmatpush2.msra.mxu0 0.0
        %650 = vmatprep.subr.mxu0 0.0
        %651 = vmatpush2.msra.mxu0 0.0
        %652 = vmatprep.subr.mxu0 0.0
        %653 = vmatpush2.msra.mxu0 0.0
        %654 = vmatprep.mubr.f32.mxu0 0.0
        %655 = vmatmul.mubr.f32.gmra.mxu0 %v588
        %v656 = vpop.f32.mrf.mxu0
        %v657 = vadd.f32 0.0, %v656
        %v658 = vpop.f32.mrf.mxu0
        %659 = vdwg.mxu0
        %661 = vrot.lane.b32.xlu0 %v657, 96
        %v662 = vpop.permute.xlu0 %661
        %vm663 = vcmask 64512
        %v664 = vsel %vm663, %v657, 0
        %v666 = vsel %vm663, %v662, 0
        %668 = vmatprep.subr.mxu0 0.0
        %669 = vmatpush1.xpose.msra.mxu0 0.0
        %670 = vmatprep.subr.mxu0 0.0
        %671 = vmatpush1.xpose.msra.mxu0 0.0
        %672 = vmatprep.subr.mxu0 0.0
        %673 = vmatpush1.xpose.msra.mxu0 0.0
        %674 = vmatprep.subr.mxu0 0.0
        %675 = vmatpush1.xpose.msra.mxu0 0.0
        %676 = vmatprep.subr.mxu0 0.0
        %677 = vmatpush1.xpose.msra.mxu0 0.0
        %678 = vmatprep.subr.mxu0 0.0
        %679 = vmatpush1.xpose.msra.mxu0 0.0
        %680 = vmatprep.subr.mxu0 0.0
        %681 = vmatpush1.xpose.msra.mxu0 0.0
        %682 = vmatprep.subr.mxu0 0.0
        %683 = vmatpush1.xpose.msra.mxu0 0.0
        %684 = vmatprep.subr.mxu0 0.0
        %685 = vmatpush1.xpose.msra.mxu0 0.0
        %686 = vmatprep.subr.mxu0 0.0
        %687 = vmatpush1.xpose.msra.mxu0 0.0
        %688 = vmatprep.subr.mxu0 0.0
        %689 = vmatpush1.xpose.msra.mxu0 0.0
        %690 = vmatprep.subr.mxu0 0.0
        %691 = vmatpush1.xpose.msra.mxu0 0.0
        %692 = vmatprep.subr.mxu0 0.0
        %693 = vmatpush1.xpose.msra.mxu0 0.0
        %694 = vmatprep.subr.mxu0 0.0
        %695 = vmatpush1.xpose.msra.mxu0 0.0
        %696 = vmatprep.subr.mxu0 0.0
        %697 = vmatpush1.xpose.msra.mxu0 0.0
        %698 = vmatprep.subr.mxu0 0.0
        %699 = vmatpush1.xpose.msra.mxu0 %v666
        %700 = vmatprep.subr.mxu0 0.0
        %701 = vmatpush2.xpose.msra.mxu0 0.0
        %702 = vmatprep.subr.mxu0 0.0
        %703 = vmatpush2.xpose.msra.mxu0 0.0
        %704 = vmatprep.subr.mxu0 0.0
        %705 = vmatpush2.xpose.msra.mxu0 0.0
        %706 = vmatprep.subr.mxu0 0.0
        %707 = vmatpush2.xpose.msra.mxu0 0.0
        %708 = vmatprep.subr.mxu0 0.0
        %709 = vmatpush2.xpose.msra.mxu0 0.0
        %710 = vmatprep.subr.mxu0 0.0
        %711 = vmatpush2.xpose.msra.mxu0 0.0
        %712 = vmatprep.subr.mxu0 0.0
        %713 = vmatpush2.xpose.msra.mxu0 0.0
        %714 = vmatprep.subr.mxu0 0.0
        %715 = vmatpush2.xpose.msra.mxu0 0.0
        %716 = vmatprep.subr.mxu0 0.0
        %717 = vmatpush2.xpose.msra.mxu0 0.0
        %718 = vmatprep.subr.mxu0 0.0
        %719 = vmatpush2.xpose.msra.mxu0 0.0
        %720 = vmatprep.subr.mxu0 0.0
        %721 = vmatpush2.xpose.msra.mxu0 0.0
        %722 = vmatprep.subr.mxu0 0.0
        %723 = vmatpush2.xpose.msra.mxu0 0.0
        %724 = vmatprep.subr.mxu0 0.0
        %725 = vmatpush2.xpose.msra.mxu0 0.0
        %726 = vmatprep.subr.mxu0 0.0
        %727 = vmatpush2.xpose.msra.mxu0 0.0
        %728 = vmatprep.subr.mxu0 0.0
        %729 = vmatpush2.xpose.msra.mxu0 0.0
        %730 = vmatprep.subr.mxu0 0.0
        %731 = vmatpush2.xpose.msra.mxu0 0.0
        %732 = vmatprep.mubr.f32.mxu0 0.0
        %733 = vmatmul.mubr.f32.gmra.mxu0 %v664
        %v734 = vpop.f32.mrf.mxu0
        %v735 = vadd.f32 0.0, %v734
        %v736 = vpop.f32.mrf.mxu0
        %737 = vdwg.mxu0
        %v738 = vmul.f32 %v735, 0.35355338
        %v739 = vsel %vm564, -1e+30, %v738
        %v740 = vsel %vm663, %v739, -inf
        %741 = vmax.xlane.f32.xlu0 %v740
        %v742 = vpop.xlane.xlu0 %741
        %v743 = vsub.f32 %v739, %v742
        %v744 = vmul.f32 %v743, 1.442695
        %v745 = vpow.pop %v744
        %v746 = vsel %vm663, %v745, 0.0
        %747 = vadd.xlane.f32.xlu0 %v746
        %v748 = vpop.xlane.xlu0 %747
        %v749 = vrcp.pop %v748
        %v750 = vmul.f32 %v745, %v749
        %751 = vrot.lane.b32.xlu0 %v657, 64
        %v752 = vpop.permute.xlu0 %751
        %v755 = vsel %vm663, %v750, 0
        %757 = vmatprep.subr.mxu0 0.0
        %758 = vmatpush1.msra.mxu0 0.0
        %759 = vmatprep.subr.mxu0 0.0
        %760 = vmatpush1.msra.mxu0 0.0
        %761 = vmatprep.subr.mxu0 0.0
        %762 = vmatpush1.msra.mxu0 0.0
        %763 = vmatprep.subr.mxu0 0.0
        %764 = vmatpush1.msra.mxu0 0.0
        %765 = vmatprep.subr.mxu0 0.0
        %766 = vmatpush1.msra.mxu0 0.0
        %767 = vmatprep.subr.mxu0 0.0
        %768 = vmatpush1.msra.mxu0 0.0
        %769 = vmatprep.subr.mxu0 0.0
        %770 = vmatpush1.msra.mxu0 0.0
        %771 = vmatprep.subr.mxu0 0.0
        %772 = vmatpush1.msra.mxu0 0.0
        %773 = vmatprep.subr.mxu0 0.0
        %774 = vmatpush1.msra.mxu0 0.0
        %775 = vmatprep.subr.mxu0 0.0
        %776 = vmatpush1.msra.mxu0 0.0
        %777 = vmatprep.subr.mxu0 0.0
        %778 = vmatpush1.msra.mxu0 0.0
        %779 = vmatprep.subr.mxu0 0.0
        %780 = vmatpush1.msra.mxu0 0.0
        %781 = vmatprep.subr.mxu0 0.0
        %782 = vmatpush1.msra.mxu0 0.0
        %783 = vmatprep.subr.mxu0 0.0
        %784 = vmatpush1.msra.mxu0 0.0
        %785 = vmatprep.subr.mxu0 0.0
        %786 = vmatpush1.msra.mxu0 0.0
        %787 = vmatprep.subr.mxu0 0.0
        %788 = vmatpush1.msra.mxu0 %v752
        %789 = vmatprep.subr.mxu0 0.0
        %790 = vmatpush2.msra.mxu0 0.0
        %791 = vmatprep.subr.mxu0 0.0
        %792 = vmatpush2.msra.mxu0 0.0
        %793 = vmatprep.subr.mxu0 0.0
        %794 = vmatpush2.msra.mxu0 0.0
        %795 = vmatprep.subr.mxu0 0.0
        %796 = vmatpush2.msra.mxu0 0.0
        %797 = vmatprep.subr.mxu0 0.0
        %798 = vmatpush2.msra.mxu0 0.0
        %799 = vmatprep.subr.mxu0 0.0
        %800 = vmatpush2.msra.mxu0 0.0
        %801 = vmatprep.subr.mxu0 0.0
        %802 = vmatpush2.msra.mxu0 0.0
        %803 = vmatprep.subr.mxu0 0.0
        %804 = vmatpush2.msra.mxu0 0.0
        %805 = vmatprep.subr.mxu0 0.0
        %806 = vmatpush2.msra.mxu0 0.0
        %807 = vmatprep.subr.mxu0 0.0
        %808 = vmatpush2.msra.mxu0 0.0
        %809 = vmatprep.subr.mxu0 0.0
        %810 = vmatpush2.msra.mxu0 0.0
        %811 = vmatprep.subr.mxu0 0.0
        %812 = vmatpush2.msra.mxu0 0.0
        %813 = vmatprep.subr.mxu0 0.0
        %814 = vmatpush2.msra.mxu0 0.0
        %815 = vmatprep.subr.mxu0 0.0
        %816 = vmatpush2.msra.mxu0 0.0
        %817 = vmatprep.subr.mxu0 0.0
        %818 = vmatpush2.msra.mxu0 0.0
        %819 = vmatprep.subr.mxu0 0.0
        %820 = vmatpush2.msra.mxu0 0.0
        %821 = vmatprep.mubr.f32.mxu0 0.0
        %822 = vmatmul.mubr.f32.gmra.mxu0 %v755
        %v823 = vpop.f32.mrf.mxu0
        %v824 = vadd.f32 0.0, %v823
        %v825 = vpop.f32.mrf.mxu0
        %826 = vdwg.mxu0
        %827 = vrot.lane.b32.xlu0 %v657, 120
        %v828 = vpop.permute.xlu0 %827
        %829 = vrot.lane.b32.xlu0 %v657, 88
        %v830 = vpop.permute.xlu0 %829
        %v831 = vsel %vm663, %v828, 0
        %v833 = vsel %vm663, %v830, 0
        %835 = vmatprep.subr.mxu0 0.0
        %836 = vmatpush1.xpose.msra.mxu0 0.0
        %837 = vmatprep.subr.mxu0 0.0
        %838 = vmatpush1.xpose.msra.mxu0 0.0
        %839 = vmatprep.subr.mxu0 0.0
        %840 = vmatpush1.xpose.msra.mxu0 0.0
        %841 = vmatprep.subr.mxu0 0.0
        %842 = vmatpush1.xpose.msra.mxu0 0.0
        %843 = vmatprep.subr.mxu0 0.0
        %844 = vmatpush1.xpose.msra.mxu0 0.0
        %845 = vmatprep.subr.mxu0 0.0
        %846 = vmatpush1.xpose.msra.mxu0 0.0
        %847 = vmatprep.subr.mxu0 0.0
        %848 = vmatpush1.xpose.msra.mxu0 0.0
        %849 = vmatprep.subr.mxu0 0.0
        %850 = vmatpush1.xpose.msra.mxu0 0.0
        %851 = vmatprep.subr.mxu0 0.0
        %852 = vmatpush1.xpose.msra.mxu0 0.0
        %853 = vmatprep.subr.mxu0 0.0
        %854 = vmatpush1.xpose.msra.mxu0 0.0
        %855 = vmatprep.subr.mxu0 0.0
        %856 = vmatpush1.xpose.msra.mxu0 0.0
        %857 = vmatprep.subr.mxu0 0.0
        %858 = vmatpush1.xpose.msra.mxu0 0.0
        %859 = vmatprep.subr.mxu0 0.0
        %860 = vmatpush1.xpose.msra.mxu0 0.0
        %861 = vmatprep.subr.mxu0 0.0
        %862 = vmatpush1.xpose.msra.mxu0 0.0
        %863 = vmatprep.subr.mxu0 0.0
        %864 = vmatpush1.xpose.msra.mxu0 0.0
        %865 = vmatprep.subr.mxu0 0.0
        %866 = vmatpush1.xpose.msra.mxu0 %v833
        %867 = vmatprep.subr.mxu0 0.0
        %868 = vmatpush2.xpose.msra.mxu0 0.0
        %869 = vmatprep.subr.mxu0 0.0
        %870 = vmatpush2.xpose.msra.mxu0 0.0
        %871 = vmatprep.subr.mxu0 0.0
        %872 = vmatpush2.xpose.msra.mxu0 0.0
        %873 = vmatprep.subr.mxu0 0.0
        %874 = vmatpush2.xpose.msra.mxu0 0.0
        %875 = vmatprep.subr.mxu0 0.0
        %876 = vmatpush2.xpose.msra.mxu0 0.0
        %877 = vmatprep.subr.mxu0 0.0
        %878 = vmatpush2.xpose.msra.mxu0 0.0
        %879 = vmatprep.subr.mxu0 0.0
        %880 = vmatpush2.xpose.msra.mxu0 0.0
        %881 = vmatprep.subr.mxu0 0.0
        %882 = vmatpush2.xpose.msra.mxu0 0.0
        %883 = vmatprep.subr.mxu0 0.0
        %884 = vmatpush2.xpose.msra.mxu0 0.0
        %885 = vmatprep.subr.mxu0 0.0
        %886 = vmatpush2.xpose.msra.mxu0 0.0
        %887 = vmatprep.subr.mxu0 0.0
        %888 = vmatpush2.xpose.msra.mxu0 0.0
        %889 = vmatprep.subr.mxu0 0.0
        %890 = vmatpush2.xpose.msra.mxu0 0.0
        %891 = vmatprep.subr.mxu0 0.0
        %892 = vmatpush2.xpose.msra.mxu0 0.0
        %893 = vmatprep.subr.mxu0 0.0
        %894 = vmatpush2.xpose.msra.mxu0 0.0
        %895 = vmatprep.subr.mxu0 0.0
        %896 = vmatpush2.xpose.msra.mxu0 0.0
        %897 = vmatprep.subr.mxu0 0.0
        %898 = vmatpush2.xpose.msra.mxu0 0.0
        %899 = vmatprep.mubr.f32.mxu0 0.0
        %900 = vmatmul.mubr.f32.gmra.mxu0 %v831
        %v901 = vpop.f32.mrf.mxu0
        %v902 = vadd.f32 0.0, %v901
        %v903 = vpop.f32.mrf.mxu0
        %904 = vdwg.mxu0
        %v905 = vmul.f32 %v902, 0.35355338
        %v906 = vsel %vm564, -1e+30, %v905
        %v907 = vsel %vm663, %v906, -inf
        %908 = vmax.xlane.f32.xlu0 %v907
        %v909 = vpop.xlane.xlu0 %908
        %v910 = vsub.f32 %v906, %v909
        %v911 = vmul.f32 %v910, 1.442695
        %v912 = vpow.pop %v911
        %v913 = vsel %vm663, %v912, 0.0
        %914 = vadd.xlane.f32.xlu0 %v913
        %v915 = vpop.xlane.xlu0 %914
        %v916 = vrcp.pop %v915
        %v917 = vmul.f32 %v912, %v916
        %918 = vrot.lane.b32.xlu0 %v657, 56
        %v919 = vpop.permute.xlu0 %918
        %v922 = vsel %vm663, %v917, 0
        %924 = vmatprep.subr.mxu0 0.0
        %925 = vmatpush1.msra.mxu0 0.0
        %926 = vmatprep.subr.mxu0 0.0
        %927 = vmatpush1.msra.mxu0 0.0
        %928 = vmatprep.subr.mxu0 0.0
        %929 = vmatpush1.msra.mxu0 0.0
        %930 = vmatprep.subr.mxu0 0.0
        %931 = vmatpush1.msra.mxu0 0.0
        %932 = vmatprep.subr.mxu0 0.0
        %933 = vmatpush1.msra.mxu0 0.0
        %934 = vmatprep.subr.mxu0 0.0
        %935 = vmatpush1.msra.mxu0 0.0
        %936 = vmatprep.subr.mxu0 0.0
        %937 = vmatpush1.msra.mxu0 0.0
        %938 = vmatprep.subr.mxu0 0.0
        %939 = vmatpush1.msra.mxu0 0.0
        %940 = vmatprep.subr.mxu0 0.0
        %941 = vmatpush1.msra.mxu0 0.0
        %942 = vmatprep.subr.mxu0 0.0
        %943 = vmatpush1.msra.mxu0 0.0
        %944 = vmatprep.subr.mxu0 0.0
        %945 = vmatpush1.msra.mxu0 0.0
        %946 = vmatprep.subr.mxu0 0.0
        %947 = vmatpush1.msra.mxu0 0.0
        %948 = vmatprep.subr.mxu0 0.0
        %949 = vmatpush1.msra.mxu0 0.0
        %950 = vmatprep.subr.mxu0 0.0
        %951 = vmatpush1.msra.mxu0 0.0
        %952 = vmatprep.subr.mxu0 0.0
        %953 = vmatpush1.msra.mxu0 0.0
        %954 = vmatprep.subr.mxu0 0.0
        %955 = vmatpush1.msra.mxu0 %v919
        %956 = vmatprep.subr.mxu0 0.0
        %957 = vmatpush2.msra.mxu0 0.0
        %958 = vmatprep.subr.mxu0 0.0
        %959 = vmatpush2.msra.mxu0 0.0
        %960 = vmatprep.subr.mxu0 0.0
        %961 = vmatpush2.msra.mxu0 0.0
        %962 = vmatprep.subr.mxu0 0.0
        %963 = vmatpush2.msra.mxu0 0.0
        %964 = vmatprep.subr.mxu0 0.0
        %965 = vmatpush2.msra.mxu0 0.0
        %966 = vmatprep.subr.mxu0 0.0
        %967 = vmatpush2.msra.mxu0 0.0
        %968 = vmatprep.subr.mxu0 0.0
        %969 = vmatpush2.msra.mxu0 0.0
        %970 = vmatprep.subr.mxu0 0.0
        %971 = vmatpush2.msra.mxu0 0.0
        %972 = vmatprep.subr.mxu0 0.0
        %973 = vmatpush2.msra.mxu0 0.0
        %974 = vmatprep.subr.mxu0 0.0
        %975 = vmatpush2.msra.mxu0 0.0
        %976 = vmatprep.subr.mxu0 0.0
        %977 = vmatpush2.msra.mxu0 0.0
        %978 = vmatprep.subr.mxu0 0.0
        %979 = vmatpush2.msra.mxu0 0.0
        %980 = vmatprep.subr.mxu0 0.0
        %981 = vmatpush2.msra.mxu0 0.0
        %982 = vmatprep.subr.mxu0 0.0
        %983 = vmatpush2.msra.mxu0 0.0
        %984 = vmatprep.subr.mxu0 0.0
        %985 = vmatpush2.msra.mxu0 0.0
        %986 = vmatprep.subr.mxu0 0.0
        %987 = vmatpush2.msra.mxu0 0.0
        %988 = vmatprep.mubr.f32.mxu0 0.0
        %989 = vmatmul.mubr.f32.gmra.mxu0 %v922
        %v990 = vpop.f32.mrf.mxu0
        %v991 = vadd.f32 0.0, %v990
        %v992 = vpop.f32.mrf.mxu0
        %993 = vdwg.mxu0
        %v995 = vsel %vm663, %v991, 0
        %997 = vmatprep.subr.mxu0 0.0
        %998 = vmatpush1.msra.mxu0 0.0
        %999 = vmatprep.subr.mxu0 0.0
        %1000 = vmatpush1.msra.mxu0 0.0
        %1001 = vmatprep.subr.mxu0 0.0
        %1002 = vmatpush1.msra.mxu0 0.0
        %1003 = vmatprep.subr.mxu0 0.0
        %1004 = vmatpush1.msra.mxu0 0.0
        %1005 = vmatprep.subr.mxu0 0.0
        %1006 = vmatpush1.msra.mxu0 0.0
        %1007 = vmatprep.subr.mxu0 0.0
        %1008 = vmatpush1.msra.mxu0 0.0
        %1009 = vmatprep.subr.mxu0 0.0
        %1010 = vmatpush1.msra.mxu0 0.0
        %1011 = vmatprep.subr.mxu0 0.0
        %1012 = vmatpush1.msra.mxu0 0.0
        %1013 = vmatprep.subr.mxu0 0.0
        %1014 = vmatpush1.msra.mxu0 0.0
        %1015 = vmatprep.subr.mxu0 0.0
        %1016 = vmatpush1.msra.mxu0 0.0
        %1017 = vmatprep.subr.mxu0 0.0
        %1018 = vmatpush1.msra.mxu0 0.0
        %1019 = vmatprep.subr.mxu0 0.0
        %1020 = vmatpush1.msra.mxu0 0.0
        %1021 = vmatprep.subr.mxu0 0.0
        %1022 = vmatpush1.msra.mxu0 0.0
        %1023 = vmatprep.subr.mxu0 0.0
        %1024 = vmatpush1.msra.mxu0 0.0
        %1025 = vmatprep.subr.mxu0 0.0
        %1026 = vmatpush1.msra.mxu0 0.0
        %1027 = vmatprep.subr.mxu0 0.0
        %1028 = vmatpush1.msra.mxu0 %v570
        %1029 = vmatprep.subr.mxu0 0.0
        %1030 = vmatpush2.msra.mxu0 0.0
        %1031 = vmatprep.subr.mxu0 0.0
        %1032 = vmatpush2.msra.mxu0 0.0
        %1033 = vmatprep.subr.mxu0 0.0
        %1034 = vmatpush2.msra.mxu0 0.0
        %1035 = vmatprep.subr.mxu0 0.0
        %1036 = vmatpush2.msra.mxu0 0.0
        %1037 = vmatprep.subr.mxu0 0.0
        %1038 = vmatpush2.msra.mxu0 0.0
        %1039 = vmatprep.subr.mxu0 0.0
        %1040 = vmatpush2.msra.mxu0 0.0
        %1041 = vmatprep.subr.mxu0 0.0
        %1042 = vmatpush2.msra.mxu0 0.0
        %1043 = vmatprep.subr.mxu0 0.0
        %1044 = vmatpush2.msra.mxu0 0.0
        %1045 = vmatprep.subr.mxu0 0.0
        %1046 = vmatpush2.msra.mxu0 0.0
        %1047 = vmatprep.subr.mxu0 0.0
        %1048 = vmatpush2.msra.mxu0 0.0
        %1049 = vmatprep.subr.mxu0 0.0
        %1050 = vmatpush2.msra.mxu0 0.0
        %1051 = vmatprep.subr.mxu0 0.0
        %1052 = vmatpush2.msra.mxu0 0.0
        %1053 = vmatprep.subr.mxu0 0.0
        %1054 = vmatpush2.msra.mxu0 0.0
        %1055 = vmatprep.subr.mxu0 0.0
        %1056 = vmatpush2.msra.mxu0 0.0
        %1057 = vmatprep.subr.mxu0 0.0
        %1058 = vmatpush2.msra.mxu0 0.0
        %1059 = vmatprep.subr.mxu0 0.0
        %1060 = vmatpush2.msra.mxu0 0.0
        %1061 = vmatprep.mubr.f32.mxu0 0.0
        %1062 = vmatmul.mubr.f32.gmra.mxu0 %v995
        %v1063 = vpop.f32.mrf.mxu0
        %v1064 = vadd.f32 0.0, %v1063
        %v1065 = vpop.f32.mrf.mxu0
        %1066 = vdwg.mxu0
        %v1068 = vsel %vm663, %v824, 0
        %1070 = vmatprep.subr.mxu0 0.0
        %1071 = vmatpush1.msra.mxu0 0.0
        %1072 = vmatprep.subr.mxu0 0.0
        %1073 = vmatpush1.msra.mxu0 0.0
        %1074 = vmatprep.subr.mxu0 0.0
        %1075 = vmatpush1.msra.mxu0 0.0
        %1076 = vmatprep.subr.mxu0 0.0
        %1077 = vmatpush1.msra.mxu0 0.0
        %1078 = vmatprep.subr.mxu0 0.0
        %1079 = vmatpush1.msra.mxu0 0.0
        %1080 = vmatprep.subr.mxu0 0.0
        %1081 = vmatpush1.msra.mxu0 0.0
        %1082 = vmatprep.subr.mxu0 0.0
        %1083 = vmatpush1.msra.mxu0 0.0
        %1084 = vmatprep.subr.mxu0 0.0
        %1085 = vmatpush1.msra.mxu0 0.0
        %1086 = vmatprep.subr.mxu0 0.0
        %1087 = vmatpush1.msra.mxu0 0.0
        %1088 = vmatprep.subr.mxu0 0.0
        %1089 = vmatpush1.msra.mxu0 0.0
        %1090 = vmatprep.subr.mxu0 0.0
        %1091 = vmatpush1.msra.mxu0 0.0
        %1092 = vmatprep.subr.mxu0 0.0
        %1093 = vmatpush1.msra.mxu0 0.0
        %1094 = vmatprep.subr.mxu0 0.0
        %1095 = vmatpush1.msra.mxu0 0.0
        %1096 = vmatprep.subr.mxu0 0.0
        %1097 = vmatpush1.msra.mxu0 0.0
        %1098 = vmatprep.subr.mxu0 0.0
        %1099 = vmatpush1.msra.mxu0 0.0
        %1100 = vmatprep.subr.mxu0 0.0
        %1101 = vmatpush1.msra.mxu0 %v569
        %1102 = vmatprep.subr.mxu0 0.0
        %1103 = vmatpush2.msra.mxu0 0.0
        %1104 = vmatprep.subr.mxu0 0.0
        %1105 = vmatpush2.msra.mxu0 0.0
        %1106 = vmatprep.subr.mxu0 0.0
        %1107 = vmatpush2.msra.mxu0 0.0
        %1108 = vmatprep.subr.mxu0 0.0
        %1109 = vmatpush2.msra.mxu0 0.0
        %1110 = vmatprep.subr.mxu0 0.0
        %1111 = vmatpush2.msra.mxu0 0.0
        %1112 = vmatprep.subr.mxu0 0.0
        %1113 = vmatpush2.msra.mxu0 0.0
        %1114 = vmatprep.subr.mxu0 0.0
        %1115 = vmatpush2.msra.mxu0 0.0
        %1116 = vmatprep.subr.mxu0 0.0
        %1117 = vmatpush2.msra.mxu0 0.0
        %1118 = vmatprep.subr.mxu0 0.0
        %1119 = vmatpush2.msra.mxu0 0.0
        %1120 = vmatprep.subr.mxu0 0.0
        %1121 = vmatpush2.msra.mxu0 0.0
        %1122 = vmatprep.subr.mxu0 0.0
        %1123 = vmatpush2.msra.mxu0 0.0
        %1124 = vmatprep.subr.mxu0 0.0
        %1125 = vmatpush2.msra.mxu0 0.0
        %1126 = vmatprep.subr.mxu0 0.0
        %1127 = vmatpush2.msra.mxu0 0.0
        %1128 = vmatprep.subr.mxu0 0.0
        %1129 = vmatpush2.msra.mxu0 0.0
        %1130 = vmatprep.subr.mxu0 0.0
        %1131 = vmatpush2.msra.mxu0 0.0
        %1132 = vmatprep.subr.mxu0 0.0
        %1133 = vmatpush2.msra.mxu0 0.0
        %1134 = vmatprep.mubr.f32.mxu0 0.0
        %1135 = vmatmul.mubr.f32.gmra.mxu0 %v1068
        %v1136 = vpop.f32.mrf.mxu0
        %v1137 = vadd.f32 %v1064, %v1136
        %v1138 = vpop.f32.mrf.mxu0
        %1139 = vdwg.mxu0
        %1140 = vrot.lane.b32.xlu0 %v657, 112
        %v1141 = vpop.permute.xlu0 %1140
        %1142 = vrot.lane.b32.xlu0 %v657, 80
        %v1143 = vpop.permute.xlu0 %1142
        %v1144 = vsel %vm663, %v1141, 0
        %v1146 = vsel %vm663, %v1143, 0
        %1148 = vmatprep.subr.mxu0 0.0
        %1149 = vmatpush1.xpose.msra.mxu0 0.0
        %1150 = vmatprep.subr.mxu0 0.0
        %1151 = vmatpush1.xpose.msra.mxu0 0.0
        %1152 = vmatprep.subr.mxu0 0.0
        %1153 = vmatpush1.xpose.msra.mxu0 0.0
        %1154 = vmatprep.subr.mxu0 0.0
        %1155 = vmatpush1.xpose.msra.mxu0 0.0
        %1156 = vmatprep.subr.mxu0 0.0
        %1157 = vmatpush1.xpose.msra.mxu0 0.0
        %1158 = vmatprep.subr.mxu0 0.0
        %1159 = vmatpush1.xpose.msra.mxu0 0.0
        %1160 = vmatprep.subr.mxu0 0.0
        %1161 = vmatpush1.xpose.msra.mxu0 0.0
        %1162 = vmatprep.subr.mxu0 0.0
        %1163 = vmatpush1.xpose.msra.mxu0 0.0
        %1164 = vmatprep.subr.mxu0 0.0
        %1165 = vmatpush1.xpose.msra.mxu0 0.0
        %1166 = vmatprep.subr.mxu0 0.0
        %1167 = vmatpush1.xpose.msra.mxu0 0.0
        %1168 = vmatprep.subr.mxu0 0.0
        %1169 = vmatpush1.xpose.msra.mxu0 0.0
        %1170 = vmatprep.subr.mxu0 0.0
        %1171 = vmatpush1.xpose.msra.mxu0 0.0
        %1172 = vmatprep.subr.mxu0 0.0
        %1173 = vmatpush1.xpose.msra.mxu0 0.0
        %1174 = vmatprep.subr.mxu0 0.0
        %1175 = vmatpush1.xpose.msra.mxu0 0.0
        %1176 = vmatprep.subr.mxu0 0.0
        %1177 = vmatpush1.xpose.msra.mxu0 0.0
        %1178 = vmatprep.subr.mxu0 0.0
        %1179 = vmatpush1.xpose.msra.mxu0 %v1146
        %1180 = vmatprep.subr.mxu0 0.0
        %1181 = vmatpush2.xpose.msra.mxu0 0.0
        %1182 = vmatprep.subr.mxu0 0.0
        %1183 = vmatpush2.xpose.msra.mxu0 0.0
        %1184 = vmatprep.subr.mxu0 0.0
        %1185 = vmatpush2.xpose.msra.mxu0 0.0
        %1186 = vmatprep.subr.mxu0 0.0
        %1187 = vmatpush2.xpose.msra.mxu0 0.0
        %1188 = vmatprep.subr.mxu0 0.0
        %1189 = vmatpush2.xpose.msra.mxu0 0.0
        %1190 = vmatprep.subr.mxu0 0.0
        %1191 = vmatpush2.xpose.msra.mxu0 0.0
        %1192 = vmatprep.subr.mxu0 0.0
        %1193 = vmatpush2.xpose.msra.mxu0 0.0
        %1194 = vmatprep.subr.mxu0 0.0
        %1195 = vmatpush2.xpose.msra.mxu0 0.0
        %1196 = vmatprep.subr.mxu0 0.0
        %1197 = vmatpush2.xpose.msra.mxu0 0.0
        %1198 = vmatprep.subr.mxu0 0.0
        %1199 = vmatpush2.xpose.msra.mxu0 0.0
        %1200 = vmatprep.subr.mxu0 0.0
        %1201 = vmatpush2.xpose.msra.mxu0 0.0
        %1202 = vmatprep.subr.mxu0 0.0
        %1203 = vmatpush2.xpose.msra.mxu0 0.0
        %1204 = vmatprep.subr.mxu0 0.0
        %1205 = vmatpush2.xpose.msra.mxu0 0.0
        %1206 = vmatprep.subr.mxu0 0.0
        %1207 = vmatpush2.xpose.msra.mxu0 0.0
        %1208 = vmatprep.subr.mxu0 0.0
        %1209 = vmatpush2.xpose.msra.mxu0 0.0
        %1210 = vmatprep.subr.mxu0 0.0
        %1211 = vmatpush2.xpose.msra.mxu0 0.0
        %1212 = vmatprep.mubr.f32.mxu0 0.0
        %1213 = vmatmul.mubr.f32.gmra.mxu0 %v1144
        %v1214 = vpop.f32.mrf.mxu0
        %v1215 = vadd.f32 0.0, %v1214
        %v1216 = vpop.f32.mrf.mxu0
        %1217 = vdwg.mxu0
        %v1218 = vmul.f32 %v1215, 0.35355338
        %v1219 = vsel %vm564, -1e+30, %v1218
        %v1220 = vsel %vm663, %v1219, -inf
        %1221 = vmax.xlane.f32.xlu0 %v1220
        %v1222 = vpop.xlane.xlu0 %1221
        %v1223 = vsub.f32 %v1219, %v1222
        %v1224 = vmul.f32 %v1223, 1.442695
        %v1225 = vpow.pop %v1224
        %v1226 = vsel %vm663, %v1225, 0.0
        %1227 = vadd.xlane.f32.xlu0 %v1226
        %v1228 = vpop.xlane.xlu0 %1227
        %v1229 = vrcp.pop %v1228
        %v1230 = vmul.f32 %v1225, %v1229
        %1231 = vrot.lane.b32.xlu0 %v657, 48
        %v1232 = vpop.permute.xlu0 %1231
        %v1235 = vsel %vm663, %v1230, 0
        %1237 = vmatprep.subr.mxu0 0.0
        %1238 = vmatpush1.msra.mxu0 0.0
        %1239 = vmatprep.subr.mxu0 0.0
        %1240 = vmatpush1.msra.mxu0 0.0
        %1241 = vmatprep.subr.mxu0 0.0
        %1242 = vmatpush1.msra.mxu0 0.0
        %1243 = vmatprep.subr.mxu0 0.0
        %1244 = vmatpush1.msra.mxu0 0.0
        %1245 = vmatprep.subr.mxu0 0.0
        %1246 = vmatpush1.msra.mxu0 0.0
        %1247 = vmatprep.subr.mxu0 0.0
        %1248 = vmatpush1.msra.mxu0 0.0
        %1249 = vmatprep.subr.mxu0 0.0
        %1250 = vmatpush1.msra.mxu0 0.0
        %1251 = vmatprep.subr.mxu0 0.0
        %1252 = vmatpush1.msra.mxu0 0.0
        %1253 = vmatprep.subr.mxu0 0.0
        %1254 = vmatpush1.msra.mxu0 0.0
        %1255 = vmatprep.subr.mxu0 0.0
        %1256 = vmatpush1.msra.mxu0 0.0
        %1257 = vmatprep.subr.mxu0 0.0
        %1258 = vmatpush1.msra.mxu0 0.0
        %1259 = vmatprep.subr.mxu0 0.0
        %1260 = vmatpush1.msra.mxu0 0.0
        %1261 = vmatprep.subr.mxu0 0.0
        %1262 = vmatpush1.msra.mxu0 0.0
        %1263 = vmatprep.subr.mxu0 0.0
        %1264 = vmatpush1.msra.mxu0 0.0
        %1265 = vmatprep.subr.mxu0 0.0
        %1266 = vmatpush1.msra.mxu0 0.0
        %1267 = vmatprep.subr.mxu0 0.0
        %1268 = vmatpush1.msra.mxu0 %v1232
        %1269 = vmatprep.subr.mxu0 0.0
        %1270 = vmatpush2.msra.mxu0 0.0
        %1271 = vmatprep.subr.mxu0 0.0
        %1272 = vmatpush2.msra.mxu0 0.0
        %1273 = vmatprep.subr.mxu0 0.0
        %1274 = vmatpush2.msra.mxu0 0.0
        %1275 = vmatprep.subr.mxu0 0.0
        %1276 = vmatpush2.msra.mxu0 0.0
        %1277 = vmatprep.subr.mxu0 0.0
        %1278 = vmatpush2.msra.mxu0 0.0
        %1279 = vmatprep.subr.mxu0 0.0
        %1280 = vmatpush2.msra.mxu0 0.0
        %1281 = vmatprep.subr.mxu0 0.0
        %1282 = vmatpush2.msra.mxu0 0.0
        %1283 = vmatprep.subr.mxu0 0.0
        %1284 = vmatpush2.msra.mxu0 0.0
        %1285 = vmatprep.subr.mxu0 0.0
        %1286 = vmatpush2.msra.mxu0 0.0
        %1287 = vmatprep.subr.mxu0 0.0
        %1288 = vmatpush2.msra.mxu0 0.0
        %1289 = vmatprep.subr.mxu0 0.0
        %1290 = vmatpush2.msra.mxu0 0.0
        %1291 = vmatprep.subr.mxu0 0.0
        %1292 = vmatpush2.msra.mxu0 0.0
        %1293 = vmatprep.subr.mxu0 0.0
        %1294 = vmatpush2.msra.mxu0 0.0
        %1295 = vmatprep.subr.mxu0 0.0
        %1296 = vmatpush2.msra.mxu0 0.0
        %1297 = vmatprep.subr.mxu0 0.0
        %1298 = vmatpush2.msra.mxu0 0.0
        %1299 = vmatprep.subr.mxu0 0.0
        %1300 = vmatpush2.msra.mxu0 0.0
        %1301 = vmatprep.mubr.f32.mxu0 0.0
        %1302 = vmatmul.mubr.f32.gmra.mxu0 %v1235
        %v1303 = vpop.f32.mrf.mxu0
        %v1304 = vadd.f32 0.0, %v1303
        %v1305 = vpop.f32.mrf.mxu0
        %1306 = vdwg.mxu0
        %v1308 = vsel %vm663, %v1304, 0
        %1310 = vmatprep.subr.mxu0 0.0
        %1311 = vmatpush1.msra.mxu0 0.0
        %1312 = vmatprep.subr.mxu0 0.0
        %1313 = vmatpush1.msra.mxu0 0.0
        %1314 = vmatprep.subr.mxu0 0.0
        %1315 = vmatpush1.msra.mxu0 0.0
        %1316 = vmatprep.subr.mxu0 0.0
        %1317 = vmatpush1.msra.mxu0 0.0
        %1318 = vmatprep.subr.mxu0 0.0
        %1319 = vmatpush1.msra.mxu0 0.0
        %1320 = vmatprep.subr.mxu0 0.0
        %1321 = vmatpush1.msra.mxu0 0.0
        %1322 = vmatprep.subr.mxu0 0.0
        %1323 = vmatpush1.msra.mxu0 0.0
        %1324 = vmatprep.subr.mxu0 0.0
        %1325 = vmatpush1.msra.mxu0 0.0
        %1326 = vmatprep.subr.mxu0 0.0
        %1327 = vmatpush1.msra.mxu0 0.0
        %1328 = vmatprep.subr.mxu0 0.0
        %1329 = vmatpush1.msra.mxu0 0.0
        %1330 = vmatprep.subr.mxu0 0.0
        %1331 = vmatpush1.msra.mxu0 0.0
        %1332 = vmatprep.subr.mxu0 0.0
        %1333 = vmatpush1.msra.mxu0 0.0
        %1334 = vmatprep.subr.mxu0 0.0
        %1335 = vmatpush1.msra.mxu0 0.0
        %1336 = vmatprep.subr.mxu0 0.0
        %1337 = vmatpush1.msra.mxu0 0.0
        %1338 = vmatprep.subr.mxu0 0.0
        %1339 = vmatpush1.msra.mxu0 0.0
        %1340 = vmatprep.subr.mxu0 0.0
        %1341 = vmatpush1.msra.mxu0 %v571
        %1342 = vmatprep.subr.mxu0 0.0
        %1343 = vmatpush2.msra.mxu0 0.0
        %1344 = vmatprep.subr.mxu0 0.0
        %1345 = vmatpush2.msra.mxu0 0.0
        %1346 = vmatprep.subr.mxu0 0.0
        %1347 = vmatpush2.msra.mxu0 0.0
        %1348 = vmatprep.subr.mxu0 0.0
        %1349 = vmatpush2.msra.mxu0 0.0
        %1350 = vmatprep.subr.mxu0 0.0
        %1351 = vmatpush2.msra.mxu0 0.0
        %1352 = vmatprep.subr.mxu0 0.0
        %1353 = vmatpush2.msra.mxu0 0.0
        %1354 = vmatprep.subr.mxu0 0.0
        %1355 = vmatpush2.msra.mxu0 0.0
        %1356 = vmatprep.subr.mxu0 0.0
        %1357 = vmatpush2.msra.mxu0 0.0
        %1358 = vmatprep.subr.mxu0 0.0
        %1359 = vmatpush2.msra.mxu0 0.0
        %1360 = vmatprep.subr.mxu0 0.0
        %1361 = vmatpush2.msra.mxu0 0.0
        %1362 = vmatprep.subr.mxu0 0.0
        %1363 = vmatpush2.msra.mxu0 0.0
        %1364 = vmatprep.subr.mxu0 0.0
        %1365 = vmatpush2.msra.mxu0 0.0
        %1366 = vmatprep.subr.mxu0 0.0
        %1367 = vmatpush2.msra.mxu0 0.0
        %1368 = vmatprep.subr.mxu0 0.0
        %1369 = vmatpush2.msra.mxu0 0.0
        %1370 = vmatprep.subr.mxu0 0.0
        %1371 = vmatpush2.msra.mxu0 0.0
        %1372 = vmatprep.subr.mxu0 0.0
        %1373 = vmatpush2.msra.mxu0 0.0
        %1374 = vmatprep.mubr.f32.mxu0 0.0
        %1375 = vmatmul.mubr.f32.gmra.mxu0 %v1308
        %v1376 = vpop.f32.mrf.mxu0
        %v1377 = vadd.f32 0.0, %v1376
        %v1378 = vpop.f32.mrf.mxu0
        %1379 = vdwg.mxu0
        %v1380 = vadd.f32 %v1137, %v1377
        %1381 = vrot.lane.b32.xlu0 %v657, 104
        %v1382 = vpop.permute.xlu0 %1381
        %1383 = vrot.lane.b32.xlu0 %v657, 72
        %v1384 = vpop.permute.xlu0 %1383
        %v1385 = vsel %vm663, %v1382, 0
        %v1387 = vsel %vm663, %v1384, 0
        %1389 = vmatprep.subr.mxu0 0.0
        %1390 = vmatpush1.xpose.msra.mxu0 0.0
        %1391 = vmatprep.subr.mxu0 0.0
        %1392 = vmatpush1.xpose.msra.mxu0 0.0
        %1393 = vmatprep.subr.mxu0 0.0
        %1394 = vmatpush1.xpose.msra.mxu0 0.0
        %1395 = vmatprep.subr.mxu0 0.0
        %1396 = vmatpush1.xpose.msra.mxu0 0.0
        %1397 = vmatprep.subr.mxu0 0.0
        %1398 = vmatpush1.xpose.msra.mxu0 0.0
        %1399 = vmatprep.subr.mxu0 0.0
        %1400 = vmatpush1.xpose.msra.mxu0 0.0
        %1401 = vmatprep.subr.mxu0 0.0
        %1402 = vmatpush1.xpose.msra.mxu0 0.0
        %1403 = vmatprep.subr.mxu0 0.0
        %1404 = vmatpush1.xpose.msra.mxu0 0.0
        %1405 = vmatprep.subr.mxu0 0.0
        %1406 = vmatpush1.xpose.msra.mxu0 0.0
        %1407 = vmatprep.subr.mxu0 0.0
        %1408 = vmatpush1.xpose.msra.mxu0 0.0
        %1409 = vmatprep.subr.mxu0 0.0
        %1410 = vmatpush1.xpose.msra.mxu0 0.0
        %1411 = vmatprep.subr.mxu0 0.0
        %1412 = vmatpush1.xpose.msra.mxu0 0.0
        %1413 = vmatprep.subr.mxu0 0.0
        %1414 = vmatpush1.xpose.msra.mxu0 0.0
        %1415 = vmatprep.subr.mxu0 0.0
        %1416 = vmatpush1.xpose.msra.mxu0 0.0
        %1417 = vmatprep.subr.mxu0 0.0
        %1418 = vmatpush1.xpose.msra.mxu0 0.0
        %1419 = vmatprep.subr.mxu0 0.0
        %1420 = vmatpush1.xpose.msra.mxu0 %v1387
        %1421 = vmatprep.subr.mxu0 0.0
        %1422 = vmatpush2.xpose.msra.mxu0 0.0
        %1423 = vmatprep.subr.mxu0 0.0
        %1424 = vmatpush2.xpose.msra.mxu0 0.0
        %1425 = vmatprep.subr.mxu0 0.0
        %1426 = vmatpush2.xpose.msra.mxu0 0.0
        %1427 = vmatprep.subr.mxu0 0.0
        %1428 = vmatpush2.xpose.msra.mxu0 0.0
        %1429 = vmatprep.subr.mxu0 0.0
        %1430 = vmatpush2.xpose.msra.mxu0 0.0
        %1431 = vmatprep.subr.mxu0 0.0
        %1432 = vmatpush2.xpose.msra.mxu0 0.0
        %1433 = vmatprep.subr.mxu0 0.0
        %1434 = vmatpush2.xpose.msra.mxu0 0.0
        %1435 = vmatprep.subr.mxu0 0.0
        %1436 = vmatpush2.xpose.msra.mxu0 0.0
        %1437 = vmatprep.subr.mxu0 0.0
        %1438 = vmatpush2.xpose.msra.mxu0 0.0
        %1439 = vmatprep.subr.mxu0 0.0
        %1440 = vmatpush2.xpose.msra.mxu0 0.0
        %1441 = vmatprep.subr.mxu0 0.0
        %1442 = vmatpush2.xpose.msra.mxu0 0.0
        %1443 = vmatprep.subr.mxu0 0.0
        %1444 = vmatpush2.xpose.msra.mxu0 0.0
        %1445 = vmatprep.subr.mxu0 0.0
        %1446 = vmatpush2.xpose.msra.mxu0 0.0
        %1447 = vmatprep.subr.mxu0 0.0
        %1448 = vmatpush2.xpose.msra.mxu0 0.0
        %1449 = vmatprep.subr.mxu0 0.0
        %1450 = vmatpush2.xpose.msra.mxu0 0.0
        %1451 = vmatprep.subr.mxu0 0.0
        %1452 = vmatpush2.xpose.msra.mxu0 0.0
        %1453 = vmatprep.mubr.f32.mxu0 0.0
        %1454 = vmatmul.mubr.f32.gmra.mxu0 %v1385
        %v1455 = vpop.f32.mrf.mxu0
        %v1456 = vadd.f32 0.0, %v1455
        %v1457 = vpop.f32.mrf.mxu0
        %1458 = vdwg.mxu0
        %v1459 = vmul.f32 %v1456, 0.35355338
        %v1460 = vsel %vm564, -1e+30, %v1459
        %v1461 = vsel %vm663, %v1460, -inf
        %1462 = vmax.xlane.f32.xlu0 %v1461
        %v1463 = vpop.xlane.xlu0 %1462
        %v1464 = vsub.f32 %v1460, %v1463
        %v1465 = vmul.f32 %v1464, 1.442695
        %v1466 = vpow.pop %v1465
        %v1467 = vsel %vm663, %v1466, 0.0
        %1468 = vadd.xlane.f32.xlu0 %v1467
        %v1469 = vpop.xlane.xlu0 %1468
        %v1470 = vrcp.pop %v1469
        %v1471 = vmul.f32 %v1466, %v1470
        %1472 = vrot.lane.b32.xlu0 %v657, 40
        %v1473 = vpop.permute.xlu0 %1472
        %v1476 = vsel %vm663, %v1471, 0
        %1478 = vmatprep.subr.mxu0 0.0
        %1479 = vmatpush1.msra.mxu0 0.0
        %1480 = vmatprep.subr.mxu0 0.0
        %1481 = vmatpush1.msra.mxu0 0.0
        %1482 = vmatprep.subr.mxu0 0.0
        %1483 = vmatpush1.msra.mxu0 0.0
        %1484 = vmatprep.subr.mxu0 0.0
        %1485 = vmatpush1.msra.mxu0 0.0
        %1486 = vmatprep.subr.mxu0 0.0
        %1487 = vmatpush1.msra.mxu0 0.0
        %1488 = vmatprep.subr.mxu0 0.0
        %1489 = vmatpush1.msra.mxu0 0.0
        %1490 = vmatprep.subr.mxu0 0.0
        %1491 = vmatpush1.msra.mxu0 0.0
        %1492 = vmatprep.subr.mxu0 0.0
        %1493 = vmatpush1.msra.mxu0 0.0
        %1494 = vmatprep.subr.mxu0 0.0
        %1495 = vmatpush1.msra.mxu0 0.0
        %1496 = vmatprep.subr.mxu0 0.0
        %1497 = vmatpush1.msra.mxu0 0.0
        %1498 = vmatprep.subr.mxu0 0.0
        %1499 = vmatpush1.msra.mxu0 0.0
        %1500 = vmatprep.subr.mxu0 0.0
        %1501 = vmatpush1.msra.mxu0 0.0
        %1502 = vmatprep.subr.mxu0 0.0
        %1503 = vmatpush1.msra.mxu0 0.0
        %1504 = vmatprep.subr.mxu0 0.0
        %1505 = vmatpush1.msra.mxu0 0.0
        %1506 = vmatprep.subr.mxu0 0.0
        %1507 = vmatpush1.msra.mxu0 0.0
        %1508 = vmatprep.subr.mxu0 0.0
        %1509 = vmatpush1.msra.mxu0 %v1473
        %1510 = vmatprep.subr.mxu0 0.0
        %1511 = vmatpush2.msra.mxu0 0.0
        %1512 = vmatprep.subr.mxu0 0.0
        %1513 = vmatpush2.msra.mxu0 0.0
        %1514 = vmatprep.subr.mxu0 0.0
        %1515 = vmatpush2.msra.mxu0 0.0
        %1516 = vmatprep.subr.mxu0 0.0
        %1517 = vmatpush2.msra.mxu0 0.0
        %1518 = vmatprep.subr.mxu0 0.0
        %1519 = vmatpush2.msra.mxu0 0.0
        %1520 = vmatprep.subr.mxu0 0.0
        %1521 = vmatpush2.msra.mxu0 0.0
        %1522 = vmatprep.subr.mxu0 0.0
        %1523 = vmatpush2.msra.mxu0 0.0
        %1524 = vmatprep.subr.mxu0 0.0
        %1525 = vmatpush2.msra.mxu0 0.0
        %1526 = vmatprep.subr.mxu0 0.0
        %1527 = vmatpush2.msra.mxu0 0.0
        %1528 = vmatprep.subr.mxu0 0.0
        %1529 = vmatpush2.msra.mxu0 0.0
        %1530 = vmatprep.subr.mxu0 0.0
        %1531 = vmatpush2.msra.mxu0 0.0
        %1532 = vmatprep.subr.mxu0 0.0
        %1533 = vmatpush2.msra.mxu0 0.0
        %1534 = vmatprep.subr.mxu0 0.0
        %1535 = vmatpush2.msra.mxu0 0.0
        %1536 = vmatprep.subr.mxu0 0.0
        %1537 = vmatpush2.msra.mxu0 0.0
        %1538 = vmatprep.subr.mxu0 0.0
        %1539 = vmatpush2.msra.mxu0 0.0
        %1540 = vmatprep.subr.mxu0 0.0
        %1541 = vmatpush2.msra.mxu0 0.0
        %1542 = vmatprep.mubr.f32.mxu0 0.0
        %1543 = vmatmul.mubr.f32.gmra.mxu0 %v1476
        %v1544 = vpop.f32.mrf.mxu0
        %v1545 = vadd.f32 0.0, %v1544
        %v1546 = vpop.f32.mrf.mxu0
        %1547 = vdwg.mxu0
        %v1549 = vsel %vm663, %v1545, 0
        %1551 = vmatprep.subr.mxu0 0.0
        %1552 = vmatpush1.msra.mxu0 0.0
        %1553 = vmatprep.subr.mxu0 0.0
        %1554 = vmatpush1.msra.mxu0 0.0
        %1555 = vmatprep.subr.mxu0 0.0
        %1556 = vmatpush1.msra.mxu0 0.0
        %1557 = vmatprep.subr.mxu0 0.0
        %1558 = vmatpush1.msra.mxu0 0.0
        %1559 = vmatprep.subr.mxu0 0.0
        %1560 = vmatpush1.msra.mxu0 0.0
        %1561 = vmatprep.subr.mxu0 0.0
        %1562 = vmatpush1.msra.mxu0 0.0
        %1563 = vmatprep.subr.mxu0 0.0
        %1564 = vmatpush1.msra.mxu0 0.0
        %1565 = vmatprep.subr.mxu0 0.0
        %1566 = vmatpush1.msra.mxu0 0.0
        %1567 = vmatprep.subr.mxu0 0.0
        %1568 = vmatpush1.msra.mxu0 0.0
        %1569 = vmatprep.subr.mxu0 0.0
        %1570 = vmatpush1.msra.mxu0 0.0
        %1571 = vmatprep.subr.mxu0 0.0
        %1572 = vmatpush1.msra.mxu0 0.0
        %1573 = vmatprep.subr.mxu0 0.0
        %1574 = vmatpush1.msra.mxu0 0.0
        %1575 = vmatprep.subr.mxu0 0.0
        %1576 = vmatpush1.msra.mxu0 0.0
        %1577 = vmatprep.subr.mxu0 0.0
        %1578 = vmatpush1.msra.mxu0 0.0
        %1579 = vmatprep.subr.mxu0 0.0
        %1580 = vmatpush1.msra.mxu0 0.0
        %1581 = vmatprep.subr.mxu0 0.0
        %1582 = vmatpush1.msra.mxu0 %v572
        %1583 = vmatprep.subr.mxu0 0.0
        %1584 = vmatpush2.msra.mxu0 0.0
        %1585 = vmatprep.subr.mxu0 0.0
        %1586 = vmatpush2.msra.mxu0 0.0
        %1587 = vmatprep.subr.mxu0 0.0
        %1588 = vmatpush2.msra.mxu0 0.0
        %1589 = vmatprep.subr.mxu0 0.0
        %1590 = vmatpush2.msra.mxu0 0.0
        %1591 = vmatprep.subr.mxu0 0.0
        %1592 = vmatpush2.msra.mxu0 0.0
        %1593 = vmatprep.subr.mxu0 0.0
        %1594 = vmatpush2.msra.mxu0 0.0
        %1595 = vmatprep.subr.mxu0 0.0
        %1596 = vmatpush2.msra.mxu0 0.0
        %1597 = vmatprep.subr.mxu0 0.0
        %1598 = vmatpush2.msra.mxu0 0.0
        %1599 = vmatprep.subr.mxu0 0.0
        %1600 = vmatpush2.msra.mxu0 0.0
        %1601 = vmatprep.subr.mxu0 0.0
        %1602 = vmatpush2.msra.mxu0 0.0
        %1603 = vmatprep.subr.mxu0 0.0
        %1604 = vmatpush2.msra.mxu0 0.0
        %1605 = vmatprep.subr.mxu0 0.0
        %1606 = vmatpush2.msra.mxu0 0.0
        %1607 = vmatprep.subr.mxu0 0.0
        %1608 = vmatpush2.msra.mxu0 0.0
        %1609 = vmatprep.subr.mxu0 0.0
        %1610 = vmatpush2.msra.mxu0 0.0
        %1611 = vmatprep.subr.mxu0 0.0
        %1612 = vmatpush2.msra.mxu0 0.0
        %1613 = vmatprep.subr.mxu0 0.0
        %1614 = vmatpush2.msra.mxu0 0.0
        %1615 = vmatprep.mubr.f32.mxu0 0.0
        %1616 = vmatmul.mubr.f32.gmra.mxu0 %v1549
        %v1617 = vpop.f32.mrf.mxu0
        %v1618 = vadd.f32 0.0, %v1617
        %v1619 = vpop.f32.mrf.mxu0
        %1620 = vdwg.mxu0
        %v1621 = vadd.f32 %v1380, %v1618
        %v1622 = vadd.f32 %v557, %v1621
        %v1623 = vsel %vm384, %v1622, 0.0
        %1624 = vadd.xlane.f32.xlu0 %v1623
        %v1625 = vpop.xlane.xlu0 %1624
        %v1626 = vrcp.pop 32.0
        %v1627 = vmul.f32 %v1625, %v1626
        %v1628 = vsub.f32 %v1622, %v1627
        %v1629 = vmul.f32 %v1628, %v1628
        %v1630 = vsel %vm384, %v1629, 0.0
        %1631 = vadd.xlane.f32.xlu0 %v1630
        %v1632 = vpop.xlane.xlu0 %1631
        %v1633 = vmul.f32 %v1632, %v1626
        %v1634 = vadd.f32 %v1633, 1e-05
        %v1635 = vrsqrt.pop %v1634
        %v1636 = vmul.f32 %v1628, %v1635
        %v1637 = vlaneseq
        %v1638 = vshrl.u32 %v1637, 7
        %v1639 = vsub.s32 1, %v1638
        %v1640 = vrot.slane %v586, %v1639
        %v1641 = vmul.f32 %v1636, %v1640
        %v1642 = vlaneseq
        %v1643 = vshrl.u32 %v1642, 7
        %v1644 = vsub.s32 2, %v1643
        %v1645 = vrot.slane %v586, %v1644
        %v1646 = vadd.f32 %v1641, %v1645
        %v1648 = vlaneseq
        %v1649 = vshrl.u32 %v1648, 7
        %v1650 = vsub.s32 0, %v1649
        %v1651 = vrot.slane %v585, %v1650
        %v1654 = vsel %vm384, %v1646, 0
        %1656 = vmatprep.subr.mxu0 0.0
        %1657 = vmatpush1.msra.mxu0 0.0
        %1658 = vmatprep.subr.mxu0 0.0
        %1659 = vmatpush1.msra.mxu0 0.0
        %1660 = vmatprep.subr.mxu0 0.0
        %1661 = vmatpush1.msra.mxu0 0.0
        %1662 = vmatprep.subr.mxu0 0.0
        %1663 = vmatpush1.msra.mxu0 0.0
        %1664 = vmatprep.subr.mxu0 0.0
        %1665 = vmatpush1.msra.mxu0 0.0
        %1666 = vmatprep.subr.mxu0 0.0
        %1667 = vmatpush1.msra.mxu0 0.0
        %1668 = vmatprep.subr.mxu0 0.0
        %1669 = vmatpush1.msra.mxu0 0.0
        %1670 = vmatprep.subr.mxu0 0.0
        %1671 = vmatpush1.msra.mxu0 0.0
        %1672 = vmatprep.subr.mxu0 0.0
        %1673 = vmatpush1.msra.mxu0 0.0
        %1674 = vmatprep.subr.mxu0 0.0
        %1675 = vmatpush1.msra.mxu0 0.0
        %1676 = vmatprep.subr.mxu0 0.0
        %1677 = vmatpush1.msra.mxu0 0.0
        %1678 = vmatprep.subr.mxu0 0.0
        %1679 = vmatpush1.msra.mxu0 0.0
        %1680 = vmatprep.subr.mxu0 0.0
        %1681 = vmatpush1.msra.mxu0 %v576
        %1682 = vmatprep.subr.mxu0 0.0
        %1683 = vmatpush1.msra.mxu0 %v575
        %1684 = vmatprep.subr.mxu0 0.0
        %1685 = vmatpush1.msra.mxu0 %v574
        %1686 = vmatprep.subr.mxu0 0.0
        %1687 = vmatpush1.msra.mxu0 %v573
        %1688 = vmatprep.subr.mxu0 0.0
        %1689 = vmatpush2.msra.mxu0 0.0
        %1690 = vmatprep.subr.mxu0 0.0
        %1691 = vmatpush2.msra.mxu0 0.0
        %1692 = vmatprep.subr.mxu0 0.0
        %1693 = vmatpush2.msra.mxu0 0.0
        %1694 = vmatprep.subr.mxu0 0.0
        %1695 = vmatpush2.msra.mxu0 0.0
        %1696 = vmatprep.subr.mxu0 0.0
        %1697 = vmatpush2.msra.mxu0 0.0
        %1698 = vmatprep.subr.mxu0 0.0
        %1699 = vmatpush2.msra.mxu0 0.0
        %1700 = vmatprep.subr.mxu0 0.0
        %1701 = vmatpush2.msra.mxu0 0.0
        %1702 = vmatprep.subr.mxu0 0.0
        %1703 = vmatpush2.msra.mxu0 0.0
        %1704 = vmatprep.subr.mxu0 0.0
        %1705 = vmatpush2.msra.mxu0 0.0
        %1706 = vmatprep.subr.mxu0 0.0
        %1707 = vmatpush2.msra.mxu0 0.0
        %1708 = vmatprep.subr.mxu0 0.0
        %1709 = vmatpush2.msra.mxu0 0.0
        %1710 = vmatprep.subr.mxu0 0.0
        %1711 = vmatpush2.msra.mxu0 0.0
        %1712 = vmatprep.subr.mxu0 0.0
        %1713 = vmatpush2.msra.mxu0 0.0
        %1714 = vmatprep.subr.mxu0 0.0
        %1715 = vmatpush2.msra.mxu0 0.0
        %1716 = vmatprep.subr.mxu0 0.0
        %1717 = vmatpush2.msra.mxu0 0.0
        %1718 = vmatprep.subr.mxu0 0.0
        %1719 = vmatpush2.msra.mxu0 0.0
        %1720 = vmatprep.mubr.f32.mxu0 0.0
        %1721 = vmatmul.mubr.f32.gmra.mxu0 %v1654
        %v1722 = vpop.f32.mrf.mxu0
        %v1723 = vadd.f32 %v1651, %v1722
        %v1724 = vpop.f32.mrf.mxu0
        %1725 = vdwg.mxu0
        %v1726 = vmax.f32 %v1723, 0.0
        %v1727 = vlaneseq
        %v1728 = vshrl.u32 %v1727, 7
        %v1729 = vsub.s32 0, %v1728
        %v1730 = vrot.slane %v586, %v1729
        %vm1731 = vcmask 523264
        %v1733 = vsel %vm1731, %v1726, 0
        %1735 = vmatprep.subr.mxu0 0.0
        %1736 = vmatpush1.msra.mxu0 0.0
        %1737 = vmatprep.subr.mxu0 0.0
        %1738 = vmatpush1.msra.mxu0 0.0
        %1739 = vmatprep.subr.mxu0 0.0
        %1740 = vmatpush1.msra.mxu0 0.0
        %1741 = vmatprep.subr.mxu0 0.0
        %1742 = vmatpush1.msra.mxu0 0.0
        %1743 = vmatprep.subr.mxu0 0.0
        %1744 = vmatpush1.msra.mxu0 0.0
        %1745 = vmatprep.subr.mxu0 0.0
        %1746 = vmatpush1.msra.mxu0 0.0
        %1747 = vmatprep.subr.mxu0 0.0
        %1748 = vmatpush1.msra.mxu0 0.0
        %1749 = vmatprep.subr.mxu0 0.0
        %1750 = vmatpush1.msra.mxu0 0.0
        %1751 = vmatprep.subr.mxu0 0.0
        %1752 = vmatpush1.msra.mxu0 %v584
        %1753 = vmatprep.subr.mxu0 0.0
        %1754 = vmatpush1.msra.mxu0 %v583
        %1755 = vmatprep.subr.mxu0 0.0
        %1756 = vmatpush1.msra.mxu0 %v582
        %1757 = vmatprep.subr.mxu0 0.0
        %1758 = vmatpush1.msra.mxu0 %v581
        %1759 = vmatprep.subr.mxu0 0.0
        %1760 = vmatpush1.msra.mxu0 %v580
        %1761 = vmatprep.subr.mxu0 0.0
        %1762 = vmatpush1.msra.mxu0 %v579
        %1763 = vmatprep.subr.mxu0 0.0
        %1764 = vmatpush1.msra.mxu0 %v578
        %1765 = vmatprep.subr.mxu0 0.0
        %1766 = vmatpush1.msra.mxu0 %v577
        %1767 = vmatprep.subr.mxu0 0.0
        %1768 = vmatpush2.msra.mxu0 0.0
        %1769 = vmatprep.subr.mxu0 0.0
        %1770 = vmatpush2.msra.mxu0 0.0
        %1771 = vmatprep.subr.mxu0 0.0
        %1772 = vmatpush2.msra.mxu0 0.0
        %1773 = vmatprep.subr.mxu0 0.0
        %1774 = vmatpush2.msra.mxu0 0.0
        %1775 = vmatprep.subr.mxu0 0.0
        %1776 = vmatpush2.msra.mxu0 0.0
        %1777 = vmatprep.subr.mxu0 0.0
        %1778 = vmatpush2.msra.mxu0 0.0
        %1779 = vmatprep.subr.mxu0 0.0
        %1780 = vmatpush2.msra.mxu0 0.0
        %1781 = vmatprep.subr.mxu0 0.0
        %1782 = vmatpush2.msra.mxu0 0.0
        %1783 = vmatprep.subr.mxu0 0.0
        %1784 = vmatpush2.msra.mxu0 0.0
        %1785 = vmatprep.subr.mxu0 0.0
        %1786 = vmatpush2.msra.mxu0 0.0
        %1787 = vmatprep.subr.mxu0 0.0
        %1788 = vmatpush2.msra.mxu0 0.0
        %1789 = vmatprep.subr.mxu0 0.0
        %1790 = vmatpush2.msra.mxu0 0.0
        %1791 = vmatprep.subr.mxu0 0.0
        %1792 = vmatpush2.msra.mxu0 0.0
        %1793 = vmatprep.subr.mxu0 0.0
        %1794 = vmatpush2.msra.mxu0 0.0
        %1795 = vmatprep.subr.mxu0 0.0
        %1796 = vmatpush2.msra.mxu0 0.0
        %1797 = vmatprep.subr.mxu0 0.0
        %1798 = vmatpush2.msra.mxu0 0.0
        %1799 = vmatprep.mubr.f32.mxu0 0.0
        %1800 = vmatmul.mubr.f32.gmra.mxu0 %v1733
        %v1801 = vpop.f32.mrf.mxu0
        %v1802 = vadd.f32 %v1730, %v1801
        %v1803 = vpop.f32.mrf.mxu0
        %1804 = vdwg.mxu0
        %v1805 = vadd.f32 %v1646, %v1802
        %v1806 = vsel %vm384, %v1805, 0.0
        %1807 = vadd.xlane.f32.xlu0 %v1806
        %v1808 = vpop.xlane.xlu0 %1807
        %v1809 = vmul.f32 %v1808, %v1626
        %v1810 = vsub.f32 %v1805, %v1809
        %v1811 = vmul.f32 %v1810, %v1810
        %v1812 = vsel %vm384, %v1811, 0.0
        %1813 = vadd.xlane.f32.xlu0 %v1812
        %v1814 = vpop.xlane.xlu0 %1813
        %v1815 = vmul.f32 %v1814, %v1626
        %v1816 = vadd.f32 %v1815, 1e-05
        %v1817 = vrsqrt.pop %v1816
        %v1818 = vmul.f32 %v1810, %v1817
        %v1819 = vlaneseq
        %v1820 = vshrl.u32 %v1819, 7
        %v1821 = vsub.s32 3, %v1820
        %v1822 = vrot.slane %v586, %v1821
        %v1823 = vmul.f32 %v1818, %v1822
        %v1824 = vlaneseq
        %v1825 = vshrl.u32 %v1824, 7
        %v1826 = vsub.s32 4, %v1825
        %v1827 = vrot.slane %v586, %v1826
        %v1828 = vadd.f32 %v1823, %v1827
        %s1829 = scalar_lea.vmem %s3, 32
        %v1830 = vld [vmem:[%s1829] sm:$0xff]
        %v1831 = vld [vmem:[%s1829 + $0x8] sm:$0xff]
        %v1832 = vld [vmem:[%s1829 + $0x10] sm:$0xff]
        %v1833 = vld [vmem:[%s1829 + $0x18] sm:$0xff]
        %s1834 = scalar_lea.vmem %s4, 32
        %v1835 = vld [vmem:[%s1834] sm:$0xff]
        %v1836 = vld [vmem:[%s1834 + $0x8] sm:$0xff]
        %v1837 = vld [vmem:[%s1834 + $0x10] sm:$0xff]
        %v1838 = vld [vmem:[%s1834 + $0x18] sm:$0xff]
        %s1839 = scalar_lea.vmem %s5, 32
        %v1840 = vld [vmem:[%s1839] sm:$0xff]
        %v1841 = vld [vmem:[%s1839 + $0x8] sm:$0xff]
        %v1842 = vld [vmem:[%s1839 + $0x10] sm:$0xff]
        %v1843 = vld [vmem:[%s1839 + $0x18] sm:$0xff]
        %s1844 = scalar_lea.vmem %s6, 64
        %v1845 = vld [vmem:[%s1844] sm:$0xff]
        %v1846 = vld [vmem:[%s1844 + $0x8] sm:$0xff]
        %v1847 = vld [vmem:[%s1844 + $0x10] sm:$0xff]
        %v1848 = vld [vmem:[%s1844 + $0x18] sm:$0xff]
        %v1849 = vld [vmem:[%s1844 + $0x20] sm:$0xff]
        %v1850 = vld [vmem:[%s1844 + $0x28] sm:$0xff]
        %v1851 = vld [vmem:[%s1844 + $0x30] sm:$0xff]
        %v1852 = vld [vmem:[%s1844 + $0x38] sm:$0xff]
        %s1853 = scalar_lea.vmem %s7, 1
        %v1854 = vld [vmem:[%s1853] sm:$0x1]
        %s1855 = scalar_lea.vmem %s8, 8
        %v1856 = vld [vmem:[%s1855] sm:$0x1f]
        %v1858 = vsel %vm384, %v1828, 0
        %1860 = vmatprep.subr.mxu0 0.0
        %1861 = vmatpush1.msra.mxu0 0.0
        %1862 = vmatprep.subr.mxu0 0.0
        %1863 = vmatpush1.msra.mxu0 0.0
        %1864 = vmatprep.subr.mxu0 0.0
        %1865 = vmatpush1.msra.mxu0 0.0
        %1866 = vmatprep.subr.mxu0 0.0
        %1867 = vmatpush1.msra.mxu0 0.0
        %1868 = vmatprep.subr.mxu0 0.0
        %1869 = vmatpush1.msra.mxu0 0.0
        %1870 = vmatprep.subr.mxu0 0.0
        %1871 = vmatpush1.msra.mxu0 0.0
        %1872 = vmatprep.subr.mxu0 0.0
        %1873 = vmatpush1.msra.mxu0 0.0
        %1874 = vmatprep.subr.mxu0 0.0
        %1875 = vmatpush1.msra.mxu0 0.0
        %1876 = vmatprep.subr.mxu0 0.0
        %1877 = vmatpush1.msra.mxu0 0.0
        %1878 = vmatprep.subr.mxu0 0.0
        %1879 = vmatpush1.msra.mxu0 0.0
        %1880 = vmatprep.subr.mxu0 0.0
        %1881 = vmatpush1.msra.mxu0 0.0
        %1882 = vmatprep.subr.mxu0 0.0
        %1883 = vmatpush1.msra.mxu0 0.0
        %1884 = vmatprep.subr.mxu0 0.0
        %1885 = vmatpush1.msra.mxu0 %v1833
        %1886 = vmatprep.subr.mxu0 0.0
        %1887 = vmatpush1.msra.mxu0 %v1832
        %1888 = vmatprep.subr.mxu0 0.0
        %1889 = vmatpush1.msra.mxu0 %v1831
        %1890 = vmatprep.subr.mxu0 0.0
        %1891 = vmatpush1.msra.mxu0 %v1830
        %1892 = vmatprep.subr.mxu0 0.0
        %1893 = vmatpush2.msra.mxu0 0.0
        %1894 = vmatprep.subr.mxu0 0.0
        %1895 = vmatpush2.msra.mxu0 0.0
        %1896 = vmatprep.subr.mxu0 0.0
        %1897 = vmatpush2.msra.mxu0 0.0
        %1898 = vmatprep.subr.mxu0 0.0
        %1899 = vmatpush2.msra.mxu0 0.0
        %1900 = vmatprep.subr.mxu0 0.0
        %1901 = vmatpush2.msra.mxu0 0.0
        %1902 = vmatprep.subr.mxu0 0.0
        %1903 = vmatpush2.msra.mxu0 0.0
        %1904 = vmatprep.subr.mxu0 0.0
        %1905 = vmatpush2.msra.mxu0 0.0
        %1906 = vmatprep.subr.mxu0 0.0
        %1907 = vmatpush2.msra.mxu0 0.0
        %1908 = vmatprep.subr.mxu0 0.0
        %1909 = vmatpush2.msra.mxu0 0.0
        %1910 = vmatprep.subr.mxu0 0.0
        %1911 = vmatpush2.msra.mxu0 0.0
        %1912 = vmatprep.subr.mxu0 0.0
        %1913 = vmatpush2.msra.mxu0 0.0
        %1914 = vmatprep.subr.mxu0 0.0
        %1915 = vmatpush2.msra.mxu0 0.0
        %1916 = vmatprep.subr.mxu0 0.0
        %1917 = vmatpush2.msra.mxu0 0.0
        %1918 = vmatprep.subr.mxu0 0.0
        %1919 = vmatpush2.msra.mxu0 0.0
        %1920 = vmatprep.subr.mxu0 0.0
        %1921 = vmatpush2.msra.mxu0 0.0
        %1922 = vmatprep.subr.mxu0 0.0
        %1923 = vmatpush2.msra.mxu0 0.0
        %1924 = vmatprep.mubr.f32.mxu0 0.0
        %1925 = vmatmul.mubr.f32.gmra.mxu0 %v1858
        %v1926 = vpop.f32.mrf.mxu0
        %v1927 = vadd.f32 0.0, %v1926
        %v1928 = vpop.f32.mrf.mxu0
        %1929 = vdwg.mxu0
        %1931 = vrot.lane.b32.xlu0 %v1927, 96
        %v1932 = vpop.permute.xlu0 %1931
        %v1933 = vsel %vm663, %v1927, 0
        %v1935 = vsel %vm663, %v1932, 0
        %1937 = vmatprep.subr.mxu0 0.0
        %1938 = vmatpush1.xpose.msra.mxu0 0.0
        %1939 = vmatprep.subr.mxu0 0.0
        %1940 = vmatpush1.xpose.msra.mxu0 0.0
        %1941 = vmatprep.subr.mxu0 0.0
        %1942 = vmatpush1.xpose.msra.mxu0 0.0
        %1943 = vmatprep.subr.mxu0 0.0
        %1944 = vmatpush1.xpose.msra.mxu0 0.0
        %1945 = vmatprep.subr.mxu0 0.0
        %1946 = vmatpush1.xpose.msra.mxu0 0.0
        %1947 = vmatprep.subr.mxu0 0.0
        %1948 = vmatpush1.xpose.msra.mxu0 0.0
        %1949 = vmatprep.subr.mxu0 0.0
        %1950 = vmatpush1.xpose.msra.mxu0 0.0
        %1951 = vmatprep.subr.mxu0 0.0
        %1952 = vmatpush1.xpose.msra.mxu0 0.0
        %1953 = vmatprep.subr.mxu0 0.0
        %1954 = vmatpush1.xpose.msra.mxu0 0.0
        %1955 = vmatprep.subr.mxu0 0.0
        %1956 = vmatpush1.xpose.msra.mxu0 0.0
        %1957 = vmatprep.subr.mxu0 0.0
        %1958 = vmatpush1.xpose.msra.mxu0 0.0
        %1959 = vmatprep.subr.mxu0 0.0
        %1960 = vmatpush1.xpose.msra.mxu0 0.0
        %1961 = vmatprep.subr.mxu0 0.0
        %1962 = vmatpush1.xpose.msra.mxu0 0.0
        %1963 = vmatprep.subr.mxu0 0.0
        %1964 = vmatpush1.xpose.msra.mxu0 0.0
        %1965 = vmatprep.subr.mxu0 0.0
        %1966 = vmatpush1.xpose.msra.mxu0 0.0
        %1967 = vmatprep.subr.mxu0 0.0
        %1968 = vmatpush1.xpose.msra.mxu0 %v1935
        %1969 = vmatprep.subr.mxu0 0.0
        %1970 = vmatpush2.xpose.msra.mxu0 0.0
        %1971 = vmatprep.subr.mxu0 0.0
        %1972 = vmatpush2.xpose.msra.mxu0 0.0
        %1973 = vmatprep.subr.mxu0 0.0
        %1974 = vmatpush2.xpose.msra.mxu0 0.0
        %1975 = vmatprep.subr.mxu0 0.0
        %1976 = vmatpush2.xpose.msra.mxu0 0.0
        %1977 = vmatprep.subr.mxu0 0.0
        %1978 = vmatpush2.xpose.msra.mxu0 0.0
        %1979 = vmatprep.subr.mxu0 0.0
        %1980 = vmatpush2.xpose.msra.mxu0 0.0
        %1981 = vmatprep.subr.mxu0 0.0
        %1982 = vmatpush2.xpose.msra.mxu0 0.0
        %1983 = vmatprep.subr.mxu0 0.0
        %1984 = vmatpush2.xpose.msra.mxu0 0.0
        %1985 = vmatprep.subr.mxu0 0.0
        %1986 = vmatpush2.xpose.msra.mxu0 0.0
        %1987 = vmatprep.subr.mxu0 0.0
        %1988 = vmatpush2.xpose.msra.mxu0 0.0
        %1989 = vmatprep.subr.mxu0 0.0
        %1990 = vmatpush2.xpose.msra.mxu0 0.0
        %1991 = vmatprep.subr.mxu0 0.0
        %1992 = vmatpush2.xpose.msra.mxu0 0.0
        %1993 = vmatprep.subr.mxu0 0.0
        %1994 = vmatpush2.xpose.msra.mxu0 0.0
        %1995 = vmatprep.subr.mxu0 0.0
        %1996 = vmatpush2.xpose.msra.mxu0 0.0
        %1997 = vmatprep.subr.mxu0 0.0
        %1998 = vmatpush2.xpose.msra.mxu0 0.0
        %1999 = vmatprep.subr.mxu0 0.0
        %2000 = vmatpush2.xpose.msra.mxu0 0.0
        %2001 = vmatprep.mubr.f32.mxu0 0.0
        %2002 = vmatmul.mubr.f32.gmra.mxu0 %v1933
        %v2003 = vpop.f32.mrf.mxu0
        %v2004 = vadd.f32 0.0, %v2003
        %v2005 = vpop.f32.mrf.mxu0
        %2006 = vdwg.mxu0
        %v2007 = vmul.f32 %v2004, 0.35355338
        %v2008 = vsel %vm564, -1e+30, %v2007
        %v2009 = vsel %vm663, %v2008, -inf
        %2010 = vmax.xlane.f32.xlu0 %v2009
        %v2011 = vpop.xlane.xlu0 %2010
        %v2012 = vsub.f32 %v2008, %v2011
        %v2013 = vmul.f32 %v2012, 1.442695
        %v2014 = vpow.pop %v2013
        %v2015 = vsel %vm663, %v2014, 0.0
        %2016 = vadd.xlane.f32.xlu0 %v2015
        %v2017 = vpop.xlane.xlu0 %2016
        %v2018 = vrcp.pop %v2017
        %v2019 = vmul.f32 %v2014, %v2018
        %2020 = vrot.lane.b32.xlu0 %v1927, 64
        %v2021 = vpop.permute.xlu0 %2020
        %v2024 = vsel %vm663, %v2019, 0
        %2026 = vmatprep.subr.mxu0 0.0
        %2027 = vmatpush1.msra.mxu0 0.0
        %2028 = vmatprep.subr.mxu0 0.0
        %2029 = vmatpush1.msra.mxu0 0.0
        %2030 = vmatprep.subr.mxu0 0.0
        %2031 = vmatpush1.msra.mxu0 0.0
        %2032 = vmatprep.subr.mxu0 0.0
        %2033 = vmatpush1.msra.mxu0 0.0
        %2034 = vmatprep.subr.mxu0 0.0
        %2035 = vmatpush1.msra.mxu0 0.0
        %2036 = vmatprep.subr.mxu0 0.0
        %2037 = vmatpush1.msra.mxu0 0.0
        %2038 = vmatprep.subr.mxu0 0.0
        %2039 = vmatpush1.msra.mxu0 0.0
        %2040 = vmatprep.subr.mxu0 0.0
        %2041 = vmatpush1.msra.mxu0 0.0
        %2042 = vmatprep.subr.mxu0 0.0
        %2043 = vmatpush1.msra.mxu0 0.0
        %2044 = vmatprep.subr.mxu0 0.0
        %2045 = vmatpush1.msra.mxu0 0.0
        %2046 = vmatprep.subr.mxu0 0.0
        %2047 = vmatpush1.msra.mxu0 0.0
        %2048 = vmatprep.subr.mxu0 0.0
        %2049 = vmatpush1.msra.mxu0 0.0
        %2050 = vmatprep.subr.mxu0 0.0
        %2051 = vmatpush1.msra.mxu0 0.0
        %2052 = vmatprep.subr.mxu0 0.0
        %2053 = vmatpush1.msra.mxu0 0.0
        %2054 = vmatprep.subr.mxu0 0.0
        %2055 = vmatpush1.msra.mxu0 0.0
        %2056 = vmatprep.subr.mxu0 0.0
        %2057 = vmatpush1.msra.mxu0 %v2021
        %2058 = vmatprep.subr.mxu0 0.0
        %2059 = vmatpush2.msra.mxu0 0.0
        %2060 = vmatprep.subr.mxu0 0.0
        %2061 = vmatpush2.msra.mxu0 0.0
        %2062 = vmatprep.subr.mxu0 0.0
        %2063 = vmatpush2.msra.mxu0 0.0
        %2064 = vmatprep.subr.mxu0 0.0
        %2065 = vmatpush2.msra.mxu0 0.0
        %2066 = vmatprep.subr.mxu0 0.0
        %2067 = vmatpush2.msra.mxu0 0.0
        %2068 = vmatprep.subr.mxu0 0.0
        %2069 = vmatpush2.msra.mxu0 0.0
        %2070 = vmatprep.subr.mxu0 0.0
        %2071 = vmatpush2.msra.mxu0 0.0
        %2072 = vmatprep.subr.mxu0 0.0
        %2073 = vmatpush2.msra.mxu0 0.0
        %2074 = vmatprep.subr.mxu0 0.0
        %2075 = vmatpush2.msra.mxu0 0.0
        %2076 = vmatprep.subr.mxu0 0.0
        %2077 = vmatpush2.msra.mxu0 0.0
        %2078 = vmatprep.subr.mxu0 0.0
        %2079 = vmatpush2.msra.mxu0 0.0
        %2080 = vmatprep.subr.mxu0 0.0
        %2081 = vmatpush2.msra.mxu0 0.0
        %2082 = vmatprep.subr.mxu0 0.0
        %2083 = vmatpush2.msra.mxu0 0.0
        %2084 = vmatprep.subr.mxu0 0.0
        %2085 = vmatpush2.msra.mxu0 0.0
        %2086 = vmatprep.subr.mxu0 0.0
        %2087 = vmatpush2.msra.mxu0 0.0
        %2088 = vmatprep.subr.mxu0 0.0
        %2089 = vmatpush2.msra.mxu0 0.0
        %2090 = vmatprep.mubr.f32.mxu0 0.0
        %2091 = vmatmul.mubr.f32.gmra.mxu0 %v2024
        %v2092 = vpop.f32.mrf.mxu0
        %v2093 = vadd.f32 0.0, %v2092
        %v2094 = vpop.f32.mrf.mxu0
        %2095 = vdwg.mxu0
        %2096 = vrot.lane.b32.xlu0 %v1927, 120
        %v2097 = vpop.permute.xlu0 %2096
        %2098 = vrot.lane.b32.xlu0 %v1927, 88
        %v2099 = vpop.permute.xlu0 %2098
        %v2100 = vsel %vm663, %v2097, 0
        %v2102 = vsel %vm663, %v2099, 0
        %2104 = vmatprep.subr.mxu0 0.0
        %2105 = vmatpush1.xpose.msra.mxu0 0.0
        %2106 = vmatprep.subr.mxu0 0.0
        %2107 = vmatpush1.xpose.msra.mxu0 0.0
        %2108 = vmatprep.subr.mxu0 0.0
        %2109 = vmatpush1.xpose.msra.mxu0 0.0
        %2110 = vmatprep.subr.mxu0 0.0
        %2111 = vmatpush1.xpose.msra.mxu0 0.0
        %2112 = vmatprep.subr.mxu0 0.0
        %2113 = vmatpush1.xpose.msra.mxu0 0.0
        %2114 = vmatprep.subr.mxu0 0.0
        %2115 = vmatpush1.xpose.msra.mxu0 0.0
        %2116 = vmatprep.subr.mxu0 0.0
        %2117 = vmatpush1.xpose.msra.mxu0 0.0
        %2118 = vmatprep.subr.mxu0 0.0
        %2119 = vmatpush1.xpose.msra.mxu0 0.0
        %2120 = vmatprep.subr.mxu0 0.0
        %2121 = vmatpush1.xpose.msra.mxu0 0.0
        %2122 = vmatprep.subr.mxu0 0.0
        %2123 = vmatpush1.xpose.msra.mxu0 0.0
        %2124 = vmatprep.subr.mxu0 0.0
        %2125 = vmatpush1.xpose.msra.mxu0 0.0
        %2126 = vmatprep.subr.mxu0 0.0
        %2127 = vmatpush1.xpose.msra.mxu0 0.0
        %2128 = vmatprep.subr.mxu0 0.0
        %2129 = vmatpush1.xpose.msra.mxu0 0.0
        %2130 = vmatprep.subr.mxu0 0.0
        %2131 = vmatpush1.xpose.msra.mxu0 0.0
        %2132 = vmatprep.subr.mxu0 0.0
        %2133 = vmatpush1.xpose.msra.mxu0 0.0
        %2134 = vmatprep.subr.mxu0 0.0
        %2135 = vmatpush1.xpose.msra.mxu0 %v2102
        %2136 = vmatprep.subr.mxu0 0.0
        %2137 = vmatpush2.xpose.msra.mxu0 0.0
        %2138 = vmatprep.subr.mxu0 0.0
        %2139 = vmatpush2.xpose.msra.mxu0 0.0
        %2140 = vmatprep.subr.mxu0 0.0
        %2141 = vmatpush2.xpose.msra.mxu0 0.0
        %2142 = vmatprep.subr.mxu0 0.0
        %2143 = vmatpush2.xpose.msra.mxu0 0.0
        %2144 = vmatprep.subr.mxu0 0.0
        %2145 = vmatpush2.xpose.msra.mxu0 0.0
        %2146 = vmatprep.subr.mxu0 0.0
        %2147 = vmatpush2.xpose.msra.mxu0 0.0
        %2148 = vmatprep.subr.mxu0 0.0
        %2149 = vmatpush2.xpose.msra.mxu0 0.0
        %2150 = vmatprep.subr.mxu0 0.0
        %2151 = vmatpush2.xpose.msra.mxu0 0.0
        %2152 = vmatprep.subr.mxu0 0.0
        %2153 = vmatpush2.xpose.msra.mxu0 0.0
        %2154 = vmatprep.subr.mxu0 0.0
        %2155 = vmatpush2.xpose.msra.mxu0 0.0
        %2156 = vmatprep.subr.mxu0 0.0
        %2157 = vmatpush2.xpose.msra.mxu0 0.0
        %2158 = vmatprep.subr.mxu0 0.0
        %2159 = vmatpush2.xpose.msra.mxu0 0.0
        %2160 = vmatprep.subr.mxu0 0.0
        %2161 = vmatpush2.xpose.msra.mxu0 0.0
        %2162 = vmatprep.subr.mxu0 0.0
        %2163 = vmatpush2.xpose.msra.mxu0 0.0
        %2164 = vmatprep.subr.mxu0 0.0
        %2165 = vmatpush2.xpose.msra.mxu0 0.0
        %2166 = vmatprep.subr.mxu0 0.0
        %2167 = vmatpush2.xpose.msra.mxu0 0.0
        %2168 = vmatprep.mubr.f32.mxu0 0.0
        %2169 = vmatmul.mubr.f32.gmra.mxu0 %v2100
        %v2170 = vpop.f32.mrf.mxu0
        %v2171 = vadd.f32 0.0, %v2170
        %v2172 = vpop.f32.mrf.mxu0
        %2173 = vdwg.mxu0
        %v2174 = vmul.f32 %v2171, 0.35355338
        %v2175 = vsel %vm564, -1e+30, %v2174
        %v2176 = vsel %vm663, %v2175, -inf
        %2177 = vmax.xlane.f32.xlu0 %v2176
        %v2178 = vpop.xlane.xlu0 %2177
        %v2179 = vsub.f32 %v2175, %v2178
        %v2180 = vmul.f32 %v2179, 1.442695
        %v2181 = vpow.pop %v2180
        %v2182 = vsel %vm663, %v2181, 0.0
        %2183 = vadd.xlane.f32.xlu0 %v2182
        %v2184 = vpop.xlane.xlu0 %2183
        %v2185 = vrcp.pop %v2184
        %v2186 = vmul.f32 %v2181, %v2185
        %2187 = vrot.lane.b32.xlu0 %v1927, 56
        %v2188 = vpop.permute.xlu0 %2187
        %v2191 = vsel %vm663, %v2186, 0
        %2193 = vmatprep.subr.mxu0 0.0
        %2194 = vmatpush1.msra.mxu0 0.0
        %2195 = vmatprep.subr.mxu0 0.0
        %2196 = vmatpush1.msra.mxu0 0.0
        %2197 = vmatprep.subr.mxu0 0.0
        %2198 = vmatpush1.msra.mxu0 0.0
        %2199 = vmatprep.subr.mxu0 0.0
        %2200 = vmatpush1.msra.mxu0 0.0
        %2201 = vmatprep.subr.mxu0 0.0
        %2202 = vmatpush1.msra.mxu0 0.0
        %2203 = vmatprep.subr.mxu0 0.0
        %2204 = vmatpush1.msra.mxu0 0.0
        %2205 = vmatprep.subr.mxu0 0.0
        %2206 = vmatpush1.msra.mxu0 0.0
        %2207 = vmatprep.subr.mxu0 0.0
        %2208 = vmatpush1.msra.mxu0 0.0
        %2209 = vmatprep.subr.mxu0 0.0
        %2210 = vmatpush1.msra.mxu0 0.0
        %2211 = vmatprep.subr.mxu0 0.0
        %2212 = vmatpush1.msra.mxu0 0.0
        %2213 = vmatprep.subr.mxu0 0.0
        %2214 = vmatpush1.msra.mxu0 0.0
        %2215 = vmatprep.subr.mxu0 0.0
        %2216 = vmatpush1.msra.mxu0 0.0
        %2217 = vmatprep.subr.mxu0 0.0
        %2218 = vmatpush1.msra.mxu0 0.0
        %2219 = vmatprep.subr.mxu0 0.0
        %2220 = vmatpush1.msra.mxu0 0.0
        %2221 = vmatprep.subr.mxu0 0.0
        %2222 = vmatpush1.msra.mxu0 0.0
        %2223 = vmatprep.subr.mxu0 0.0
        %2224 = vmatpush1.msra.mxu0 %v2188
        %2225 = vmatprep.subr.mxu0 0.0
        %2226 = vmatpush2.msra.mxu0 0.0
        %2227 = vmatprep.subr.mxu0 0.0
        %2228 = vmatpush2.msra.mxu0 0.0
        %2229 = vmatprep.subr.mxu0 0.0
        %2230 = vmatpush2.msra.mxu0 0.0
        %2231 = vmatprep.subr.mxu0 0.0
        %2232 = vmatpush2.msra.mxu0 0.0
        %2233 = vmatprep.subr.mxu0 0.0
        %2234 = vmatpush2.msra.mxu0 0.0
        %2235 = vmatprep.subr.mxu0 0.0
        %2236 = vmatpush2.msra.mxu0 0.0
        %2237 = vmatprep.subr.mxu0 0.0
        %2238 = vmatpush2.msra.mxu0 0.0
        %2239 = vmatprep.subr.mxu0 0.0
        %2240 = vmatpush2.msra.mxu0 0.0
        %2241 = vmatprep.subr.mxu0 0.0
        %2242 = vmatpush2.msra.mxu0 0.0
        %2243 = vmatprep.subr.mxu0 0.0
        %2244 = vmatpush2.msra.mxu0 0.0
        %2245 = vmatprep.subr.mxu0 0.0
        %2246 = vmatpush2.msra.mxu0 0.0
        %2247 = vmatprep.subr.mxu0 0.0
        %2248 = vmatpush2.msra.mxu0 0.0
        %2249 = vmatprep.subr.mxu0 0.0
        %2250 = vmatpush2.msra.mxu0 0.0
        %2251 = vmatprep.subr.mxu0 0.0
        %2252 = vmatpush2.msra.mxu0 0.0
        %2253 = vmatprep.subr.mxu0 0.0
        %2254 = vmatpush2.msra.mxu0 0.0
        %2255 = vmatprep.subr.mxu0 0.0
        %2256 = vmatpush2.msra.mxu0 0.0
        %2257 = vmatprep.mubr.f32.mxu0 0.0
        %2258 = vmatmul.mubr.f32.gmra.mxu0 %v2191
        %v2259 = vpop.f32.mrf.mxu0
        %v2260 = vadd.f32 0.0, %v2259
        %v2261 = vpop.f32.mrf.mxu0
        %2262 = vdwg.mxu0
        %v2264 = vsel %vm663, %v2260, 0
        %2266 = vmatprep.subr.mxu0 0.0
        %2267 = vmatpush1.msra.mxu0 0.0
        %2268 = vmatprep.subr.mxu0 0.0
        %2269 = vmatpush1.msra.mxu0 0.0
        %2270 = vmatprep.subr.mxu0 0.0
        %2271 = vmatpush1.msra.mxu0 0.0
        %2272 = vmatprep.subr.mxu0 0.0
        %2273 = vmatpush1.msra.mxu0 0.0
        %2274 = vmatprep.subr.mxu0 0.0
        %2275 = vmatpush1.msra.mxu0 0.0
        %2276 = vmatprep.subr.mxu0 0.0
        %2277 = vmatpush1.msra.mxu0 0.0
        %2278 = vmatprep.subr.mxu0 0.0
        %2279 = vmatpush1.msra.mxu0 0.0
        %2280 = vmatprep.subr.mxu0 0.0
        %2281 = vmatpush1.msra.mxu0 0.0
        %2282 = vmatprep.subr.mxu0 0.0
        %2283 = vmatpush1.msra.mxu0 0.0
        %2284 = vmatprep.subr.mxu0 0.0
        %2285 = vmatpush1.msra.mxu0 0.0
        %2286 = vmatprep.subr.mxu0 0.0
        %2287 = vmatpush1.msra.mxu0 0.0
        %2288 = vmatprep.subr.mxu0 0.0
        %2289 = vmatpush1.msra.mxu0 0.0
        %2290 = vmatprep.subr.mxu0 0.0
        %2291 = vmatpush1.msra.mxu0 0.0
        %2292 = vmatprep.subr.mxu0 0.0
        %2293 = vmatpush1.msra.mxu0 0.0
        %2294 = vmatprep.subr.mxu0 0.0
        %2295 = vmatpush1.msra.mxu0 0.0
        %2296 = vmatprep.subr.mxu0 0.0
        %2297 = vmatpush1.msra.mxu0 %v1836
        %2298 = vmatprep.subr.mxu0 0.0
        %2299 = vmatpush2.msra.mxu0 0.0
        %2300 = vmatprep.subr.mxu0 0.0
        %2301 = vmatpush2.msra.mxu0 0.0
        %2302 = vmatprep.subr.mxu0 0.0
        %2303 = vmatpush2.msra.mxu0 0.0
        %2304 = vmatprep.subr.mxu0 0.0
        %2305 = vmatpush2.msra.mxu0 0.0
        %2306 = vmatprep.subr.mxu0 0.0
        %2307 = vmatpush2.msra.mxu0 0.0
        %2308 = vmatprep.subr.mxu0 0.0
        %2309 = vmatpush2.msra.mxu0 0.0
        %2310 = vmatprep.subr.mxu0 0.0
        %2311 = vmatpush2.msra.mxu0 0.0
        %2312 = vmatprep.subr.mxu0 0.0
        %2313 = vmatpush2.msra.mxu0 0.0
        %2314 = vmatprep.subr.mxu0 0.0
        %2315 = vmatpush2.msra.mxu0 0.0
        %2316 = vmatprep.subr.mxu0 0.0
        %2317 = vmatpush2.msra.mxu0 0.0
        %2318 = vmatprep.subr.mxu0 0.0
        %2319 = vmatpush2.msra.mxu0 0.0
        %2320 = vmatprep.subr.mxu0 0.0
        %2321 = vmatpush2.msra.mxu0 0.0
        %2322 = vmatprep.subr.mxu0 0.0
        %2323 = vmatpush2.msra.mxu0 0.0
        %2324 = vmatprep.subr.mxu0 0.0
        %2325 = vmatpush2.msra.mxu0 0.0
        %2326 = vmatprep.subr.mxu0 0.0
        %2327 = vmatpush2.msra.mxu0 0.0
        %2328 = vmatprep.subr.mxu0 0.0
        %2329 = vmatpush2.msra.mxu0 0.0
        %2330 = vmatprep.mubr.f32.mxu0 0.0
        %2331 = vmatmul.mubr.f32.gmra.mxu0 %v2264
        %v2332 = vpop.f32.mrf.mxu0
        %v2333 = vadd.f32 0.0, %v2332
        %v2334 = vpop.f32.mrf.mxu0
        %2335 = vdwg.mxu0
        %v2337 = vsel %vm663, %v2093, 0
        %2339 = vmatprep.subr.mxu0 0.0
        %2340 = vmatpush1.msra.mxu0 0.0
        %2341 = vmatprep.subr.mxu0 0.0
        %2342 = vmatpush1.msra.mxu0 0.0
        %2343 = vmatprep.subr.mxu0 0.0
        %2344 = vmatpush1.msra.mxu0 0.0
        %2345 = vmatprep.subr.mxu0 0.0
        %2346 = vmatpush1.msra.mxu0 0.0
        %2347 = vmatprep.subr.mxu0 0.0
        %2348 = vmatpush1.msra.mxu0 0.0
        %2349 = vmatprep.subr.mxu0 0.0
        %2350 = vmatpush1.msra.mxu0 0.0
        %2351 = vmatprep.subr.mxu0 0.0
        %2352 = vmatpush1.msra.mxu0 0.0
        %2353 = vmatprep.subr.mxu0 0.0
        %2354 = vmatpush1.msra.mxu0 0.0
        %2355 = vmatprep.subr.mxu0 0.0
        %2356 = vmatpush1.msra.mxu0 0.0
        %2357 = vmatprep.subr.mxu0 0.0
        %2358 = vmatpush1.msra.mxu0 0.0
        %2359 = vmatprep.subr.mxu0 0.0
        %2360 = vmatpush1.msra.mxu0 0.0
        %2361 = vmatprep.subr.mxu0 0.0
        %2362 = vmatpush1.msra.mxu0 0.0
        %2363 = vmatprep.subr.mxu0 0.0
        %2364 = vmatpush1.msra.mxu0 0.0
        %2365 = vmatprep.subr.mxu0 0.0
        %2366 = vmatpush1.msra.mxu0 0.0
        %2367 = vmatprep.subr.mxu0 0.0
        %2368 = vmatpush1.msra.mxu0 0.0
        %2369 = vmatprep.subr.mxu0 0.0
        %2370 = vmatpush1.msra.mxu0 %v1835
        %2371 = vmatprep.subr.mxu0 0.0
        %2372 = vmatpush2.msra.mxu0 0.0
        %2373 = vmatprep.subr.mxu0 0.0
        %2374 = vmatpush2.msra.mxu0 0.0
        %2375 = vmatprep.subr.mxu0 0.0
        %2376 = vmatpush2.msra.mxu0 0.0
        %2377 = vmatprep.subr.mxu0 0.0
        %2378 = vmatpush2.msra.mxu0 0.0
        %2379 = vmatprep.subr.mxu0 0.0
        %2380 = vmatpush2.msra.mxu0 0.0
        %2381 = vmatprep.subr.mxu0 0.0
        %2382 = vmatpush2.msra.mxu0 0.0
        %2383 = vmatprep.subr.mxu0 0.0
        %2384 = vmatpush2.msra.mxu0 0.0
        %2385 = vmatprep.subr.mxu0 0.0
        %2386 = vmatpush2.msra.mxu0 0.0
        %2387 = vmatprep.subr.mxu0 0.0
        %2388 = vmatpush2.msra.mxu0 0.0
        %2389 = vmatprep.subr.mxu0 0.0
        %2390 = vmatpush2.msra.mxu0 0.0
        %2391 = vmatprep.subr.mxu0 0.0
        %2392 = vmatpush2.msra.mxu0 0.0
        %2393 = vmatprep.subr.mxu0 0.0
        %2394 = vmatpush2.msra.mxu0 0.0
        %2395 = vmatprep.subr.mxu0 0.0
        %2396 = vmatpush2.msra.mxu0 0.0
        %2397 = vmatprep.subr.mxu0 0.0
        %2398 = vmatpush2.msra.mxu0 0.0
        %2399 = vmatprep.subr.mxu0 0.0
        %2400 = vmatpush2.msra.mxu0 0.0
        %2401 = vmatprep.subr.mxu0 0.0
        %2402 = vmatpush2.msra.mxu0 0.0
        %2403 = vmatprep.mubr.f32.mxu0 0.0
        %2404 = vmatmul.mubr.f32.gmra.mxu0 %v2337
        %v2405 = vpop.f32.mrf.mxu0
        %v2406 = vadd.f32 %v2333, %v2405
        %v2407 = vpop.f32.mrf.mxu0
        %2408 = vdwg.mxu0
        %2409 = vrot.lane.b32.xlu0 %v1927, 112
        %v2410 = vpop.permute.xlu0 %2409
        %2411 = vrot.lane.b32.xlu0 %v1927, 80
        %v2412 = vpop.permute.xlu0 %2411
        %v2413 = vsel %vm663, %v2410, 0
        %v2415 = vsel %vm663, %v2412, 0
        %2417 = vmatprep.subr.mxu0 0.0
        %2418 = vmatpush1.xpose.msra.mxu0 0.0
        %2419 = vmatprep.subr.mxu0 0.0
        %2420 = vmatpush1.xpose.msra.mxu0 0.0
        %2421 = vmatprep.subr.mxu0 0.0
        %2422 = vmatpush1.xpose.msra.mxu0 0.0
        %2423 = vmatprep.subr.mxu0 0.0
        %2424 = vmatpush1.xpose.msra.mxu0 0.0
        %2425 = vmatprep.subr.mxu0 0.0
        %2426 = vmatpush1.xpose.msra.mxu0 0.0
        %2427 = vmatprep.subr.mxu0 0.0
        %2428 = vmatpush1.xpose.msra.mxu0 0.0
        %2429 = vmatprep.subr.mxu0 0.0
        %2430 = vmatpush1.xpose.msra.mxu0 0.0
        %2431 = vmatprep.subr.mxu0 0.0
        %2432 = vmatpush1.xpose.msra.mxu0 0.0
        %2433 = vmatprep.subr.mxu0 0.0
        %2434 = vmatpush1.xpose.msra.mxu0 0.0
        %2435 = vmatprep.subr.mxu0 0.0
        %2436 = vmatpush1.xpose.msra.mxu0 0.0
        %2437 = vmatprep.subr.mxu0 0.0
        %2438 = vmatpush1.xpose.msra.mxu0 0.0
        %2439 = vmatprep.subr.mxu0 0.0
        %2440 = vmatpush1.xpose.msra.mxu0 0.0
        %2441 = vmatprep.subr.mxu0 0.0
        %2442 = vmatpush1.xpose.msra.mxu0 0.0
        %2443 = vmatprep.subr.mxu0 0.0
        %2444 = vmatpush1.xpose.msra.mxu0 0.0
        %2445 = vmatprep.subr.mxu0 0.0
        %2446 = vmatpush1.xpose.msra.mxu0 0.0
        %2447 = vmatprep.subr.mxu0 0.0
        %2448 = vmatpush1.xpose.msra.mxu0 %v2415
        %2449 = vmatprep.subr.mxu0 0.0
        %2450 = vmatpush2.xpose.msra.mxu0 0.0
        %2451 = vmatprep.subr.mxu0 0.0
        %2452 = vmatpush2.xpose.msra.mxu0 0.0
        %2453 = vmatprep.subr.mxu0 0.0
        %2454 = vmatpush2.xpose.msra.mxu0 0.0
        %2455 = vmatprep.subr.mxu0 0.0
        %2456 = vmatpush2.xpose.msra.mxu0 0.0
        %2457 = vmatprep.subr.mxu0 0.0
        %2458 = vmatpush2.xpose.msra.mxu0 0.0
        %2459 = vmatprep.subr.mxu0 0.0
        %2460 = vmatpush2.xpose.msra.mxu0 0.0
        %2461 = vmatprep.subr.mxu0 0.0
        %2462 = vmatpush2.xpose.msra.mxu0 0.0
        %2463 = vmatprep.subr.mxu0 0.0
        %2464 = vmatpush2.xpose.msra.mxu0 0.0
        %2465 = vmatprep.subr.mxu0 0.0
        %2466 = vmatpush2.xpose.msra.mxu0 0.0
        %2467 = vmatprep.subr.mxu0 0.0
        %2468 = vmatpush2.xpose.msra.mxu0 0.0
        %2469 = vmatprep.subr.mxu0 0.0
        %2470 = vmatpush2.xpose.msra.mxu0 0.0
        %2471 = vmatprep.subr.mxu0 0.0
        %2472 = vmatpush2.xpose.msra.mxu0 0.0
        %2473 = vmatprep.subr.mxu0 0.0
        %2474 = vmatpush2.xpose.msra.mxu0 0.0
        %2475 = vmatprep.subr.mxu0 0.0
        %2476 = vmatpush2.xpose.msra.mxu0 0.0
        %2477 = vmatprep.subr.mxu0 0.0
        %2478 = vmatpush2.xpose.msra.mxu0 0.0
        %2479 = vmatprep.subr.mxu0 0.0
        %2480 = vmatpush2.xpose.msra.mxu0 0.0
        %2481 = vmatprep.mubr.f32.mxu0 0.0
        %2482 = vmatmul.mubr.f32.gmra.mxu0 %v2413
        %v2483 = vpop.f32.mrf.mxu0
        %v2484 = vadd.f32 0.0, %v2483
        %v2485 = vpop.f32.mrf.mxu0
        %2486 = vdwg.mxu0
        %v2487 = vmul.f32 %v2484, 0.35355338
        %v2488 = vsel %vm564, -1e+30, %v2487
        %v2489 = vsel %vm663, %v2488, -inf
        %2490 = vmax.xlane.f32.xlu0 %v2489
        %v2491 = vpop.xlane.xlu0 %2490
        %v2492 = vsub.f32 %v2488, %v2491
        %v2493 = vmul.f32 %v2492, 1.442695
        %v2494 = vpow.pop %v2493
        %v2495 = vsel %vm663, %v2494, 0.0
        %2496 = vadd.xlane.f32.xlu0 %v2495
        %v2497 = vpop.xlane.xlu0 %2496
        %v2498 = vrcp.pop %v2497
        %v2499 = vmul.f32 %v2494, %v2498
        %2500 = vrot.lane.b32.xlu0 %v1927, 48
        %v2501 = vpop.permute.xlu0 %2500
        %v2504 = vsel %vm663, %v2499, 0
        %2506 = vmatprep.subr.mxu0 0.0
        %2507 = vmatpush1.msra.mxu0 0.0
        %2508 = vmatprep.subr.mxu0 0.0
        %2509 = vmatpush1.msra.mxu0 0.0
        %2510 = vmatprep.subr.mxu0 0.0
        %2511 = vmatpush1.msra.mxu0 0.0
        %2512 = vmatprep.subr.mxu0 0.0
        %2513 = vmatpush1.msra.mxu0 0.0
        %2514 = vmatprep.subr.mxu0 0.0
        %2515 = vmatpush1.msra.mxu0 0.0
        %2516 = vmatprep.subr.mxu0 0.0
        %2517 = vmatpush1.msra.mxu0 0.0
        %2518 = vmatprep.subr.mxu0 0.0
        %2519 = vmatpush1.msra.mxu0 0.0
        %2520 = vmatprep.subr.mxu0 0.0
        %2521 = vmatpush1.msra.mxu0 0.0
        %2522 = vmatprep.subr.mxu0 0.0
        %2523 = vmatpush1.msra.mxu0 0.0
        %2524 = vmatprep.subr.mxu0 0.0
        %2525 = vmatpush1.msra.mxu0 0.0
        %2526 = vmatprep.subr.mxu0 0.0
        %2527 = vmatpush1.msra.mxu0 0.0
        %2528 = vmatprep.subr.mxu0 0.0
        %2529 = vmatpush1.msra.mxu0 0.0
        %2530 = vmatprep.subr.mxu0 0.0
        %2531 = vmatpush1.msra.mxu0 0.0
        %2532 = vmatprep.subr.mxu0 0.0
        %2533 = vmatpush1.msra.mxu0 0.0
        %2534 = vmatprep.subr.mxu0 0.0
        %2535 = vmatpush1.msra.mxu0 0.0
        %2536 = vmatprep.subr.mxu0 0.0
        %2537 = vmatpush1.msra.mxu0 %v2501
        %2538 = vmatprep.subr.mxu0 0.0
        %2539 = vmatpush2.msra.mxu0 0.0
        %2540 = vmatprep.subr.mxu0 0.0
        %2541 = vmatpush2.msra.mxu0 0.0
        %2542 = vmatprep.subr.mxu0 0.0
        %2543 = vmatpush2.msra.mxu0 0.0
        %2544 = vmatprep.subr.mxu0 0.0
        %2545 = vmatpush2.msra.mxu0 0.0
        %2546 = vmatprep.subr.mxu0 0.0
        %2547 = vmatpush2.msra.mxu0 0.0
        %2548 = vmatprep.subr.mxu0 0.0
        %2549 = vmatpush2.msra.mxu0 0.0
        %2550 = vmatprep.subr.mxu0 0.0
        %2551 = vmatpush2.msra.mxu0 0.0
        %2552 = vmatprep.subr.mxu0 0.0
        %2553 = vmatpush2.msra.mxu0 0.0
        %2554 = vmatprep.subr.mxu0 0.0
        %2555 = vmatpush2.msra.mxu0 0.0
        %2556 = vmatprep.subr.mxu0 0.0
        %2557 = vmatpush2.msra.mxu0 0.0
        %2558 = vmatprep.subr.mxu0 0.0
        %2559 = vmatpush2.msra.mxu0 0.0
        %2560 = vmatprep.subr.mxu0 0.0
        %2561 = vmatpush2.msra.mxu0 0.0
        %2562 = vmatprep.subr.mxu0 0.0
        %2563 = vmatpush2.msra.mxu0 0.0
        %2564 = vmatprep.subr.mxu0 0.0
        %2565 = vmatpush2.msra.mxu0 0.0
        %2566 = vmatprep.subr.mxu0 0.0
        %2567 = vmatpush2.msra.mxu0 0.0
        %2568 = vmatprep.subr.mxu0 0.0
        %2569 = vmatpush2.msra.mxu0 0.0
        %2570 = vmatprep.mubr.f32.mxu0 0.0
        %2571 = vmatmul.mubr.f32.gmra.mxu0 %v2504
        %v2572 = vpop.f32.mrf.mxu0
        %v2573 = vadd.f32 0.0, %v2572
        %v2574 = vpop.f32.mrf.mxu0
        %2575 = vdwg.mxu0
        %v2577 = vsel %vm663, %v2573, 0
        %2579 = vmatprep.subr.mxu0 0.0
        %2580 = vmatpush1.msra.mxu0 0.0
        %2581 = vmatprep.subr.mxu0 0.0
        %2582 = vmatpush1.msra.mxu0 0.0
        %2583 = vmatprep.subr.mxu0 0.0
        %2584 = vmatpush1.msra.mxu0 0.0
        %2585 = vmatprep.subr.mxu0 0.0
        %2586 = vmatpush1.msra.mxu0 0.0
        %2587 = vmatprep.subr.mxu0 0.0
        %2588 = vmatpush1.msra.mxu0 0.0
        %2589 = vmatprep.subr.mxu0 0.0
        %2590 = vmatpush1.msra.mxu0 0.0
        %2591 = vmatprep.subr.mxu0 0.0
        %2592 = vmatpush1.msra.mxu0 0.0
        %2593 = vmatprep.subr.mxu0 0.0
        %2594 = vmatpush1.msra.mxu0 0.0
        %2595 = vmatprep.subr.mxu0 0.0
        %2596 = vmatpush1.msra.mxu0 0.0
        %2597 = vmatprep.subr.mxu0 0.0
        %2598 = vmatpush1.msra.mxu0 0.0
        %2599 = vmatprep.subr.mxu0 0.0
        %2600 = vmatpush1.msra.mxu0 0.0
        %2601 = vmatprep.subr.mxu0 0.0
        %2602 = vmatpush1.msra.mxu0 0.0
        %2603 = vmatprep.subr.mxu0 0.0
        %2604 = vmatpush1.msra.mxu0 0.0
        %2605 = vmatprep.subr.mxu0 0.0
        %2606 = vmatpush1.msra.mxu0 0.0
        %2607 = vmatprep.subr.mxu0 0.0
        %2608 = vmatpush1.msra.mxu0 0.0
        %2609 = vmatprep.subr.mxu0 0.0
        %2610 = vmatpush1.msra.mxu0 %v1837
        %2611 = vmatprep.subr.mxu0 0.0
        %2612 = vmatpush2.msra.mxu0 0.0
        %2613 = vmatprep.subr.mxu0 0.0
        %2614 = vmatpush2.msra.mxu0 0.0
        %2615 = vmatprep.subr.mxu0 0.0
        %2616 = vmatpush2.msra.mxu0 0.0
        %2617 = vmatprep.subr.mxu0 0.0
        %2618 = vmatpush2.msra.mxu0 0.0
        %2619 = vmatprep.subr.mxu0 0.0
        %2620 = vmatpush2.msra.mxu0 0.0
        %2621 = vmatprep.subr.mxu0 0.0
        %2622 = vmatpush2.msra.mxu0 0.0
        %2623 = vmatprep.subr.mxu0 0.0
        %2624 = vmatpush2.msra.mxu0 0.0
        %2625 = vmatprep.subr.mxu0 0.0
        %2626 = vmatpush2.msra.mxu0 0.0
        %2627 = vmatprep.subr.mxu0 0.0
        %2628 = vmatpush2.msra.mxu0 0.0
        %2629 = vmatprep.subr.mxu0 0.0
        %2630 = vmatpush2.msra.mxu0 0.0
        %2631 = vmatprep.subr.mxu0 0.0
        %2632 = vmatpush2.msra.mxu0 0.0
        %2633 = vmatprep.subr.mxu0 0.0
        %2634 = vmatpush2.msra.mxu0 0.0
        %2635 = vmatprep.subr.mxu0 0.0
        %2636 = vmatpush2.msra.mxu0 0.0
        %2637 = vmatprep.subr.mxu0 0.0
        %2638 = vmatpush2.msra.mxu0 0.0
        %2639 = vmatprep.subr.mxu0 0.0
        %2640 = vmatpush2.msra.mxu0 0.0
        %2641 = vmatprep.subr.mxu0 0.0
        %2642 = vmatpush2.msra.mxu0 0.0
        %2643 = vmatprep.mubr.f32.mxu0 0.0
        %2644 = vmatmul.mubr.f32.gmra.mxu0 %v2577
        %v2645 = vpop.f32.mrf.mxu0
        %v2646 = vadd.f32 0.0, %v2645
        %v2647 = vpop.f32.mrf.mxu0
        %2648 = vdwg.mxu0
        %v2649 = vadd.f32 %v2406, %v2646
        %2650 = vrot.lane.b32.xlu0 %v1927, 104
        %v2651 = vpop.permute.xlu0 %2650
        %2652 = vrot.lane.b32.xlu0 %v1927, 72
        %v2653 = vpop.permute.xlu0 %2652
        %v2654 = vsel %vm663, %v2651, 0
        %v2656 = vsel %vm663, %v2653, 0
        %2658 = vmatprep.subr.mxu0 0.0
        %2659 = vmatpush1.xpose.msra.mxu0 0.0
        %2660 = vmatprep.subr.mxu0 0.0
        %2661 = vmatpush1.xpose.msra.mxu0 0.0
        %2662 = vmatprep.subr.mxu0 0.0
        %2663 = vmatpush1.xpose.msra.mxu0 0.0
        %2664 = vmatprep.subr.mxu0 0.0
        %2665 = vmatpush1.xpose.msra.mxu0 0.0
        %2666 = vmatprep.subr.mxu0 0.0
        %2667 = vmatpush1.xpose.msra.mxu0 0.0
        %2668 = vmatprep.subr.mxu0 0.0
        %2669 = vmatpush1.xpose.msra.mxu0 0.0
        %2670 = vmatprep.subr.mxu0 0.0
        %2671 = vmatpush1.xpose.msra.mxu0 0.0
        %2672 = vmatprep.subr.mxu0 0.0
        %2673 = vmatpush1.xpose.msra.mxu0 0.0
        %2674 = vmatprep.subr.mxu0 0.0
        %2675 = vmatpush1.xpose.msra.mxu0 0.0
        %2676 = vmatprep.subr.mxu0 0.0
        %2677 = vmatpush1.xpose.msra.mxu0 0.0
        %2678 = vmatprep.subr.mxu0 0.0
        %2679 = vmatpush1.xpose.msra.mxu0 0.0
        %2680 = vmatprep.subr.mxu0 0.0
        %2681 = vmatpush1.xpose.msra.mxu0 0.0
        %2682 = vmatprep.subr.mxu0 0.0
        %2683 = vmatpush1.xpose.msra.mxu0 0.0
        %2684 = vmatprep.subr.mxu0 0.0
        %2685 = vmatpush1.xpose.msra.mxu0 0.0
        %2686 = vmatprep.subr.mxu0 0.0
        %2687 = vmatpush1.xpose.msra.mxu0 0.0
        %2688 = vmatprep.subr.mxu0 0.0
        %2689 = vmatpush1.xpose.msra.mxu0 %v2656
        %2690 = vmatprep.subr.mxu0 0.0
        %2691 = vmatpush2.xpose.msra.mxu0 0.0
        %2692 = vmatprep.subr.mxu0 0.0
        %2693 = vmatpush2.xpose.msra.mxu0 0.0
        %2694 = vmatprep.subr.mxu0 0.0
        %2695 = vmatpush2.xpose.msra.mxu0 0.0
        %2696 = vmatprep.subr.mxu0 0.0
        %2697 = vmatpush2.xpose.msra.mxu0 0.0
        %2698 = vmatprep.subr.mxu0 0.0
        %2699 = vmatpush2.xpose.msra.mxu0 0.0
        %2700 = vmatprep.subr.mxu0 0.0
        %2701 = vmatpush2.xpose.msra.mxu0 0.0
        %2702 = vmatprep.subr.mxu0 0.0
        %2703 = vmatpush2.xpose.msra.mxu0 0.0
        %2704 = vmatprep.subr.mxu0 0.0
        %2705 = vmatpush2.xpose.msra.mxu0 0.0
        %2706 = vmatprep.subr.mxu0 0.0
        %2707 = vmatpush2.xpose.msra.mxu0 0.0
        %2708 = vmatprep.subr.mxu0 0.0
        %2709 = vmatpush2.xpose.msra.mxu0 0.0
        %2710 = vmatprep.subr.mxu0 0.0
        %2711 = vmatpush2.xpose.msra.mxu0 0.0
        %2712 = vmatprep.subr.mxu0 0.0
        %2713 = vmatpush2.xpose.msra.mxu0 0.0
        %2714 = vmatprep.subr.mxu0 0.0
        %2715 = vmatpush2.xpose.msra.mxu0 0.0
        %2716 = vmatprep.subr.mxu0 0.0
        %2717 = vmatpush2.xpose.msra.mxu0 0.0
        %2718 = vmatprep.subr.mxu0 0.0
        %2719 = vmatpush2.xpose.msra.mxu0 0.0
        %2720 = vmatprep.subr.mxu0 0.0
        %2721 = vmatpush2.xpose.msra.mxu0 0.0
        %2722 = vmatprep.mubr.f32.mxu0 0.0
        %2723 = vmatmul.mubr.f32.gmra.mxu0 %v2654
        %v2724 = vpop.f32.mrf.mxu0
        %v2725 = vadd.f32 0.0, %v2724
        %v2726 = vpop.f32.mrf.mxu0
        %2727 = vdwg.mxu0
        %v2728 = vmul.f32 %v2725, 0.35355338
        %v2729 = vsel %vm564, -1e+30, %v2728
        %v2730 = vsel %vm663, %v2729, -inf
        %2731 = vmax.xlane.f32.xlu0 %v2730
        %v2732 = vpop.xlane.xlu0 %2731
        %v2733 = vsub.f32 %v2729, %v2732
        %v2734 = vmul.f32 %v2733, 1.442695
        %v2735 = vpow.pop %v2734
        %v2736 = vsel %vm663, %v2735, 0.0
        %2737 = vadd.xlane.f32.xlu0 %v2736
        %v2738 = vpop.xlane.xlu0 %2737
        %v2739 = vrcp.pop %v2738
        %v2740 = vmul.f32 %v2735, %v2739
        %2741 = vrot.lane.b32.xlu0 %v1927, 40
        %v2742 = vpop.permute.xlu0 %2741
        %v2745 = vsel %vm663, %v2740, 0
        %2747 = vmatprep.subr.mxu0 0.0
        %2748 = vmatpush1.msra.mxu0 0.0
        %2749 = vmatprep.subr.mxu0 0.0
        %2750 = vmatpush1.msra.mxu0 0.0
        %2751 = vmatprep.subr.mxu0 0.0
        %2752 = vmatpush1.msra.mxu0 0.0
        %2753 = vmatprep.subr.mxu0 0.0
        %2754 = vmatpush1.msra.mxu0 0.0
        %2755 = vmatprep.subr.mxu0 0.0
        %2756 = vmatpush1.msra.mxu0 0.0
        %2757 = vmatprep.subr.mxu0 0.0
        %2758 = vmatpush1.msra.mxu0 0.0
        %2759 = vmatprep.subr.mxu0 0.0
        %2760 = vmatpush1.msra.mxu0 0.0
        %2761 = vmatprep.subr.mxu0 0.0
        %2762 = vmatpush1.msra.mxu0 0.0
        %2763 = vmatprep.subr.mxu0 0.0
        %2764 = vmatpush1.msra.mxu0 0.0
        %2765 = vmatprep.subr.mxu0 0.0
        %2766 = vmatpush1.msra.mxu0 0.0
        %2767 = vmatprep.subr.mxu0 0.0
        %2768 = vmatpush1.msra.mxu0 0.0
        %2769 = vmatprep.subr.mxu0 0.0
        %2770 = vmatpush1.msra.mxu0 0.0
        %2771 = vmatprep.subr.mxu0 0.0
        %2772 = vmatpush1.msra.mxu0 0.0
        %2773 = vmatprep.subr.mxu0 0.0
        %2774 = vmatpush1.msra.mxu0 0.0
        %2775 = vmatprep.subr.mxu0 0.0
        %2776 = vmatpush1.msra.mxu0 0.0
        %2777 = vmatprep.subr.mxu0 0.0
        %2778 = vmatpush1.msra.mxu0 %v2742
        %2779 = vmatprep.subr.mxu0 0.0
        %2780 = vmatpush2.msra.mxu0 0.0
        %2781 = vmatprep.subr.mxu0 0.0
        %2782 = vmatpush2.msra.mxu0 0.0
        %2783 = vmatprep.subr.mxu0 0.0
        %2784 = vmatpush2.msra.mxu0 0.0
        %2785 = vmatprep.subr.mxu0 0.0
        %2786 = vmatpush2.msra.mxu0 0.0
        %2787 = vmatprep.subr.mxu0 0.0
        %2788 = vmatpush2.msra.mxu0 0.0
        %2789 = vmatprep.subr.mxu0 0.0
        %2790 = vmatpush2.msra.mxu0 0.0
        %2791 = vmatprep.subr.mxu0 0.0
        %2792 = vmatpush2.msra.mxu0 0.0
        %2793 = vmatprep.subr.mxu0 0.0
        %2794 = vmatpush2.msra.mxu0 0.0
        %2795 = vmatprep.subr.mxu0 0.0
        %2796 = vmatpush2.msra.mxu0 0.0
        %2797 = vmatprep.subr.mxu0 0.0
        %2798 = vmatpush2.msra.mxu0 0.0
        %2799 = vmatprep.subr.mxu0 0.0
        %2800 = vmatpush2.msra.mxu0 0.0
        %2801 = vmatprep.subr.mxu0 0.0
        %2802 = vmatpush2.msra.mxu0 0.0
        %2803 = vmatprep.subr.mxu0 0.0
        %2804 = vmatpush2.msra.mxu0 0.0
        %2805 = vmatprep.subr.mxu0 0.0
        %2806 = vmatpush2.msra.mxu0 0.0
        %2807 = vmatprep.subr.mxu0 0.0
        %2808 = vmatpush2.msra.mxu0 0.0
        %2809 = vmatprep.subr.mxu0 0.0
        %2810 = vmatpush2.msra.mxu0 0.0
        %2811 = vmatprep.mubr.f32.mxu0 0.0
        %2812 = vmatmul.mubr.f32.gmra.mxu0 %v2745
        %v2813 = vpop.f32.mrf.mxu0
        %v2814 = vadd.f32 0.0, %v2813
        %v2815 = vpop.f32.mrf.mxu0
        %2816 = vdwg.mxu0
        %v2818 = vsel %vm663, %v2814, 0
        %2820 = vmatprep.subr.mxu0 0.0
        %2821 = vmatpush1.msra.mxu0 0.0
        %2822 = vmatprep.subr.mxu0 0.0
        %2823 = vmatpush1.msra.mxu0 0.0
        %2824 = vmatprep.subr.mxu0 0.0
        %2825 = vmatpush1.msra.mxu0 0.0
        %2826 = vmatprep.subr.mxu0 0.0
        %2827 = vmatpush1.msra.mxu0 0.0
        %2828 = vmatprep.subr.mxu0 0.0
        %2829 = vmatpush1.msra.mxu0 0.0
        %2830 = vmatprep.subr.mxu0 0.0
        %2831 = vmatpush1.msra.mxu0 0.0
        %2832 = vmatprep.subr.mxu0 0.0
        %2833 = vmatpush1.msra.mxu0 0.0
        %2834 = vmatprep.subr.mxu0 0.0
        %2835 = vmatpush1.msra.mxu0 0.0
        %2836 = vmatprep.subr.mxu0 0.0
        %2837 = vmatpush1.msra.mxu0 0.0
        %2838 = vmatprep.subr.mxu0 0.0
        %2839 = vmatpush1.msra.mxu0 0.0
        %2840 = vmatprep.subr.mxu0 0.0
        %2841 = vmatpush1.msra.mxu0 0.0
        %2842 = vmatprep.subr.mxu0 0.0
        %2843 = vmatpush1.msra.mxu0 0.0
        %2844 = vmatprep.subr.mxu0 0.0
        %2845 = vmatpush1.msra.mxu0 0.0
        %2846 = vmatprep.subr.mxu0 0.0
        %2847 = vmatpush1.msra.mxu0 0.0
        %2848 = vmatprep.subr.mxu0 0.0
        %2849 = vmatpush1.msra.mxu0 0.0
        %2850 = vmatprep.subr.mxu0 0.0
        %2851 = vmatpush1.msra.mxu0 %v1838
        %2852 = vmatprep.subr.mxu0 0.0
        %2853 = vmatpush2.msra.mxu0 0.0
        %2854 = vmatprep.subr.mxu0 0.0
        %2855 = vmatpush2.msra.mxu0 0.0
        %2856 = vmatprep.subr.mxu0 0.0
        %2857 = vmatpush2.msra.mxu0 0.0
        %2858 = vmatprep.subr.mxu0 0.0
        %2859 = vmatpush2.msra.mxu0 0.0
        %2860 = vmatprep.subr.mxu0 0.0
        %2861 = vmatpush2.msra.mxu0 0.0
        %2862 = vmatprep.subr.mxu0 0.0
        %2863 = vmatpush2.msra.mxu0 0.0
        %2864 = vmatprep.subr.mxu0 0.0
        %2865 = vmatpush2.msra.mxu0 0.0
        %2866 = vmatprep.subr.mxu0 0.0
        %2867 = vmatpush2.msra.mxu0 0.0
        %2868 = vmatprep.subr.mxu0 0.0
        %2869 = vmatpush2.msra.mxu0 0.0
        %2870 = vmatprep.subr.mxu0 0.0
        %2871 = vmatpush2.msra.mxu0 0.0
        %2872 = vmatprep.subr.mxu0 0.0
        %2873 = vmatpush2.msra.mxu0 0.0
        %2874 = vmatprep.subr.mxu0 0.0
        %2875 = vmatpush2.msra.mxu0 0.0
        %2876 = vmatprep.subr.mxu0 0.0
        %2877 = vmatpush2.msra.mxu0 0.0
        %2878 = vmatprep.subr.mxu0 0.0
        %2879 = vmatpush2.msra.mxu0 0.0
        %2880 = vmatprep.subr.mxu0 0.0
        %2881 = vmatpush2.msra.mxu0 0.0
        %2882 = vmatprep.subr.mxu0 0.0
        %2883 = vmatpush2.msra.mxu0 0.0
        %2884 = vmatprep.mubr.f32.mxu0 0.0
        %2885 = vmatmul.mubr.f32.gmra.mxu0 %v2818
        %v2886 = vpop.f32.mrf.mxu0
        %v2887 = vadd.f32 0.0, %v2886
        %v2888 = vpop.f32.mrf.mxu0
        %2889 = vdwg.mxu0
        %v2890 = vadd.f32 %v2649, %v2887
        %v2891 = vadd.f32 %v1828, %v2890
        %v2892 = vsel %vm384, %v2891, 0.0
        %2893 = vadd.xlane.f32.xlu0 %v2892
        %v2894 = vpop.xlane.xlu0 %2893
        %v2895 = vmul.f32 %v2894, %v1626
        %v2896 = vsub.f32 %v2891, %v2895
        %v2897 = vmul.f32 %v2896, %v2896
        %v2898 = vsel %vm384, %v2897, 0.0
        %2899 = vadd.xlane.f32.xlu0 %v2898
        %v2900 = vpop.xlane.xlu0 %2899
        %v2901 = vmul.f32 %v2900, %v1626
        %v2902 = vadd.f32 %v2901, 1e-05
        %v2903 = vrsqrt.pop %v2902
        %v2904 = vmul.f32 %v2896, %v2903
        %v2905 = vlaneseq
        %v2906 = vshrl.u32 %v2905, 7
        %v2907 = vsub.s32 1, %v2906
        %v2908 = vrot.slane %v1856, %v2907
        %v2909 = vmul.f32 %v2904, %v2908
        %v2910 = vlaneseq
        %v2911 = vshrl.u32 %v2910, 7
        %v2912 = vsub.s32 2, %v2911
        %v2913 = vrot.slane %v1856, %v2912
        %v2914 = vadd.f32 %v2909, %v2913
        %v2916 = vlaneseq
        %v2917 = vshrl.u32 %v2916, 7
        %v2918 = vsub.s32 0, %v2917
        %v2919 = vrot.slane %v1854, %v2918
        %v2922 = vsel %vm384, %v2914, 0
        %2924 = vmatprep.subr.mxu0 0.0
        %2925 = vmatpush1.msra.mxu0 0.0
        %2926 = vmatprep.subr.mxu0 0.0
        %2927 = vmatpush1.msra.mxu0 0.0
        %2928 = vmatprep.subr.mxu0 0.0
        %2929 = vmatpush1.msra.mxu0 0.0
        %2930 = vmatprep.subr.mxu0 0.0
        %2931 = vmatpush1.msra.mxu0 0.0
        %2932 = vmatprep.subr.mxu0 0.0
        %2933 = vmatpush1.msra.mxu0 0.0
        %2934 = vmatprep.subr.mxu0 0.0
        %2935 = vmatpush1.msra.mxu0 0.0
        %2936 = vmatprep.subr.mxu0 0.0
        %2937 = vmatpush1.msra.mxu0 0.0
        %2938 = vmatprep.subr.mxu0 0.0
        %2939 = vmatpush1.msra.mxu0 0.0
        %2940 = vmatprep.subr.mxu0 0.0
        %2941 = vmatpush1.msra.mxu0 0.0
        %2942 = vmatprep.subr.mxu0 0.0
        %2943 = vmatpush1.msra.mxu0 0.0
        %2944 = vmatprep.subr.mxu0 0.0
        %2945 = vmatpush1.msra.mxu0 0.0
        %2946 = vmatprep.subr.mxu0 0.0
        %2947 = vmatpush1.msra.mxu0 0.0
        %2948 = vmatprep.subr.mxu0 0.0
        %2949 = vmatpush1.msra.mxu0 %v1843
        %2950 = vmatprep.subr.mxu0 0.0
        %2951 = vmatpush1.msra.mxu0 %v1842
        %2952 = vmatprep.subr.mxu0 0.0
        %2953 = vmatpush1.msra.mxu0 %v1841
        %2954 = vmatprep.subr.mxu0 0.0
        %2955 = vmatpush1.msra.mxu0 %v1840
        %2956 = vmatprep.subr.mxu0 0.0
        %2957 = vmatpush2.msra.mxu0 0.0
        %2958 = vmatprep.subr.mxu0 0.0
        %2959 = vmatpush2.msra.mxu0 0.0
        %2960 = vmatprep.subr.mxu0 0.0
        %2961 = vmatpush2.msra.mxu0 0.0
        %2962 = vmatprep.subr.mxu0 0.0
        %2963 = vmatpush2.msra.mxu0 0.0
        %2964 = vmatprep.subr.mxu0 0.0
        %2965 = vmatpush2.msra.mxu0 0.0
        %2966 = vmatprep.subr.mxu0 0.0
        %2967 = vmatpush2.msra.mxu0 0.0
        %2968 = vmatprep.subr.mxu0 0.0
        %2969 = vmatpush2.msra.mxu0 0.0
        %2970 = vmatprep.subr.mxu0 0.0
        %2971 = vmatpush2.msra.mxu0 0.0
        %2972 = vmatprep.subr.mxu0 0.0
        %2973 = vmatpush2.msra.mxu0 0.0
        %2974 = vmatprep.subr.mxu0 0.0
        %2975 = vmatpush2.msra.mxu0 0.0
        %2976 = vmatprep.subr.mxu0 0.0
        %2977 = vmatpush2.msra.mxu0 0.0
        %2978 = vmatprep.subr.mxu0 0.0
        %2979 = vmatpush2.msra.mxu0 0.0
        %2980 = vmatprep.subr.mxu0 0.0
        %2981 = vmatpush2.msra.mxu0 0.0
        %2982 = vmatprep.subr.mxu0 0.0
        %2983 = vmatpush2.msra.mxu0 0.0
        %2984 = vmatprep.subr.mxu0 0.0
        %2985 = vmatpush2.msra.mxu0 0.0
        %2986 = vmatprep.subr.mxu0 0.0
        %2987 = vmatpush2.msra.mxu0 0.0
        %2988 = vmatprep.mubr.f32.mxu0 0.0
        %2989 = vmatmul.mubr.f32.gmra.mxu0 %v2922
        %v2990 = vpop.f32.mrf.mxu0
        %v2991 = vadd.f32 %v2919, %v2990
        %v2992 = vpop.f32.mrf.mxu0
        %2993 = vdwg.mxu0
        %v2994 = vmax.f32 %v2991, 0.0
        %v2995 = vlaneseq
        %v2996 = vshrl.u32 %v2995, 7
        %v2997 = vsub.s32 0, %v2996
        %v2998 = vrot.slane %v1856, %v2997
        %v3000 = vsel %vm1731, %v2994, 0
        %3002 = vmatprep.subr.mxu0 0.0
        %3003 = vmatpush1.msra.mxu0 0.0
        %3004 = vmatprep.subr.mxu0 0.0
        %3005 = vmatpush1.msra.mxu0 0.0
        %3006 = vmatprep.subr.mxu0 0.0
        %3007 = vmatpush1.msra.mxu0 0.0
        %3008 = vmatprep.subr.mxu0 0.0
        %3009 = vmatpush1.msra.mxu0 0.0
        %3010 = vmatprep.subr.mxu0 0.0
        %3011 = vmatpush1.msra.mxu0 0.0
        %3012 = vmatprep.subr.mxu0 0.0
        %3013 = vmatpush1.msra.mxu0 0.0
        %3014 = vmatprep.subr.mxu0 0.0
        %3015 = vmatpush1.msra.mxu0 0.0
        %3016 = vmatprep.subr.mxu0 0.0
        %3017 = vmatpush1.msra.mxu0 0.0
        %3018 = vmatprep.subr.mxu0 0.0
        %3019 = vmatpush1.msra.mxu0 %v1852
        %3020 = vmatprep.subr.mxu0 0.0
        %3021 = vmatpush1.msra.mxu0 %v1851
        %3022 = vmatprep.subr.mxu0 0.0
        %3023 = vmatpush1.msra.mxu0 %v1850
        %3024 = vmatprep.subr.mxu0 0.0
        %3025 = vmatpush1.msra.mxu0 %v1849
        %3026 = vmatprep.subr.mxu0 0.0
        %3027 = vmatpush1.msra.mxu0 %v1848
        %3028 = vmatprep.subr.mxu0 0.0
        %3029 = vmatpush1.msra.mxu0 %v1847
        %3030 = vmatprep.subr.mxu0 0.0
        %3031 = vmatpush1.msra.mxu0 %v1846
        %3032 = vmatprep.subr.mxu0 0.0
        %3033 = vmatpush1.msra.mxu0 %v1845
        %3034 = vmatprep.subr.mxu0 0.0
        %3035 = vmatpush2.msra.mxu0 0.0
        %3036 = vmatprep.subr.mxu0 0.0
        %3037 = vmatpush2.msra.mxu0 0.0
        %3038 = vmatprep.subr.mxu0 0.0
        %3039 = vmatpush2.msra.mxu0 0.0
        %3040 = vmatprep.subr.mxu0 0.0
        %3041 = vmatpush2.msra.mxu0 0.0
        %3042 = vmatprep.subr.mxu0 0.0
        %3043 = vmatpush2.msra.mxu0 0.0
        %3044 = vmatprep.subr.mxu0 0.0
        %3045 = vmatpush2.msra.mxu0 0.0
        %3046 = vmatprep.subr.mxu0 0.0
        %3047 = vmatpush2.msra.mxu0 0.0
        %3048 = vmatprep.subr.mxu0 0.0
        %3049 = vmatpush2.msra.mxu0 0.0
        %3050 = vmatprep.subr.mxu0 0.0
        %3051 = vmatpush2.msra.mxu0 0.0
        %3052 = vmatprep.subr.mxu0 0.0
        %3053 = vmatpush2.msra.mxu0 0.0
        %3054 = vmatprep.subr.mxu0 0.0
        %3055 = vmatpush2.msra.mxu0 0.0
        %3056 = vmatprep.subr.mxu0 0.0
        %3057 = vmatpush2.msra.mxu0 0.0
        %3058 = vmatprep.subr.mxu0 0.0
        %3059 = vmatpush2.msra.mxu0 0.0
        %3060 = vmatprep.subr.mxu0 0.0
        %3061 = vmatpush2.msra.mxu0 0.0
        %3062 = vmatprep.subr.mxu0 0.0
        %3063 = vmatpush2.msra.mxu0 0.0
        %3064 = vmatprep.subr.mxu0 0.0
        %3065 = vmatpush2.msra.mxu0 0.0
        %3066 = vmatprep.mubr.f32.mxu0 0.0
        %3067 = vmatmul.mubr.f32.gmra.mxu0 %v3000
        %v3068 = vpop.f32.mrf.mxu0
        %v3069 = vadd.f32 %v2998, %v3068
        %v3070 = vpop.f32.mrf.mxu0
        %3071 = vdwg.mxu0
        %v3072 = vadd.f32 %v2914, %v3069
        %v3073 = vsel %vm384, %v3072, 0.0
        %3074 = vadd.xlane.f32.xlu0 %v3073
        %v3075 = vpop.xlane.xlu0 %3074
        %v3076 = vmul.f32 %v3075, %v1626
        %v3077 = vsub.f32 %v3072, %v3076
        %v3078 = vmul.f32 %v3077, %v3077
        %v3079 = vsel %vm384, %v3078, 0.0
        %3080 = vadd.xlane.f32.xlu0 %v3079
        %v3081 = vpop.xlane.xlu0 %3080
        %v3082 = vmul.f32 %v3081, %v1626
        %v3083 = vadd.f32 %v3082, 1e-05
        %v3084 = vrsqrt.pop %v3083
        %v3085 = vmul.f32 %v3077, %v3084
        %v3086 = vlaneseq
        %v3087 = vshrl.u32 %v3086, 7
        %v3088 = vsub.s32 3, %v3087
        %v3089 = vrot.slane %v1856, %v3088
        %v3090 = vmul.f32 %v3085, %v3089
        %v3091 = vlaneseq
        %v3092 = vshrl.u32 %v3091, 7
        %v3093 = vsub.s32 4, %v3092
        %v3094 = vrot.slane %v1856, %v3093
        %v3095 = vadd.f32 %v3090, %v3094
        %v3096 = vld [vmem:[%s2 + $0x1] sm:$0x1]
        %v3097 = vld [vmem:[%s2 + $0x2] sm:$0x1]
        %v3098 = vlaneseq
        %v3099 = vshrl.u32 %v3098, 7
        %v3100 = vsub.s32 0, %v3099
        %v3101 = vrot.slane %v3096, %v3100
        %v3102 = vmul.f32 %v3095, %v3101
        %v3103 = vsel %vm384, %v3102, 0.0
        %3104 = vadd.xlane.f32.xlu0 %v3103
        %v3105 = vpop.xlane.xlu0 %3104
        %v3106 = vlaneseq
        %v3107 = vshrl.u32 %v3106, 7
        %v3108 = vsub.s32 0, %v3107
        %v3109 = vrot.slane %v3097, %v3108
        %v3110 = vadd.f32 %v3105, %v3109
        %vm3111 = vcmask 7168
        %v3112 = vsel %vm3111, %v3110, -inf
        %v3113 = vrot.slane %v3112, 4
        %v3114 = vmax.f32 %v3112, %v3113
        %v3115 = vrot.slane %v3114, 2
        %v3116 = vmax.f32 %v3114, %v3115
        %v3117 = vrot.slane %v3116, 1
        %v3118 = vmax.f32 %v3116, %v3117
        %v3119 = vsub.f32 %v3110, %v3118
        %v3120 = vmul.f32 %v3119, 1.442695
        %v3121 = vpow.pop %v3120
        %v3122 = vsel %vm3111, %v3121, 0.0
        %v3123 = vrot.slane %v3122, 4
        %v3124 = vadd.f32 %v3122, %v3123
        %v3125 = vrot.slane %v3124, 2
        %v3126 = vadd.f32 %v3124, %v3125
        %v3127 = vrot.slane %v3126, 1
        %v3128 = vadd.f32 %v3126, %v3127
        %v3129 = vrcp.pop %v3128
        %v3130 = vmul.f32 %v3121, %v3129
        %3132 = vset.pattern.permute.xlu0 0
        %3133 = vperm.xlu0 %3132, %v3130
        %v3134 = vpop.permute.xlu0 %3133
        %v3136 = vmul.f32 %v3134, %v3095
        %v3137 = vsel %vm384, %v3136, 0.0
        %v3138 = vrot.slane %v3137, 4
        %v3139 = vadd.f32 %v3137, %v3138
        %v3140 = vrot.slane %v3139, 2
        %v3141 = vadd.f32 %v3139, %v3140
        %v3142 = vrot.slane %v3141, 1
        %v3143 = vadd.f32 %v3141, %v3142
        %3144 = vst.msk [vmem:[%s367] sm:$0xff] %vm384, %v3095
        %vm3145 = vcmask 253952
        %3146 = vst.msk [vmem:[%s367 + $0x8] sm:$0x1] %vm3145, %v3143
        %p3147 = scmp.lt.s32.totalorder %s24, 1
        %s3148 = scalar_select %p3147, %s24, 1
        %s3149 = smul.addr %s3148, 2
        %s3150 = smul.addr %s3149, 8
        %s3151 = scalar_lea.vmem %s9, %s3150
        // Predicated region
        $region65: #{utter_encoder.1} parent=55 // pred_check
          %p3152 = pneg %p236
        $region66: #{utter_encoder.1} parent=55 // pred_check_branch
          %3154 = sbr.rel (%p3152) target = $region68
        $region67: #{utter_encoder.1} parent=55 // pred_region
          _
        $region68: #{utter_encoder.1} parent=55 // pred_fallthru
          _
      $region56: #{utter_encoder.1} parent=5 // pred_fallthru
        _
      %p3155 = scmp.le.s32.totalorder 2, %s19
      // Predicated region
      $region69: #{utter_encoder.1} parent=5 // pred_check
        %p3156 = pneg %p3155
      $region70: #{utter_encoder.1} parent=5 // pred_check_branch
        %3158 = sbr.rel (%p3156) target = $region72
      $region71: #{utter_encoder.1} parent=5 // pred_region
        %s3159 = ssub.s32 %s19, 2
        // Predicated region
        $region73: #{utter_encoder.1} parent=71 // pred_check
          %p3160 = pneg %p242
        $region74: #{utter_encoder.1} parent=71 // pred_check_branch
          %3162 = sbr.rel (%p3160) target = $region76
        $region75: #{utter_encoder.1} parent=71 // pred_region
          %p3163 = scmp.lt.s32.totalorder %s25, 1
          %s3164 = scalar_select %p3163, %s25, 1
          %s3165 = smul.addr %s3164, 2
          %s3166 = smul.addr %s3165, 8
          %s3167 = scalar_lea.vmem %s9, %s3166
        $region76: #{utter_encoder.1} parent=71 // pred_fallthru
          _
      $region72: #{utter_encoder.1} parent=5 // pred_fallthru
        _
    $region6: #{utter_encoder.1} parent=1 // loop_footer
      %s23 = sadd.s32 1, %s19
    $region7: #{utter_encoder.1} parent=1 // loop_footer_branch
      %18 = sbr.rel target = $region3
    $region8: #{utter_encoder.1} parent=1 // loop_exit
      _
    %3168 = vsyncpa [#allocation3], 1
    %s3169 = scalar_lea.sflag [#allocation3], 1
    %3170 = vsyncpa %s3169, 1
    %3171 = vsyncpa [#allocation5], 1

</llo_original>
